<compile_context>
chip_gen: v6e
topology: v6e:2x2x1
jax: 0.10.0
libtpu: 0.0.40
codegen_flags: <defaults>
</compile_context>

<pallas_src>
import functools
import math

import jax
import jax.numpy as jnp
from jax.experimental import pallas as pl
from jax.experimental.pallas import tpu as pltpu


SCALE = 1.0 / 0.6  # ScaledSiLU scale factor


# ------------------------------- Pallas kernels ------------------------------ #

def so3_linear1_kernel(x_ref, w1_ref, b1_ref, y_ref, *, lmax, in_ch):
    """so3_linear_1 with compact per-degree weights.

    x_ref : [tile_n, M*C]   node-major input tile (original dtype, cast in-kernel)
    w1_ref: [L, C, H]       compact per-degree weights (bf16)
    b1_ref: [1, H]          l=0 bias (f32)
    y_ref : [M, tile_n, H]  m-major hidden features (bf16)
    """
    for l in range(lmax + 1):
        w = w1_ref[l]                                   # [C, H]; reused by 2l+1 dots
        for m in range(l * l, (l + 1) * (l + 1)):
            xm = x_ref[:, pl.ds(m * in_ch, in_ch)].astype(w.dtype)    # [tile_n, C]
            acc = jnp.dot(xm, w, preferred_element_type=jnp.float32)  # [tile_n, H]
            if m == 0:
                acc = acc + b1_ref[...]                 # bias only on the l=0 block
            y_ref[m] = acc.astype(y_ref.dtype)


def s2_grid_kernel(y_ref, tg_ref, fgt_ref, z_ref):
    """S2 activation on one lane chunk of the (m, node*channel) matrix.

    y_ref  : [M, tile_f]    bf16 column chunk
    tg_ref : [G, M]         bf16 to-grid matrix
    fgt_ref: [M-1, G]       bf16 from-grid^T; l=0 row dropped, 1/0.6 pre-folded
    z_ref  : [M-1, tile_f]  bf16 output chunk
    """
    gp = jnp.dot(tg_ref[...], y_ref[...],
                 preferred_element_type=jnp.float32)        # [G, tile_f] f32
    act = gp * jax.nn.sigmoid(gp)                           # raw SiLU in f32
    z = jnp.dot(fgt_ref[...], act.astype(fgt_ref.dtype),
                preferred_element_type=jnp.float32)         # [M-1, tile_f] f32
    z_ref[...] = z.astype(z_ref.dtype)


def so3_linear2_kernel(x0_ref, z_ref, wg_ref, bg_ref, w2_ref, b2_ref, o_ref,
                       *, lmax, out_ch):
    """Gating scalars + separable-S2 merge + so3_linear_2 (compact weights).

    x0_ref: [tile_n, C]       l=0 coefficient of the ORIGINAL input
    z_ref : [M-1, tile_n, H]  S2-activated features for m = 1..M-1 (bf16)
    wg_ref: [C, H]            gating linear weight (bf16)
    bg_ref: [1, H]            gating bias (f32)
    w2_ref: [L, H, O]         per-degree weights; l=0 block pre-scaled by 1/0.6
    b2_ref: [1, O]            l=0 bias (f32)
    o_ref : [tile_n, M*O]     node-major output tile (bf16)
    """
    # m = 0: separable-S2 gating path (SiLU; the 1/0.6 is folded into w2_ref[0]).
    g = jnp.dot(x0_ref[...].astype(wg_ref.dtype), wg_ref[...],
                preferred_element_type=jnp.float32) + bg_ref[...]
    g = g * jax.nn.sigmoid(g)
    out0 = jnp.dot(g.astype(w2_ref.dtype), w2_ref[0],
                   preferred_element_type=jnp.float32) + b2_ref[...]
    o_ref[:, pl.ds(0, out_ch)] = out0.astype(o_ref.dtype)
    # m >= 1: per-degree linear on the S2-activated features.
    for l in range(lmax + 1):
        w = w2_ref[l]                                   # [H, O]; reused by the degree
        for m in range(max(l * l, 1), (l + 1) * (l + 1)):
            om = jnp.dot(z_ref[m - 1], w, preferred_element_type=jnp.float32)
            o_ref[:, pl.ds(m * out_ch, out_ch)] = om.astype(o_ref.dtype)


# ------------------------------- pallas wrappers ----------------------------- #

def _cparams():
    # 48 MiB fits under v7x's 64 MiB physical VMEM while being far above what the
    # default tiles need; raise to ~100 MiB on v5e/v6e when using tile_n >= 512.
    return pltpu.CompilerParams(
        dimension_semantics=("parallel",),
        vmem_limit_bytes=48 * 1024 * 1024,
    )


def so3_linear1_call(x2d, w1, b1, *, lmax, M, C, H, tile_n):
    n_pad = x2d.shape[0]
    kernel = functools.partial(so3_linear1_kernel, lmax=lmax, in_ch=C)
    return pl.pallas_call(
        kernel,
        out_shape=jax.ShapeDtypeStruct((M, n_pad, H), jnp.bfloat16),
        grid=(n_pad // tile_n,),
        in_specs=[
            pl.BlockSpec((tile_n, M * C), lambda i: (i, 0)),
            pl.BlockSpec(w1.shape, lambda i: (0, 0, 0)),
            pl.BlockSpec((1, H), lambda i: (0, 0)),
        ],
        out_specs=pl.BlockSpec((M, tile_n, H), lambda i: (0, i, 0)),
        compiler_params=_cparams(),
    )(x2d, w1, b1)


def s2_grid_call(y2, tg, fgt, *, tile_f):
    M, f_total = y2.shape
    return pl.pallas_call(
        s2_grid_kernel,
        out_shape=jax.ShapeDtypeStruct((M - 1, f_total), jnp.bfloat16),
        grid=(f_total // tile_f,),
        in_specs=[
            pl.BlockSpec((M, tile_f), lambda i: (0, i)),
            pl.BlockSpec(tg.shape, lambda i: (0, 0)),
            pl.BlockSpec(fgt.shape, lambda i: (0, 0)),
        ],
        out_specs=pl.BlockSpec((M - 1, tile_f), lambda i: (0, i)),
        compiler_params=_cparams(),
    )(y2, tg, fgt)


def so3_linear2_call(x0, z, wg, bg, w2, b2, *, lmax, M, C, H, O, tile_n, out_dtype):
    n_pad = x0.shape[0]
    kernel = functools.partial(so3_linear2_kernel, lmax=lmax, out_ch=O)
    return pl.pallas_call(
        kernel,
        out_shape=jax.ShapeDtypeStruct((n_pad, M * O), out_dtype),
        grid=(n_pad // tile_n,),
        in_specs=[
            pl.BlockSpec((tile_n, C), lambda i: (i, 0)),
            pl.BlockSpec((M - 1, tile_n, H), lambda i: (0, i, 0)),
            pl.BlockSpec(wg.shape, lambda i: (0, 0)),
            pl.BlockSpec((1, H), lambda i: (0, 0)),
            pl.BlockSpec(w2.shape, lambda i: (0, 0, 0)),
            pl.BlockSpec((1, O), lambda i: (0, 0)),
        ],
        out_specs=pl.BlockSpec((tile_n, M * O), lambda i: (i, 0)),
        compiler_params=_cparams(),
    )(x0, z, wg, bg, w2, b2)


def _pick_s2_node_chunk(n_pad, H, target_lanes):
    """Largest node chunk c <= target_lanes/H with c | n_pad and (c*H) % 128 == 0."""
    want = max(1, min(n_pad, target_lanes // max(H, 1)))
    for c in range(want, 0, -1):
        if n_pad % c == 0 and (c * H) % 128 == 0:
            return c
    return n_pad        # single full-width block (block == full dim is always legal)


# ---------------------------- parameters / host glue -------------------------- #

def init_params(key, sphere_channels, hidden, out_channels, lmax, res_beta, res_alpha):
    M = (lmax + 1) ** 2
    ks = jax.random.split(key, 8)
    bound1 = 1.0 / math.sqrt(sphere_channels)
    bound2 = 1.0 / math.sqrt(hidden)
    return dict(
        # SO3_LinearV2 layers: per-degree weights [(lmax+1), out, in], bias on l=0.
        w1=jax.random.uniform(ks[0], (lmax + 1, hidden, sphere_channels),
                              jnp.float32, -bound1, bound1),
        b1=jax.random.uniform(ks[1], (hidden,), jnp.float32, -bound1, bound1),
        w2=jax.random.uniform(ks[2], (lmax + 1, out_channels, hidden),
                              jnp.float32, -bound2, bound2),
        b2=jax.random.uniform(ks[3], (out_channels,), jnp.float32, -bound2, bound2),
        # gating linear (nn.Linear(sphere_channels_all, hidden))
        wg=jax.random.uniform(ks[4], (hidden, sphere_channels),
                              jnp.float32, -bound1, bound1),
        bg=jax.random.uniform(ks[5], (hidden,), jnp.float32, -bound1, bound1),
        # TODO(synk): to_grid/from_grid are deterministic synthetic matrices; the
        # real SO3_Grid derives them from spherical harmonics / Wigner-D rotations.
        to_grid=jax.random.normal(ks[6], (res_beta, res_alpha, M), jnp.float32)
                / math.sqrt(M),
        from_grid=jax.random.normal(ks[7], (res_beta, res_alpha, M), jnp.float32)
                  / float(res_beta * res_alpha),
    )


def expand_per_degree(w, lmax):
    """[(lmax+1), out, in] -> [M, out, in]; used by the pure-JAX reference only."""
    idx = jnp.concatenate(
        [jnp.full((2 * l + 1,), l, dtype=jnp.int32) for l in range(lmax + 1)])
    return jnp.take(w, idx, axis=0)


def build_kernel_params(params, lmax):
    """Compact, kernel-ready parameters (bf16 matmul operands, f32 biases)."""
    M = (lmax + 1) ** 2
    w1k = jnp.transpose(params["w1"], (0, 2, 1))          # [L, C, H]
    w2k = jnp.transpose(params["w2"], (0, 2, 1))          # [L, H, O]
    w2k = w2k.at[0].multiply(SCALE)                       # fold gating ScaledSiLU scale
    tg = params["to_grid"].reshape(-1, M)                 # [G, M]
    fg = params["from_grid"].reshape(-1, M)               # [G, M]
    fgt = (fg * SCALE).T[1:]                              # [M-1, G]; l=0 row is discarded
    return dict(
        w1=w1k.astype(jnp.bfloat16),
        b1=params["b1"][None, :].astype(jnp.float32),
        w2=w2k.astype(jnp.bfloat16),
        b2=params["b2"][None, :].astype(jnp.float32),
        wg=params["wg"].T.astype(jnp.bfloat16),           # [C, H]
        bg=params["bg"][None, :].astype(jnp.float32),
        tg=tg.astype(jnp.bfloat16),
        fgt=fgt.astype(jnp.bfloat16),
    )


def feedforward_pallas(x, kp, *, lmax, tile_n=128, s2_chunk_lanes=4096,
                       out_dtype=jnp.bfloat16):
    """x: [N, M, C] f32 -> out: [N, M, O] (out_dtype).

    tile_n:         nodes per stage-1/3 grid step (128 on v7x, 256+ on v5e/v6e).
    s2_chunk_lanes: lane width of a stage-2 block; bounds its f32 scratch to [G, chunk].
    Per-m lane slices are 128-aligned when C and O are multiples of 128 (recommended).
    """
    N, M, C = x.shape
    H = kp["w1"].shape[-1]
    O = kp["w2"].shape[-1]

    n_tiles = pl.cdiv(N, tile_n)
    n_pad = n_tiles * tile_n
    if n_pad != N:
        x = jnp.pad(x, ((0, n_pad - N), (0, 0), (0, 0)))

    # Free row-major views only: no host transposes, no host dtype casts.
    x2d = x.reshape(n_pad, M * C)          # node-major view for stage 1
    x0 = x[:, 0, :]                        # tiny gather for the gating path

    # Stage 1: so3_linear_1 (compact per-degree weights), m-major output.
    y = so3_linear1_call(x2d, kp["w1"], kp["b1"],
                         lmax=lmax, M=M, C=C, H=H, tile_n=tile_n)

    # Stage 2: S2 activation on lane chunks of the (m, node*channel) matrix.
    y2 = y.reshape(M, n_pad * H)           # free HBM reshape
    nf = _pick_s2_node_chunk(n_pad, H, s2_chunk_lanes)
    z2 = s2_grid_call(y2, kp["tg"], kp["fgt"], tile_f=nf * H)
    z = z2.reshape(M - 1, n_pad, H)        # free HBM reshape

    # Stage 3: gating scalars + separable-S2 merge + so3_linear_2, node-major output.
    out2 = so3_linear2_call(x0, z, kp["wg"], kp["bg"], kp["w2"], kp["b2"],
                            lmax=lmax, M=M, C=C, H=H, O=O, tile_n=tile_n,
                            out_dtype=out_dtype)
    return out2.reshape(n_pad, M, O)[:N]


# ------------------------------ pure-JAX reference ---------------------------- #

def feedforward_reference(x, params, lmax):
    N, M, C = x.shape
    silu = lambda v: v * jax.nn.sigmoid(v) * SCALE
    w1e = expand_per_degree(params["w1"], lmax)
    w2e = expand_per_degree(params["w2"], lmax)
    g = silu(x[:, 0, :] @ params["wg"].T + params["bg"])
    y = jnp.einsum("nmc,mhc->nmh", x, w1e)
    y = y.at[:, 0, :].add(params["b1"])
    tg = params["to_grid"].reshape(-1, M)
    fg = params["from_grid"].reshape(-1, M)
    grid = silu(jnp.einsum("gm,nmh->ngh", tg, y))
    z = jnp.einsum("gm,ngh->nmh", fg, grid)
    z = jnp.concatenate([g[:, None, :], z[:, 1:, :]], axis=1)
    out = jnp.einsum("nmh,moh->nmo", z, w2e)
    out = out.at[:, 0, :].add(params["b2"])
    return out


# -------------------------------------- main ---------------------------------- #

if __name__ == "__main__":
    # Small, module-consistent shapes (channel dims kept 128-multiples so the
    # per-m lane slices exercised by the test are aligned).
    N = 16                       # number of nodes
    sphere_channels = 128        # single resolution -> sphere_channels_all = 128
    hidden_channels = 128
    output_channels = 128
    lmax = 2                     # lmax_list = mmax_list = [2]
    M = (lmax + 1) ** 2          # 9 spherical-harmonic coefficients
    res_beta, res_alpha = 6, 7   # synthetic SO3 grid resolution, G = 42

    key = jax.random.PRNGKey(0)
    k_x, k_p = jax.random.split(key)
    params = init_params(k_p, sphere_channels, hidden_channels, output_channels,
                         lmax, res_beta, res_alpha)
    x = jax.random.normal(k_x, (N, M, sphere_channels), jnp.float32)

    kp = build_kernel_params(params, lmax)

    # tile_n=8 / s2_chunk_lanes=1024 keep >= 2 grid steps at this toy size
    # (megacore friendly); production uses tile_n=128-256, s2_chunk_lanes=2048-4096.
    ffn = jax.jit(functools.partial(feedforward_pallas, lmax=lmax, tile_n=8,
                                    s2_chunk_lanes=1024))
    out = ffn(x, kp)
    jax.block_until_ready(out)

    ref = feedforward_reference(x, params, lmax)
    abs_err = float(jnp.max(jnp.abs(out.astype(jnp.float32) - ref)))
    rel_err = abs_err / (float(jnp.max(jnp.abs(ref))) + 1e-6)
    assert rel_err < 5e-2, f"mismatch vs reference: abs={abs_err}, rel={rel_err}"

    print("KERNEL_OK")
</pallas_src>

<mosaic_0001>
module attributes {stable_mosaic.version = 11 : i64} {
  func.func @so3_linear1_kernel(%arg0: i32, %arg1: memref<8x1152xf32, #tpu.memory_space<vmem>>, %arg2: memref<3x128x128xbf16, #tpu.memory_space<vmem>>, %arg3: memref<1x128xf32, #tpu.memory_space<vmem>>, %arg4: memref<9x8x128xbf16, #tpu.memory_space<vmem>>) attributes {dimension_semantics = [#tpu.dimension_semantics<parallel>], iteration_bounds = array<i64: 2>, scalar_prefetch = 0 : i64, scratch_operands = 0 : i64, tpu.core_type = #tpu.core_type<tc>, window_params = [{transform_indices = @transform_0, window_bounds = array<i64: 8, 1152>}, {pipeline_mode = #tpu.pipeline_mode<synchronous>, transform_indices = @transform_1, window_bounds = array<i64: 3, 128, 128>}, {pipeline_mode = #tpu.pipeline_mode<synchronous>, transform_indices = @transform_2, window_bounds = array<i64: 1, 128>}, {transform_indices = @transform_3, window_bounds = array<i64: 9, 8, 128>}]} {
    %c0 = arith.constant 0 : index
    %c0_0 = arith.constant 0 : index
    %c0_1 = arith.constant 0 : index
    %0 = vector.load %arg2[%c0, %c0_0, %c0_1] : memref<3x128x128xbf16, #tpu.memory_space<vmem>>, vector<1x128x128xbf16>
    %1 = vector.shape_cast %0 : vector<1x128x128xbf16> to vector<128x128xbf16>
    %c0_2 = arith.constant 0 : index
    %c0_3 = arith.constant 0 : index
    %2 = vector.load %arg1[%c0_2, %c0_3] : memref<8x1152xf32, #tpu.memory_space<vmem>>, vector<8x128xf32>
    %3 = arith.truncf %2 : vector<8x128xf32> to vector<8x128xbf16>
    %cst = arith.constant dense<0.000000e+00> : vector<8x128xf32>
    %4 = tpu.matmul %3, %1, %cst {dimension_numbers = #tpu.dot_dimension_numbers<[1], [0], [0], [1], [0, 0, 1, 1], [], []>} : vector<8x128xbf16>, vector<128x128xbf16>, vector<8x128xf32> -> vector<8x128xf32>
    %c0_4 = arith.constant 0 : index
    %c0_5 = arith.constant 0 : index
    %5 = vector.load %arg3[%c0_4, %c0_5] : memref<1x128xf32, #tpu.memory_space<vmem>>, vector<1x128xf32>
    %6 = vector.broadcast %5 : vector<1x128xf32> to vector<8x128xf32>
    %7 = arith.addf %4, %6 : vector<8x128xf32>
    %8 = arith.truncf %7 : vector<8x128xf32> to vector<8x128xbf16>
    %c0_6 = arith.constant 0 : index
    %c0_7 = arith.constant 0 : index
    %c0_8 = arith.constant 0 : index
    %9 = vector.load %arg4[%c0_6, %c0_7, %c0_8] : memref<9x8x128xbf16, #tpu.memory_space<vmem>>, vector<1x8x128xbf16>
    %10 = vector.shape_cast %9 : vector<1x8x128xbf16> to vector<8x128xbf16>
    %11 = vector.shape_cast %8 : vector<8x128xbf16> to vector<1x8x128xbf16>
    tpu.vector_store %arg4[%c0_6, %c0_7, %c0_8], %11 {strides = array<i32>} : memref<9x8x128xbf16, #tpu.memory_space<vmem>>, vector<1x8x128xbf16>,
    %c1 = arith.constant 1 : index
    %c0_9 = arith.constant 0 : index
    %c0_10 = arith.constant 0 : index
    %12 = vector.load %arg2[%c1, %c0_9, %c0_10] : memref<3x128x128xbf16, #tpu.memory_space<vmem>>, vector<1x128x128xbf16>
    %13 = vector.shape_cast %12 : vector<1x128x128xbf16> to vector<128x128xbf16>
    %c0_11 = arith.constant 0 : index
    %c128 = arith.constant 128 : index
    %14 = vector.load %arg1[%c0_11, %c128] : memref<8x1152xf32, #tpu.memory_space<vmem>>, vector<8x128xf32>
    %15 = arith.truncf %14 : vector<8x128xf32> to vector<8x128xbf16>
    %cst_12 = arith.constant dense<0.000000e+00> : vector<8x128xf32>
    %16 = tpu.matmul %15, %13, %cst_12 {dimension_numbers = #tpu.dot_dimension_numbers<[1], [0], [0], [1], [0, 0, 1, 1], [], []>} : vector<8x128xbf16>, vector<128x128xbf16>, vector<8x128xf32> -> vector<8x128xf32>
    %17 = arith.truncf %16 : vector<8x128xf32> to vector<8x128xbf16>
    %c1_13 = arith.constant 1 : index
    %c0_14 = arith.constant 0 : index
    %c0_15 = arith.constant 0 : index
    %18 = vector.load %arg4[%c1_13, %c0_14, %c0_15] : memref<9x8x128xbf16, #tpu.memory_space<vmem>>, vector<1x8x128xbf16>
    %19 = vector.shape_cast %18 : vector<1x8x128xbf16> to vector<8x128xbf16>
    %20 = vector.shape_cast %17 : vector<8x128xbf16> to vector<1x8x128xbf16>
    tpu.vector_store %arg4[%c1_13, %c0_14, %c0_15], %20 {strides = array<i32>} : memref<9x8x128xbf16, #tpu.memory_space<vmem>>, vector<1x8x128xbf16>,
    %c0_16 = arith.constant 0 : index
    %c256 = arith.constant 256 : index
    %21 = vector.load %arg1[%c0_16, %c256] : memref<8x1152xf32, #tpu.memory_space<vmem>>, vector<8x128xf32>
    %22 = arith.truncf %21 : vector<8x128xf32> to vector<8x128xbf16>
    %cst_17 = arith.constant dense<0.000000e+00> : vector<8x128xf32>
    %23 = tpu.matmul %22, %13, %cst_17 {dimension_numbers = #tpu.dot_dimension_numbers<[1], [0], [0], [1], [0, 0, 1, 1], [], []>} : vector<8x128xbf16>, vector<128x128xbf16>, vector<8x128xf32> -> vector<8x128xf32>
    %24 = arith.truncf %23 : vector<8x128xf32> to vector<8x128xbf16>
    %c2 = arith.constant 2 : index
    %c0_18 = arith.constant 0 : index
    %c0_19 = arith.constant 0 : index
    %25 = vector.load %arg4[%c2, %c0_18, %c0_19] : memref<9x8x128xbf16, #tpu.memory_space<vmem>>, vector<1x8x128xbf16>
    %26 = vector.shape_cast %25 : vector<1x8x128xbf16> to vector<8x128xbf16>
    %27 = vector.shape_cast %24 : vector<8x128xbf16> to vector<1x8x128xbf16>
    tpu.vector_store %arg4[%c2, %c0_18, %c0_19], %27 {strides = array<i32>} : memref<9x8x128xbf16, #tpu.memory_space<vmem>>, vector<1x8x128xbf16>,
    %c0_20 = arith.constant 0 : index
    %c384 = arith.constant 384 : index
    %28 = vector.load %arg1[%c0_20, %c384] : memref<8x1152xf32, #tpu.memory_space<vmem>>, vector<8x128xf32>
    %29 = arith.truncf %28 : vector<8x128xf32> to vector<8x128xbf16>
    %cst_21 = arith.constant dense<0.000000e+00> : vector<8x128xf32>
    %30 = tpu.matmul %29, %13, %cst_21 {dimension_numbers = #tpu.dot_dimension_numbers<[1], [0], [0], [1], [0, 0, 1, 1], [], []>} : vector<8x128xbf16>, vector<128x128xbf16>, vector<8x128xf32> -> vector<8x128xf32>
    %31 = arith.truncf %30 : vector<8x128xf32> to vector<8x128xbf16>
    %c3 = arith.constant 3 : index
    %c0_22 = arith.constant 0 : index
    %c0_23 = arith.constant 0 : index
    %32 = vector.load %arg4[%c3, %c0_22, %c0_23] : memref<9x8x128xbf16, #tpu.memory_space<vmem>>, vector<1x8x128xbf16>
    %33 = vector.shape_cast %32 : vector<1x8x128xbf16> to vector<8x128xbf16>
    %34 = vector.shape_cast %31 : vector<8x128xbf16> to vector<1x8x128xbf16>
    tpu.vector_store %arg4[%c3, %c0_22, %c0_23], %34 {strides = array<i32>} : memref<9x8x128xbf16, #tpu.memory_space<vmem>>, vector<1x8x128xbf16>,
    %c2_24 = arith.constant 2 : index
    %c0_25 = arith.constant 0 : index
    %c0_26 = arith.constant 0 : index
    %35 = vector.load %arg2[%c2_24, %c0_25, %c0_26] : memref<3x128x128xbf16, #tpu.memory_space<vmem>>, vector<1x128x128xbf16>
    %36 = vector.shape_cast %35 : vector<1x128x128xbf16> to vector<128x128xbf16>
    %c0_27 = arith.constant 0 : index
    %c512 = arith.constant 512 : index
    %37 = vector.load %arg1[%c0_27, %c512] : memref<8x1152xf32, #tpu.memory_space<vmem>>, vector<8x128xf32>
    %38 = arith.truncf %37 : vector<8x128xf32> to vector<8x128xbf16>
    %cst_28 = arith.constant dense<0.000000e+00> : vector<8x128xf32>
    %39 = tpu.matmul %38, %36, %cst_28 {dimension_numbers = #tpu.dot_dimension_numbers<[1], [0], [0], [1], [0, 0, 1, 1], [], []>} : vector<8x128xbf16>, vector<128x128xbf16>, vector<8x128xf32> -> vector<8x128xf32>
    %40 = arith.truncf %39 : vector<8x128xf32> to vector<8x128xbf16>
    %c4 = arith.constant 4 : index
    %c0_29 = arith.constant 0 : index
    %c0_30 = arith.constant 0 : index
    %41 = vector.load %arg4[%c4, %c0_29, %c0_30] : memref<9x8x128xbf16, #tpu.memory_space<vmem>>, vector<1x8x128xbf16>
    %42 = vector.shape_cast %41 : vector<1x8x128xbf16> to vector<8x128xbf16>
    %43 = vector.shape_cast %40 : vector<8x128xbf16> to vector<1x8x128xbf16>
    tpu.vector_store %arg4[%c4, %c0_29, %c0_30], %43 {strides = array<i32>} : memref<9x8x128xbf16, #tpu.memory_space<vmem>>, vector<1x8x128xbf16>,
    %c0_31 = arith.constant 0 : index
    %c640 = arith.constant 640 : index
    %44 = vector.load %arg1[%c0_31, %c640] : memref<8x1152xf32, #tpu.memory_space<vmem>>, vector<8x128xf32>
    %45 = arith.truncf %44 : vector<8x128xf32> to vector<8x128xbf16>
    %cst_32 = arith.constant dense<0.000000e+00> : vector<8x128xf32>
    %46 = tpu.matmul %45, %36, %cst_32 {dimension_numbers = #tpu.dot_dimension_numbers<[1], [0], [0], [1], [0, 0, 1, 1], [], []>} : vector<8x128xbf16>, vector<128x128xbf16>, vector<8x128xf32> -> vector<8x128xf32>
    %47 = arith.truncf %46 : vector<8x128xf32> to vector<8x128xbf16>
    %c5 = arith.constant 5 : index
    %c0_33 = arith.constant 0 : index
    %c0_34 = arith.constant 0 : index
    %48 = vector.load %arg4[%c5, %c0_33, %c0_34] : memref<9x8x128xbf16, #tpu.memory_space<vmem>>, vector<1x8x128xbf16>
    %49 = vector.shape_cast %48 : vector<1x8x128xbf16> to vector<8x128xbf16>
    %50 = vector.shape_cast %47 : vector<8x128xbf16> to vector<1x8x128xbf16>
    tpu.vector_store %arg4[%c5, %c0_33, %c0_34], %50 {strides = array<i32>} : memref<9x8x128xbf16, #tpu.memory_space<vmem>>, vector<1x8x128xbf16>,
    %c0_35 = arith.constant 0 : index
    %c768 = arith.constant 768 : index
    %51 = vector.load %arg1[%c0_35, %c768] : memref<8x1152xf32, #tpu.memory_space<vmem>>, vector<8x128xf32>
    %52 = arith.truncf %51 : vector<8x128xf32> to vector<8x128xbf16>
    %cst_36 = arith.constant dense<0.000000e+00> : vector<8x128xf32>
    %53 = tpu.matmul %52, %36, %cst_36 {dimension_numbers = #tpu.dot_dimension_numbers<[1], [0], [0], [1], [0, 0, 1, 1], [], []>} : vector<8x128xbf16>, vector<128x128xbf16>, vector<8x128xf32> -> vector<8x128xf32>
    %54 = arith.truncf %53 : vector<8x128xf32> to vector<8x128xbf16>
    %c6 = arith.constant 6 : index
    %c0_37 = arith.constant 0 : index
    %c0_38 = arith.constant 0 : index
    %55 = vector.load %arg4[%c6, %c0_37, %c0_38] : memref<9x8x128xbf16, #tpu.memory_space<vmem>>, vector<1x8x128xbf16>
    %56 = vector.shape_cast %55 : vector<1x8x128xbf16> to vector<8x128xbf16>
    %57 = vector.shape_cast %54 : vector<8x128xbf16> to vector<1x8x128xbf16>
    tpu.vector_store %arg4[%c6, %c0_37, %c0_38], %57 {strides = array<i32>} : memref<9x8x128xbf16, #tpu.memory_space<vmem>>, vector<1x8x128xbf16>,
    %c0_39 = arith.constant 0 : index
    %c896 = arith.constant 896 : index
    %58 = vector.load %arg1[%c0_39, %c896] : memref<8x1152xf32, #tpu.memory_space<vmem>>, vector<8x128xf32>
    %59 = arith.truncf %58 : vector<8x128xf32> to vector<8x128xbf16>
    %cst_40 = arith.constant dense<0.000000e+00> : vector<8x128xf32>
    %60 = tpu.matmul %59, %36, %cst_40 {dimension_numbers = #tpu.dot_dimension_numbers<[1], [0], [0], [1], [0, 0, 1, 1], [], []>} : vector<8x128xbf16>, vector<128x128xbf16>, vector<8x128xf32> -> vector<8x128xf32>
    %61 = arith.truncf %60 : vector<8x128xf32> to vector<8x128xbf16>
    %c7 = arith.constant 7 : index
    %c0_41 = arith.constant 0 : index
    %c0_42 = arith.constant 0 : index
    %62 = vector.load %arg4[%c7, %c0_41, %c0_42] : memref<9x8x128xbf16, #tpu.memory_space<vmem>>, vector<1x8x128xbf16>
    %63 = vector.shape_cast %62 : vector<1x8x128xbf16> to vector<8x128xbf16>
    %64 = vector.shape_cast %61 : vector<8x128xbf16> to vector<1x8x128xbf16>
    tpu.vector_store %arg4[%c7, %c0_41, %c0_42], %64 {strides = array<i32>} : memref<9x8x128xbf16, #tpu.memory_space<vmem>>, vector<1x8x128xbf16>,
    %c0_43 = arith.constant 0 : index
    %c1024 = arith.constant 1024 : index
    %65 = vector.load %arg1[%c0_43, %c1024] : memref<8x1152xf32, #tpu.memory_space<vmem>>, vector<8x128xf32>
    %66 = arith.truncf %65 : vector<8x128xf32> to vector<8x128xbf16>
    %cst_44 = arith.constant dense<0.000000e+00> : vector<8x128xf32>
    %67 = tpu.matmul %66, %36, %cst_44 {dimension_numbers = #tpu.dot_dimension_numbers<[1], [0], [0], [1], [0, 0, 1, 1], [], []>} : vector<8x128xbf16>, vector<128x128xbf16>, vector<8x128xf32> -> vector<8x128xf32>
    %68 = arith.truncf %67 : vector<8x128xf32> to vector<8x128xbf16>
    %c8 = arith.constant 8 : index
    %c0_45 = arith.constant 0 : index
    %c0_46 = arith.constant 0 : index
    %69 = vector.load %arg4[%c8, %c0_45, %c0_46] : memref<9x8x128xbf16, #tpu.memory_space<vmem>>, vector<1x8x128xbf16>
    %70 = vector.shape_cast %69 : vector<1x8x128xbf16> to vector<8x128xbf16>
    %71 = vector.shape_cast %68 : vector<8x128xbf16> to vector<1x8x128xbf16>
    tpu.vector_store %arg4[%c8, %c0_45, %c0_46], %71 {strides = array<i32>} : memref<9x8x128xbf16, #tpu.memory_space<vmem>>, vector<1x8x128xbf16>,
    return
  }
  func.func @transform_0(%arg0: i32) -> (i32, i32) {
    %c0_i32 = arith.constant 0 : i32
    %c0_i32_0 = arith.constant 0 : i32
    return %arg0, %c0_i32 : i32, i32
  }
  func.func @transform_1(%arg0: i32) -> (i32, i32, i32) {
    %c0_i32 = arith.constant 0 : i32
    %c0_i32_0 = arith.constant 0 : i32
    %c0_i32_1 = arith.constant 0 : i32
    %c0_i32_2 = arith.constant 0 : i32
    return %c0_i32, %c0_i32_0, %c0_i32_1 : i32, i32, i32
  }
  func.func @transform_2(%arg0: i32) -> (i32, i32) {
    %c0_i32 = arith.constant 0 : i32
    %c0_i32_0 = arith.constant 0 : i32
    %c0_i32_1 = arith.constant 0 : i32
    return %c0_i32, %c0_i32_0 : i32, i32
  }
  func.func @transform_3(%arg0: i32) -> (i32, i32, i32) {
    %c0_i32 = arith.constant 0 : i32
    %c0_i32_0 = arith.constant 0 : i32
    %c0_i32_1 = arith.constant 0 : i32
    return %c0_i32, %arg0, %c0_i32_0 : i32, i32, i32
  }
}

module attributes {stable_mosaic.version = 11 : i64} {
  func.func @s2_grid_kernel(%arg0: i32, %arg1: memref<9x1024xbf16, #tpu.memory_space<vmem>>, %arg2: memref<42x9xbf16, #tpu.memory_space<vmem>>, %arg3: memref<8x42xbf16, #tpu.memory_space<vmem>>, %arg4: memref<8x1024xbf16, #tpu.memory_space<vmem>>) attributes {dimension_semantics = [#tpu.dimension_semantics<parallel>], iteration_bounds = array<i64: 2>, scalar_prefetch = 0 : i64, scratch_operands = 0 : i64, tpu.core_type = #tpu.core_type<tc>, window_params = [{transform_indices = @transform_0, window_bounds = array<i64: 9, 1024>}, {pipeline_mode = #tpu.pipeline_mode<synchronous>, transform_indices = @transform_1, window_bounds = array<i64: 42, 9>}, {pipeline_mode = #tpu.pipeline_mode<synchronous>, transform_indices = @transform_2, window_bounds = array<i64: 8, 42>}, {transform_indices = @transform_3, window_bounds = array<i64: 8, 1024>}]} {
    %c0 = arith.constant 0 : index
    %c0_0 = arith.constant 0 : index
    %0 = vector.load %arg2[%c0, %c0_0] : memref<42x9xbf16, #tpu.memory_space<vmem>>, vector<42x9xbf16>
    %c0_1 = arith.constant 0 : index
    %c0_2 = arith.constant 0 : index
    %1 = vector.load %arg1[%c0_1, %c0_2] : memref<9x1024xbf16, #tpu.memory_space<vmem>>, vector<9x1024xbf16>
    %cst = arith.constant dense<0.000000e+00> : vector<42x1024xf32>
    %2 = tpu.matmul %0, %1, %cst {dimension_numbers = #tpu.dot_dimension_numbers<[1], [0], [0], [1], [0, 0, 1, 1], [], []>} : vector<42x9xbf16>, vector<9x1024xbf16>, vector<42x1024xf32> -> vector<42x1024xf32>
    %3 = arith.negf %2 : vector<42x1024xf32>
    %4 = math.exp %3 : vector<42x1024xf32>
    %cst_3 = arith.constant 1.000000e+00 : f32
    %5 = vector.broadcast %cst_3 : f32 to vector<42x1024xf32>
    %6 = arith.addf %5, %4 : vector<42x1024xf32>
    %7 = arith.divf %5, %6 : vector<42x1024xf32>
    %8 = arith.mulf %2, %7 : vector<42x1024xf32>
    %c0_4 = arith.constant 0 : index
    %c0_5 = arith.constant 0 : index
    %9 = vector.load %arg3[%c0_4, %c0_5] : memref<8x42xbf16, #tpu.memory_space<vmem>>, vector<8x42xbf16>
    %10 = arith.truncf %8 : vector<42x1024xf32> to vector<42x1024xbf16>
    %cst_6 = arith.constant dense<0.000000e+00> : vector<8x1024xf32>
    %11 = tpu.matmul %9, %10, %cst_6 {dimension_numbers = #tpu.dot_dimension_numbers<[1], [0], [0], [1], [0, 0, 1, 1], [], []>} : vector<8x42xbf16>, vector<42x1024xbf16>, vector<8x1024xf32> -> vector<8x1024xf32>
    %12 = arith.truncf %11 : vector<8x1024xf32> to vector<8x1024xbf16>
    %c0_7 = arith.constant 0 : index
    %c0_8 = arith.constant 0 : index
    %13 = vector.load %arg4[%c0_7, %c0_8] : memref<8x1024xbf16, #tpu.memory_space<vmem>>, vector<8x1024xbf16>
    tpu.vector_store %arg4[%c0_7, %c0_8], %12 {strides = array<i32>} : memref<8x1024xbf16, #tpu.memory_space<vmem>>, vector<8x1024xbf16>,
    return
  }
  func.func @transform_0(%arg0: i32) -> (i32, i32) {
    %c0_i32 = arith.constant 0 : i32
    %c0_i32_0 = arith.constant 0 : i32
    return %c0_i32, %arg0 : i32, i32
  }
  func.func @transform_1(%arg0: i32) -> (i32, i32) {
    %c0_i32 = arith.constant 0 : i32
    %c0_i32_0 = arith.constant 0 : i32
    %c0_i32_1 = arith.constant 0 : i32
    return %c0_i32, %c0_i32_0 : i32, i32
  }
  func.func @transform_2(%arg0: i32) -> (i32, i32) {
    %c0_i32 = arith.constant 0 : i32
    %c0_i32_0 = arith.constant 0 : i32
    %c0_i32_1 = arith.constant 0 : i32
    return %c0_i32, %c0_i32_0 : i32, i32
  }
  func.func @transform_3(%arg0: i32) -> (i32, i32) {
    %c0_i32 = arith.constant 0 : i32
    %c0_i32_0 = arith.constant 0 : i32
    return %c0_i32, %arg0 : i32, i32
  }
}

module attributes {stable_mosaic.version = 11 : i64} {
  func.func @so3_linear2_kernel(%arg0: i32, %arg1: memref<8x128xf32, #tpu.memory_space<vmem>>, %arg2: memref<8x8x128xbf16, #tpu.memory_space<vmem>>, %arg3: memref<128x128xbf16, #tpu.memory_space<vmem>>, %arg4: memref<1x128xf32, #tpu.memory_space<vmem>>, %arg5: memref<3x128x128xbf16, #tpu.memory_space<vmem>>, %arg6: memref<1x128xf32, #tpu.memory_space<vmem>>, %arg7: memref<8x1152xbf16, #tpu.memory_space<vmem>>) attributes {dimension_semantics = [#tpu.dimension_semantics<parallel>], iteration_bounds = array<i64: 2>, scalar_prefetch = 0 : i64, scratch_operands = 0 : i64, tpu.core_type = #tpu.core_type<tc>, window_params = [{transform_indices = @transform_0, window_bounds = array<i64: 8, 128>}, {transform_indices = @transform_1, window_bounds = array<i64: 8, 8, 128>}, {pipeline_mode = #tpu.pipeline_mode<synchronous>, transform_indices = @transform_2, window_bounds = array<i64: 128, 128>}, {pipeline_mode = #tpu.pipeline_mode<synchronous>, transform_indices = @transform_3, window_bounds = array<i64: 1, 128>}, {pipeline_mode = #tpu.pipeline_mode<synchronous>, transform_indices = @transform_4, window_bounds = array<i64: 3, 128, 128>}, {pipeline_mode = #tpu.pipeline_mode<synchronous>, transform_indices = @transform_5, window_bounds = array<i64: 1, 128>}, {transform_indices = @transform_6, window_bounds = array<i64: 8, 1152>}]} {
    %c0 = arith.constant 0 : index
    %c0_0 = arith.constant 0 : index
    %0 = vector.load %arg1[%c0, %c0_0] : memref<8x128xf32, #tpu.memory_space<vmem>>, vector<8x128xf32>
    %1 = arith.truncf %0 : vector<8x128xf32> to vector<8x128xbf16>
    %c0_1 = arith.constant 0 : index
    %c0_2 = arith.constant 0 : index
    %2 = vector.load %arg3[%c0_1, %c0_2] : memref<128x128xbf16, #tpu.memory_space<vmem>>, vector<128x128xbf16>
    %cst = arith.constant dense<0.000000e+00> : vector<8x128xf32>
    %3 = tpu.matmul %1, %2, %cst {dimension_numbers = #tpu.dot_dimension_numbers<[1], [0], [0], [1], [0, 0, 1, 1], [], []>} : vector<8x128xbf16>, vector<128x128xbf16>, vector<8x128xf32> -> vector<8x128xf32>
    %c0_3 = arith.constant 0 : index
    %c0_4 = arith.constant 0 : index
    %4 = vector.load %arg4[%c0_3, %c0_4] : memref<1x128xf32, #tpu.memory_space<vmem>>, vector<1x128xf32>
    %5 = vector.broadcast %4 : vector<1x128xf32> to vector<8x128xf32>
    %6 = arith.addf %3, %5 : vector<8x128xf32>
    %7 = arith.negf %6 : vector<8x128xf32>
    %8 = math.exp %7 : vector<8x128xf32>
    %cst_5 = arith.constant 1.000000e+00 : f32
    %9 = vector.broadcast %cst_5 : f32 to vector<8x128xf32>
    %10 = arith.addf %9, %8 : vector<8x128xf32>
    %11 = arith.divf %9, %10 : vector<8x128xf32>
    %12 = arith.mulf %6, %11 : vector<8x128xf32>
    %13 = arith.truncf %12 : vector<8x128xf32> to vector<8x128xbf16>
    %c0_6 = arith.constant 0 : index
    %c0_7 = arith.constant 0 : index
    %c0_8 = arith.constant 0 : index
    %14 = vector.load %arg5[%c0_6, %c0_7, %c0_8] : memref<3x128x128xbf16, #tpu.memory_space<vmem>>, vector<1x128x128xbf16>
    %15 = vector.shape_cast %14 : vector<1x128x128xbf16> to vector<128x128xbf16>
    %cst_9 = arith.constant dense<0.000000e+00> : vector<8x128xf32>
    %16 = tpu.matmul %13, %15, %cst_9 {dimension_numbers = #tpu.dot_dimension_numbers<[1], [0], [0], [1], [0, 0, 1, 1], [], []>} : vector<8x128xbf16>, vector<128x128xbf16>, vector<8x128xf32> -> vector<8x128xf32>
    %c0_10 = arith.constant 0 : index
    %c0_11 = arith.constant 0 : index
    %17 = vector.load %arg6[%c0_10, %c0_11] : memref<1x128xf32, #tpu.memory_space<vmem>>, vector<1x128xf32>
    %18 = vector.broadcast %17 : vector<1x128xf32> to vector<8x128xf32>
    %19 = arith.addf %16, %18 : vector<8x128xf32>
    %20 = arith.truncf %19 : vector<8x128xf32> to vector<8x128xbf16>
    %c0_12 = arith.constant 0 : index
    %c0_13 = arith.constant 0 : index
    %21 = vector.load %arg7[%c0_12, %c0_13] : memref<8x1152xbf16, #tpu.memory_space<vmem>>, vector<8x128xbf16>
    tpu.vector_store %arg7[%c0_12, %c0_13], %20 {strides = array<i32>} : memref<8x1152xbf16, #tpu.memory_space<vmem>>, vector<8x128xbf16>,
    %c1 = arith.constant 1 : index
    %c0_14 = arith.constant 0 : index
    %c0_15 = arith.constant 0 : index
    %22 = vector.load %arg5[%c1, %c0_14, %c0_15] : memref<3x128x128xbf16, #tpu.memory_space<vmem>>, vector<1x128x128xbf16>
    %23 = vector.shape_cast %22 : vector<1x128x128xbf16> to vector<128x128xbf16>
    %c0_16 = arith.constant 0 : index
    %c0_17 = arith.constant 0 : index
    %c0_18 = arith.constant 0 : index
    %24 = vector.load %arg2[%c0_16, %c0_17, %c0_18] : memref<8x8x128xbf16, #tpu.memory_space<vmem>>, vector<1x8x128xbf16>
    %25 = vector.shape_cast %24 : vector<1x8x128xbf16> to vector<8x128xbf16>
    %cst_19 = arith.constant dense<0.000000e+00> : vector<8x128xf32>
    %26 = tpu.matmul %25, %23, %cst_19 {dimension_numbers = #tpu.dot_dimension_numbers<[1], [0], [0], [1], [0, 0, 1, 1], [], []>} : vector<8x128xbf16>, vector<128x128xbf16>, vector<8x128xf32> -> vector<8x128xf32>
    %27 = arith.truncf %26 : vector<8x128xf32> to vector<8x128xbf16>
    %c0_20 = arith.constant 0 : index
    %c128 = arith.constant 128 : index
    %28 = vector.load %arg7[%c0_20, %c128] : memref<8x1152xbf16, #tpu.memory_space<vmem>>, vector<8x128xbf16>
    tpu.vector_store %arg7[%c0_20, %c128], %27 {strides = array<i32>} : memref<8x1152xbf16, #tpu.memory_space<vmem>>, vector<8x128xbf16>,
    %c1_21 = arith.constant 1 : index
    %c0_22 = arith.constant 0 : index
    %c0_23 = arith.constant 0 : index
    %29 = vector.load %arg2[%c1_21, %c0_22, %c0_23] : memref<8x8x128xbf16, #tpu.memory_space<vmem>>, vector<1x8x128xbf16>
    %30 = vector.shape_cast %29 : vector<1x8x128xbf16> to vector<8x128xbf16>
    %cst_24 = arith.constant dense<0.000000e+00> : vector<8x128xf32>
    %31 = tpu.matmul %30, %23, %cst_24 {dimension_numbers = #tpu.dot_dimension_numbers<[1], [0], [0], [1], [0, 0, 1, 1], [], []>} : vector<8x128xbf16>, vector<128x128xbf16>, vector<8x128xf32> -> vector<8x128xf32>
    %32 = arith.truncf %31 : vector<8x128xf32> to vector<8x128xbf16>
    %c0_25 = arith.constant 0 : index
    %c256 = arith.constant 256 : index
    %33 = vector.load %arg7[%c0_25, %c256] : memref<8x1152xbf16, #tpu.memory_space<vmem>>, vector<8x128xbf16>
    tpu.vector_store %arg7[%c0_25, %c256], %32 {strides = array<i32>} : memref<8x1152xbf16, #tpu.memory_space<vmem>>, vector<8x128xbf16>,
    %c2 = arith.constant 2 : index
    %c0_26 = arith.constant 0 : index
    %c0_27 = arith.constant 0 : index
    %34 = vector.load %arg2[%c2, %c0_26, %c0_27] : memref<8x8x128xbf16, #tpu.memory_space<vmem>>, vector<1x8x128xbf16>
    %35 = vector.shape_cast %34 : vector<1x8x128xbf16> to vector<8x128xbf16>
    %cst_28 = arith.constant dense<0.000000e+00> : vector<8x128xf32>
    %36 = tpu.matmul %35, %23, %cst_28 {dimension_numbers = #tpu.dot_dimension_numbers<[1], [0], [0], [1], [0, 0, 1, 1], [], []>} : vector<8x128xbf16>, vector<128x128xbf16>, vector<8x128xf32> -> vector<8x128xf32>
    %37 = arith.truncf %36 : vector<8x128xf32> to vector<8x128xbf16>
    %c0_29 = arith.constant 0 : index
    %c384 = arith.constant 384 : index
    %38 = vector.load %arg7[%c0_29, %c384] : memref<8x1152xbf16, #tpu.memory_space<vmem>>, vector<8x128xbf16>
    tpu.vector_store %arg7[%c0_29, %c384], %37 {strides = array<i32>} : memref<8x1152xbf16, #tpu.memory_space<vmem>>, vector<8x128xbf16>,
    %c2_30 = arith.constant 2 : index
    %c0_31 = arith.constant 0 : index
    %c0_32 = arith.constant 0 : index
    %39 = vector.load %arg5[%c2_30, %c0_31, %c0_32] : memref<3x128x128xbf16, #tpu.memory_space<vmem>>, vector<1x128x128xbf16>
    %40 = vector.shape_cast %39 : vector<1x128x128xbf16> to vector<128x128xbf16>
    %c3 = arith.constant 3 : index
    %c0_33 = arith.constant 0 : index
    %c0_34 = arith.constant 0 : index
    %41 = vector.load %arg2[%c3, %c0_33, %c0_34] : memref<8x8x128xbf16, #tpu.memory_space<vmem>>, vector<1x8x128xbf16>
    %42 = vector.shape_cast %41 : vector<1x8x128xbf16> to vector<8x128xbf16>
    %cst_35 = arith.constant dense<0.000000e+00> : vector<8x128xf32>
    %43 = tpu.matmul %42, %40, %cst_35 {dimension_numbers = #tpu.dot_dimension_numbers<[1], [0], [0], [1], [0, 0, 1, 1], [], []>} : vector<8x128xbf16>, vector<128x128xbf16>, vector<8x128xf32> -> vector<8x128xf32>
    %44 = arith.truncf %43 : vector<8x128xf32> to vector<8x128xbf16>
    %c0_36 = arith.constant 0 : index
    %c512 = arith.constant 512 : index
    %45 = vector.load %arg7[%c0_36, %c512] : memref<8x1152xbf16, #tpu.memory_space<vmem>>, vector<8x128xbf16>
    tpu.vector_store %arg7[%c0_36, %c512], %44 {strides = array<i32>} : memref<8x1152xbf16, #tpu.memory_space<vmem>>, vector<8x128xbf16>,
    %c4 = arith.constant 4 : index
    %c0_37 = arith.constant 0 : index
    %c0_38 = arith.constant 0 : index
    %46 = vector.load %arg2[%c4, %c0_37, %c0_38] : memref<8x8x128xbf16, #tpu.memory_space<vmem>>, vector<1x8x128xbf16>
    %47 = vector.shape_cast %46 : vector<1x8x128xbf16> to vector<8x128xbf16>
    %cst_39 = arith.constant dense<0.000000e+00> : vector<8x128xf32>
    %48 = tpu.matmul %47, %40, %cst_39 {dimension_numbers = #tpu.dot_dimension_numbers<[1], [0], [0], [1], [0, 0, 1, 1], [], []>} : vector<8x128xbf16>, vector<128x128xbf16>, vector<8x128xf32> -> vector<8x128xf32>
    %49 = arith.truncf %48 : vector<8x128xf32> to vector<8x128xbf16>
    %c0_40 = arith.constant 0 : index
    %c640 = arith.constant 640 : index
    %50 = vector.load %arg7[%c0_40, %c640] : memref<8x1152xbf16, #tpu.memory_space<vmem>>, vector<8x128xbf16>
    tpu.vector_store %arg7[%c0_40, %c640], %49 {strides = array<i32>} : memref<8x1152xbf16, #tpu.memory_space<vmem>>, vector<8x128xbf16>,
    %c5 = arith.constant 5 : index
    %c0_41 = arith.constant 0 : index
    %c0_42 = arith.constant 0 : index
    %51 = vector.load %arg2[%c5, %c0_41, %c0_42] : memref<8x8x128xbf16, #tpu.memory_space<vmem>>, vector<1x8x128xbf16>
    %52 = vector.shape_cast %51 : vector<1x8x128xbf16> to vector<8x128xbf16>
    %cst_43 = arith.constant dense<0.000000e+00> : vector<8x128xf32>
    %53 = tpu.matmul %52, %40, %cst_43 {dimension_numbers = #tpu.dot_dimension_numbers<[1], [0], [0], [1], [0, 0, 1, 1], [], []>} : vector<8x128xbf16>, vector<128x128xbf16>, vector<8x128xf32> -> vector<8x128xf32>
    %54 = arith.truncf %53 : vector<8x128xf32> to vector<8x128xbf16>
    %c0_44 = arith.constant 0 : index
    %c768 = arith.constant 768 : index
    %55 = vector.load %arg7[%c0_44, %c768] : memref<8x1152xbf16, #tpu.memory_space<vmem>>, vector<8x128xbf16>
    tpu.vector_store %arg7[%c0_44, %c768], %54 {strides = array<i32>} : memref<8x1152xbf16, #tpu.memory_space<vmem>>, vector<8x128xbf16>,
    %c6 = arith.constant 6 : index
    %c0_45 = arith.constant 0 : index
    %c0_46 = arith.constant 0 : index
    %56 = vector.load %arg2[%c6, %c0_45, %c0_46] : memref<8x8x128xbf16, #tpu.memory_space<vmem>>, vector<1x8x128xbf16>
    %57 = vector.shape_cast %56 : vector<1x8x128xbf16> to vector<8x128xbf16>
    %cst_47 = arith.constant dense<0.000000e+00> : vector<8x128xf32>
    %58 = tpu.matmul %57, %40, %cst_47 {dimension_numbers = #tpu.dot_dimension_numbers<[1], [0], [0], [1], [0, 0, 1, 1], [], []>} : vector<8x128xbf16>, vector<128x128xbf16>, vector<8x128xf32> -> vector<8x128xf32>
    %59 = arith.truncf %58 : vector<8x128xf32> to vector<8x128xbf16>
    %c0_48 = arith.constant 0 : index
    %c896 = arith.constant 896 : index
    %60 = vector.load %arg7[%c0_48, %c896] : memref<8x1152xbf16, #tpu.memory_space<vmem>>, vector<8x128xbf16>
    tpu.vector_store %arg7[%c0_48, %c896], %59 {strides = array<i32>} : memref<8x1152xbf16, #tpu.memory_space<vmem>>, vector<8x128xbf16>,
    %c7 = arith.constant 7 : index
    %c0_49 = arith.constant 0 : index
    %c0_50 = arith.constant 0 : index
    %61 = vector.load %arg2[%c7, %c0_49, %c0_50] : memref<8x8x128xbf16, #tpu.memory_space<vmem>>, vector<1x8x128xbf16>
    %62 = vector.shape_cast %61 : vector<1x8x128xbf16> to vector<8x128xbf16>
    %cst_51 = arith.constant dense<0.000000e+00> : vector<8x128xf32>
    %63 = tpu.matmul %62, %40, %cst_51 {dimension_numbers = #tpu.dot_dimension_numbers<[1], [0], [0], [1], [0, 0, 1, 1], [], []>} : vector<8x128xbf16>, vector<128x128xbf16>, vector<8x128xf32> -> vector<8x128xf32>
    %64 = arith.truncf %63 : vector<8x128xf32> to vector<8x128xbf16>
    %c0_52 = arith.constant 0 : index
    %c1024 = arith.constant 1024 : index
    %65 = vector.load %arg7[%c0_52, %c1024] : memref<8x1152xbf16, #tpu.memory_space<vmem>>, vector<8x128xbf16>
    tpu.vector_store %arg7[%c0_52, %c1024], %64 {strides = array<i32>} : memref<8x1152xbf16, #tpu.memory_space<vmem>>, vector<8x128xbf16>,
    return
  }
  func.func @transform_0(%arg0: i32) -> (i32, i32) {
    %c0_i32 = arith.constant 0 : i32
    %c0_i32_0 = arith.constant 0 : i32
    return %arg0, %c0_i32 : i32, i32
  }
  func.func @transform_1(%arg0: i32) -> (i32, i32, i32) {
    %c0_i32 = arith.constant 0 : i32
    %c0_i32_0 = arith.constant 0 : i32
    %c0_i32_1 = arith.constant 0 : i32
    return %c0_i32, %arg0, %c0_i32_0 : i32, i32, i32
  }
  func.func @transform_2(%arg0: i32) -> (i32, i32) {
    %c0_i32 = arith.constant 0 : i32
    %c0_i32_0 = arith.constant 0 : i32
    %c0_i32_1 = arith.constant 0 : i32
    return %c0_i32, %c0_i32_0 : i32, i32
  }
  func.func @transform_3(%arg0: i32) -> (i32, i32) {
    %c0_i32 = arith.constant 0 : i32
    %c0_i32_0 = arith.constant 0 : i32
    %c0_i32_1 = arith.constant 0 : i32
    return %c0_i32, %c0_i32_0 : i32, i32
  }
  func.func @transform_4(%arg0: i32) -> (i32, i32, i32) {
    %c0_i32 = arith.constant 0 : i32
    %c0_i32_0 = arith.constant 0 : i32
    %c0_i32_1 = arith.constant 0 : i32
    %c0_i32_2 = arith.constant 0 : i32
    return %c0_i32, %c0_i32_0, %c0_i32_1 : i32, i32, i32
  }
  func.func @transform_5(%arg0: i32) -> (i32, i32) {
    %c0_i32 = arith.constant 0 : i32
    %c0_i32_0 = arith.constant 0 : i32
    %c0_i32_1 = arith.constant 0 : i32
    return %c0_i32, %c0_i32_0 : i32, i32
  }
  func.func @transform_6(%arg0: i32) -> (i32, i32) {
    %c0_i32 = arith.constant 0 : i32
    %c0_i32_0 = arith.constant 0 : i32
    return %arg0, %c0_i32 : i32, i32
  }
}

</mosaic_0001>

<llo_original>
// kernel: feedforward_pallas.3
$region0: #{feedforward_pallas.3}
  #allocation0 [shape = 'u32[]', space=smem, size = 0x4, offset = 0x4, fixed_abs, tag = 'smem constant byte address 0x4 - core index']
  #allocation1 [shape = 'u32[144,128]{1,0:T(1,128)}', space=vmem, size = 0x12000, scoped, tag = 'internal scratch']
  %s0 = inlined_call_operand.vmem [shape: f32[16,1152], index: 0, kind: input, shape index: {}]
  %s1 = inlined_call_operand.vmem [shape: bf16[3,128,128], index: 1, kind: input, shape index: {}]
  %s2 = inlined_call_operand.vmem [shape: f32[1,128], index: 2, kind: input, shape index: {}]
  %s3 = inlined_call_operand.vmem [shape: bf16[9,16,128], index: 3, kind: output, shape index: {}]
  %s4 = sld [smem:[#allocation0]]
  $region82: #{feedforward_pallas.3} parent=0
    _
  %s6 = ssub.s32 1, %s4
  %s7 = scalar_select 0, %s6, %s4
  $region1: #{feedforward_pallas.3} parent=0
    #allocation2 [shape = 'u8[36864]{0}', space=vmem, size = 0x9000, scoped, tag = 'output window, operand 0']
    loop: start=0, step=1, limit=4
    $region2: #{feedforward_pallas.3} parent=1 // loop_pre_header
      _
    $region3: #{feedforward_pallas.3} parent=1 // loop_header
      %s9 = sphi 0, %s13
      %p10 = scmp.ge.s32.totalorder %s9, 4
      %s19 = sphi 0, %s21
      %s22 = sphi 0, %s19
      %s23 = sphi 0, %s22
      %s39 = sphi 0, %s23
      %s43 = sphi 0, %s43
      %s45 = sphi 0, %s43
      %s46 = sphi 0, %s45
      %s60 = sphi 0, %s46
      %s64 = sphi 0, %s64
      %s66 = sphi 0, %s64
      %s67 = sphi 0, %s66
      %s81 = sphi 0, %s67
      %s87 = sphi 0, %s89
      %s90 = sphi 0, %s87
      %s91 = sphi 0, %s90
      %s107 = sphi 0, %s91
    $region4: #{feedforward_pallas.3} parent=1 // loop_header_branch
      %12 = sbr.rel (%p10) target = $region8
    $region5: #{feedforward_pallas.3} parent=1 // loop_body
      %s14 = ssub.s32 %s9, 1
      %s15 = ssub.s32 %s9, 2
      %s16 = sadd.s32 %s9, 1
      %s17 = ssub.s32 %s9, %s16
      %p18 = scmp.eq.s32.totalorder %s17, 0
      %s20 = sadd.s32 %s19, 1
      %s21 = scalar_select %p18, %s19, %s20
      %p24 = pneg %p18
      %p25 = scmp.eq.s32.totalorder %s9, 1
      %p26 = por %p24, %p25
      %p27 = scmp.ne.s32.totalorder %s19, %s22
      %p28 = scmp.eq.s32.totalorder %s9, 0
      %p29 = por %p27, %p28
      %p30 = scmp.ne.s32.totalorder %s19, %s22
      %p31 = scmp.eq.s32.totalorder %s14, 1
      %p32 = por %p30, %p31
      %p33 = scmp.ne.s32.totalorder %s22, %s23
      %p34 = scmp.eq.s32.totalorder %s14, 0
      %p35 = por %p33, %p34
      %p36 = scmp.ne.s32.totalorder %s22, %s23
      %p37 = scmp.eq.s32.totalorder %s15, 1
      %p38 = por %p36, %p37
      %p40 = scmp.ne.s32.totalorder %s23, %s39
      %p41 = scmp.eq.s32.totalorder %s15, 0
      %p42 = por %p40, %p41
      %s44 = sadd.s32 %s43, 1
      %p47 = scmp.eq.s32.totalorder %s9, 1
      %p48 = scmp.ne.s32.totalorder %s43, %s45
      %p49 = scmp.eq.s32.totalorder %s9, 0
      %p50 = por %p48, %p49
      %p51 = scmp.ne.s32.totalorder %s43, %s45
      %p52 = scmp.eq.s32.totalorder %s14, 1
      %p53 = por %p51, %p52
      %p54 = scmp.ne.s32.totalorder %s45, %s46
      %p55 = scmp.eq.s32.totalorder %s14, 0
      %p56 = por %p54, %p55
      %p57 = scmp.ne.s32.totalorder %s45, %s46
      %p58 = scmp.eq.s32.totalorder %s15, 1
      %p59 = por %p57, %p58
      %p61 = scmp.ne.s32.totalorder %s46, %s60
      %p62 = scmp.eq.s32.totalorder %s15, 0
      %p63 = por %p61, %p62
      %s65 = sadd.s32 %s64, 1
      %p68 = scmp.eq.s32.totalorder %s9, 1
      %p69 = scmp.ne.s32.totalorder %s64, %s66
      %p70 = scmp.eq.s32.totalorder %s9, 0
      %p71 = por %p69, %p70
      %p72 = scmp.ne.s32.totalorder %s64, %s66
      %p73 = scmp.eq.s32.totalorder %s14, 1
      %p74 = por %p72, %p73
      %p75 = scmp.ne.s32.totalorder %s66, %s67
      %p76 = scmp.eq.s32.totalorder %s14, 0
      %p77 = por %p75, %p76
      %p78 = scmp.ne.s32.totalorder %s66, %s67
      %p79 = scmp.eq.s32.totalorder %s15, 1
      %p80 = por %p78, %p79
      %p82 = scmp.ne.s32.totalorder %s67, %s81
      %p83 = scmp.eq.s32.totalorder %s15, 0
      %p84 = por %p82, %p83
      %s85 = ssub.s32 %s9, %s16
      %p86 = scmp.eq.s32.totalorder %s85, 0
      %s88 = sadd.s32 %s87, 1
      %s89 = scalar_select %p86, %s87, %s88
      %p92 = pneg %p86
      %p93 = scmp.eq.s32.totalorder %s9, 1
      %p94 = por %p92, %p93
      %p95 = scmp.ne.s32.totalorder %s87, %s90
      %p96 = scmp.eq.s32.totalorder %s9, 0
      %p97 = por %p95, %p96
      %p98 = scmp.ne.s32.totalorder %s87, %s90
      %p99 = scmp.eq.s32.totalorder %s14, 1
      %p100 = por %p98, %p99
      %p101 = scmp.ne.s32.totalorder %s90, %s91
      %p102 = scmp.eq.s32.totalorder %s14, 0
      %p103 = por %p101, %p102
      %p104 = scmp.ne.s32.totalorder %s90, %s91
      %p105 = scmp.eq.s32.totalorder %s15, 1
      %p106 = por %p104, %p105
      %p108 = scmp.ne.s32.totalorder %s91, %s107
      %p109 = scmp.eq.s32.totalorder %s15, 0
      %p110 = por %p108, %p109
      %p111 = scmp.le.s32.totalorder 1, %s9
      %p112 = scmp.lt.s32.totalorder %s9, 3
      %p113 = pnand %p111, %p112
      %p114 = pneg %p113
      // Predicated region
      $region9: #{feedforward_pallas.3} parent=5 // pred_check
        _
      $region10: #{feedforward_pallas.3} parent=5 // pred_check_branch
        %116 = sbr.rel (%p113) target = $region12
      $region11: #{feedforward_pallas.3} parent=5 // pred_region
        %s117 = ssub.s32 %s9, 1
        // Predicated region
        $region13: #{feedforward_pallas.3} parent=11 // pred_check
          %p118 = pneg %p56
        $region14: #{feedforward_pallas.3} parent=11 // pred_check_branch
          %120 = sbr.rel (%p118) target = $region16
        $region15: #{feedforward_pallas.3} parent=11 // pred_region
          _
        $region16: #{feedforward_pallas.3} parent=11 // pred_fallthru
          _
        // Predicated region
        $region17: #{feedforward_pallas.3} parent=11 // pred_check
          %p121 = pneg %p77
        $region18: #{feedforward_pallas.3} parent=11 // pred_check_branch
          %123 = sbr.rel (%p121) target = $region20
        $region19: #{feedforward_pallas.3} parent=11 // pred_region
          _
        $region20: #{feedforward_pallas.3} parent=11 // pred_fallthru
          _
      $region12: #{feedforward_pallas.3} parent=5 // pred_fallthru
        _
      %p124 = scmp.lt.s32.totalorder %s9, 2
      // Predicated region
      $region21: #{feedforward_pallas.3} parent=5 // pred_check
        %p125 = pneg %p124
      $region22: #{feedforward_pallas.3} parent=5 // pred_check_branch
        %127 = sbr.rel (%p125) target = $region24
      $region23: #{feedforward_pallas.3} parent=5 // pred_region
        // Predicated region
        $region25: #{feedforward_pallas.3} parent=23 // pred_check
          %p128 = pneg %p29
        $region26: #{feedforward_pallas.3} parent=23 // pred_check_branch
          %130 = sbr.rel (%p128) target = $region28
        $region27: #{feedforward_pallas.3} parent=23 // pred_region
          %p131 = scmp.lt.s32.totalorder %s9, 1
          %s132 = scalar_select %p131, %s9, 1
          %s133 = smul.addr %s132, 9
          %s134 = smul.addr %s133, 8
          %s135 = scalar_lea.vmem %s0, %s134
        $region28: #{feedforward_pallas.3} parent=23 // pred_fallthru
          _
      $region24: #{feedforward_pallas.3} parent=5 // pred_fallthru
        _
      %p136 = scmp.le.s32.totalorder 1, %s9
      %p137 = scmp.lt.s32.totalorder %s9, 3
      %p138 = pnand %p136, %p137
      %p139 = pneg %p138
      // Predicated region
      $region29: #{feedforward_pallas.3} parent=5 // pred_check
        _
      $region30: #{feedforward_pallas.3} parent=5 // pred_check_branch
        %141 = sbr.rel (%p138) target = $region32
      $region31: #{feedforward_pallas.3} parent=5 // pred_region
        %s142 = ssub.s32 %s9, 1
        %p143 = scmp.lt.s32.totalorder %s14, 1
        %s144 = scalar_select %p143, %s14, 1
        %s145 = smul.addr %s144, 9
        %s146 = smul.addr %s145, 8
        %s147 = scalar_lea.vmem %s0, %s146
        %p148 = pneg %p35
        %p149 = pneg %p32
        %p150 = pneg %p56
        %p151 = pneg %p53
        %p152 = pneg %p77
        %p153 = pneg %p74
        %p154 = pneg %p103
        %p155 = pneg %p100
        %s156 = sand.u32 %s90, 1
        %s157 = sand.u32 %s90, 1
        %s158 = smul.addr %s157, 36
        %s159 = scalar_lea.vmem [#allocation2], %s158
        %p160 = scmp.lt.s32.totalorder %s14, 1
        %s161 = scalar_select %p160, %s14, 1
        %s162 = smul.addr %s161, 9
        %s163 = smul.addr %s162, 8
        %s164 = scalar_lea.vmem %s0, %s163
        %v166 = vld [vmem:[%s1] sm:$0xf]
        %v167 = vld [vmem:[%s1 + $0x4] sm:$0xf]
        %v168 = vld [vmem:[%s1 + $0x8] sm:$0xf]
        %v169 = vld [vmem:[%s1 + $0xc] sm:$0xf]
        %v170 = vld [vmem:[%s1 + $0x10] sm:$0xf]
        %v171 = vld [vmem:[%s1 + $0x14] sm:$0xf]
        %v172 = vld [vmem:[%s1 + $0x18] sm:$0xf]
        %v173 = vld [vmem:[%s1 + $0x1c] sm:$0xf]
        %v174 = vld [vmem:[%s1 + $0x20] sm:$0xf]
        %v175 = vld [vmem:[%s1 + $0x24] sm:$0xf]
        %v176 = vld [vmem:[%s1 + $0x28] sm:$0xf]
        %v177 = vld [vmem:[%s1 + $0x2c] sm:$0xf]
        %v178 = vld [vmem:[%s1 + $0x30] sm:$0xf]
        %v179 = vld [vmem:[%s1 + $0x34] sm:$0xf]
        %v180 = vld [vmem:[%s1 + $0x38] sm:$0xf]
        %v181 = vld [vmem:[%s1 + $0x3c] sm:$0xf]
        %v182 = vld [vmem:[%s164] sm:$0xff]
        %v183 = vpack.c.bf16 %v182, %v182
        %v184 = vld [vmem:[%s2] sm:$0x1]
        %v186 = vlaneseq
        %v187 = vshrl.u32 %v186, 7
        %v188 = vsub.s32 0, %v187
        %v189 = vrot.slane %v184, %v188
        %v207 = vunpack.c.l.b16 %v166
        %v208 = vunpack.c.l.b16 %v167
        %v209 = vunpack.c.l.b16 %v168
        %v210 = vunpack.c.l.b16 %v169
        %v211 = vunpack.c.l.b16 %v170
        %v212 = vunpack.c.l.b16 %v171
        %v213 = vunpack.c.l.b16 %v172
        %v214 = vunpack.c.l.b16 %v173
        %v215 = vunpack.c.l.b16 %v174
        %v216 = vunpack.c.l.b16 %v175
        %v217 = vunpack.c.l.b16 %v176
        %v218 = vunpack.c.l.b16 %v177
        %v219 = vunpack.c.l.b16 %v178
        %v220 = vunpack.c.l.b16 %v179
        %v221 = vunpack.c.l.b16 %v180
        %v222 = vunpack.c.l.b16 %v181
        %v223 = vpack.c.b16 %v208, %v207
        %v224 = vpack.c.b16 %v210, %v209
        %v225 = vpack.c.b16 %v212, %v211
        %v226 = vpack.c.b16 %v214, %v213
        %v227 = vpack.c.b16 %v216, %v215
        %v228 = vpack.c.b16 %v218, %v217
        %v229 = vpack.c.b16 %v220, %v219
        %v230 = vpack.c.b16 %v222, %v221
        %239 = vmatprep.subr.bf16.mxu0 0
        %240 = vmatpush1.bf16.msra.mxu0 %v230
        %241 = vmatprep.subr.bf16.mxu0 0
        %242 = vmatpush1.bf16.msra.mxu0 %v229
        %243 = vmatprep.subr.bf16.mxu0 0
        %244 = vmatpush1.bf16.msra.mxu0 %v228
        %245 = vmatprep.subr.bf16.mxu0 0
        %246 = vmatpush1.bf16.msra.mxu0 %v227
        %247 = vmatprep.subr.bf16.mxu0 0
        %248 = vmatpush1.bf16.msra.mxu0 %v226
        %249 = vmatprep.subr.bf16.mxu0 0
        %250 = vmatpush1.bf16.msra.mxu0 %v225
        %251 = vmatprep.subr.bf16.mxu0 0
        %252 = vmatpush1.bf16.msra.mxu0 %v224
        %253 = vmatprep.subr.bf16.mxu0 0
        %254 = vmatpush1.bf16.msra.mxu0 %v223
        %255 = vmatprep.subr.bf16.mxu0 0
        %256 = vmatpush2.bf16.msra.mxu0 0
        %257 = vmatprep.subr.bf16.mxu0 0
        %258 = vmatpush2.bf16.msra.mxu0 0
        %259 = vmatprep.subr.bf16.mxu0 0
        %260 = vmatpush2.bf16.msra.mxu0 0
        %261 = vmatprep.subr.bf16.mxu0 0
        %262 = vmatpush2.bf16.msra.mxu0 0
        %263 = vmatprep.subr.bf16.mxu0 0
        %264 = vmatpush2.bf16.msra.mxu0 0
        %265 = vmatprep.subr.bf16.mxu0 0
        %266 = vmatpush2.bf16.msra.mxu0 0
        %267 = vmatprep.subr.bf16.mxu0 0
        %268 = vmatpush2.bf16.msra.mxu0 0
        %269 = vmatprep.subr.bf16.mxu0 0
        %270 = vmatpush2.bf16.msra.mxu0 0
        %271 = vmatprep.mubr.bf16.mxu0 0
        %272 = vmatmul.mubr.bf16.gmra.mxu0 %v183
        %v273 = vpop.f32.mrf.mxu0
        %v274 = vadd.f32 %v189, %v273
        %v275 = vpop.f32.mrf.mxu0
        %v276 = vpop.f32.mrf.mxu0
        %v277 = vpop.f32.mrf.mxu0
        %278 = vdwg.mxu0
        %v279 = vpack.c.bf16 %v274, %v274
        %280 = vst [vmem:[%s159] sm:$0xf] %v279
        %s281 = scalar_lea.vmem %s1, 64
        %v282 = vld [vmem:[%s281] sm:$0xf]
        %v283 = vld [vmem:[%s281 + $0x4] sm:$0xf]
        %v284 = vld [vmem:[%s281 + $0x8] sm:$0xf]
        %v285 = vld [vmem:[%s281 + $0xc] sm:$0xf]
        %v286 = vld [vmem:[%s281 + $0x10] sm:$0xf]
        %v287 = vld [vmem:[%s281 + $0x14] sm:$0xf]
        %v288 = vld [vmem:[%s281 + $0x18] sm:$0xf]
        %v289 = vld [vmem:[%s281 + $0x1c] sm:$0xf]
        %v290 = vld [vmem:[%s281 + $0x20] sm:$0xf]
        %v291 = vld [vmem:[%s281 + $0x24] sm:$0xf]
        %v292 = vld [vmem:[%s281 + $0x28] sm:$0xf]
        %v293 = vld [vmem:[%s281 + $0x2c] sm:$0xf]
        %v294 = vld [vmem:[%s281 + $0x30] sm:$0xf]
        %v295 = vld [vmem:[%s281 + $0x34] sm:$0xf]
        %v296 = vld [vmem:[%s281 + $0x38] sm:$0xf]
        %v297 = vld [vmem:[%s281 + $0x3c] sm:$0xf]
        %v298 = vld [vmem:[%s164 + $0x8] sm:$0xff]
        %v299 = vpack.c.bf16 %v298, %v298
        %v316 = vunpack.c.l.b16 %v282
        %v317 = vunpack.c.l.b16 %v283
        %v318 = vunpack.c.l.b16 %v284
        %v319 = vunpack.c.l.b16 %v285
        %v320 = vunpack.c.l.b16 %v286
        %v321 = vunpack.c.l.b16 %v287
        %v322 = vunpack.c.l.b16 %v288
        %v323 = vunpack.c.l.b16 %v289
        %v324 = vunpack.c.l.b16 %v290
        %v325 = vunpack.c.l.b16 %v291
        %v326 = vunpack.c.l.b16 %v292
        %v327 = vunpack.c.l.b16 %v293
        %v328 = vunpack.c.l.b16 %v294
        %v329 = vunpack.c.l.b16 %v295
        %v330 = vunpack.c.l.b16 %v296
        %v331 = vunpack.c.l.b16 %v297
        %v332 = vpack.c.b16 %v317, %v316
        %v333 = vpack.c.b16 %v319, %v318
        %v334 = vpack.c.b16 %v321, %v320
        %v335 = vpack.c.b16 %v323, %v322
        %v336 = vpack.c.b16 %v325, %v324
        %v337 = vpack.c.b16 %v327, %v326
        %v338 = vpack.c.b16 %v329, %v328
        %v339 = vpack.c.b16 %v331, %v330
        %348 = vmatprep.subr.bf16.mxu0 0
        %349 = vmatpush1.bf16.msra.mxu0 %v339
        %350 = vmatprep.subr.bf16.mxu0 0
        %351 = vmatpush1.bf16.msra.mxu0 %v338
        %352 = vmatprep.subr.bf16.mxu0 0
        %353 = vmatpush1.bf16.msra.mxu0 %v337
        %354 = vmatprep.subr.bf16.mxu0 0
        %355 = vmatpush1.bf16.msra.mxu0 %v336
        %356 = vmatprep.subr.bf16.mxu0 0
        %357 = vmatpush1.bf16.msra.mxu0 %v335
        %358 = vmatprep.subr.bf16.mxu0 0
        %359 = vmatpush1.bf16.msra.mxu0 %v334
        %360 = vmatprep.subr.bf16.mxu0 0
        %361 = vmatpush1.bf16.msra.mxu0 %v333
        %362 = vmatprep.subr.bf16.mxu0 0
        %363 = vmatpush1.bf16.msra.mxu0 %v332
        %364 = vmatprep.subr.bf16.mxu0 0
        %365 = vmatpush2.bf16.msra.mxu0 0
        %366 = vmatprep.subr.bf16.mxu0 0
        %367 = vmatpush2.bf16.msra.mxu0 0
        %368 = vmatprep.subr.bf16.mxu0 0
        %369 = vmatpush2.bf16.msra.mxu0 0
        %370 = vmatprep.subr.bf16.mxu0 0
        %371 = vmatpush2.bf16.msra.mxu0 0
        %372 = vmatprep.subr.bf16.mxu0 0
        %373 = vmatpush2.bf16.msra.mxu0 0
        %374 = vmatprep.subr.bf16.mxu0 0
        %375 = vmatpush2.bf16.msra.mxu0 0
        %376 = vmatprep.subr.bf16.mxu0 0
        %377 = vmatpush2.bf16.msra.mxu0 0
        %378 = vmatprep.subr.bf16.mxu0 0
        %379 = vmatpush2.bf16.msra.mxu0 0
        %380 = vmatprep.mubr.bf16.mxu0 0
        %381 = vmatmul.mubr.bf16.gmra.mxu0 %v299
        %v382 = vpop.f32.mrf.mxu0
        %v383 = vadd.f32 0.0, %v382
        %v384 = vpop.f32.mrf.mxu0
        %v385 = vpop.f32.mrf.mxu0
        %v386 = vpop.f32.mrf.mxu0
        %387 = vdwg.mxu0
        %v388 = vpack.c.bf16 %v383, %v383
        %s389 = scalar_lea.vmem %s159, 4 [#allocation2]
        %390 = vst [vmem:[%s389] sm:$0xf] %v388
        %v391 = vld [vmem:[%s164 + $0x10] sm:$0xff]
        %v392 = vpack.c.bf16 %v391, %v391
        %393 = vmatprep.subr.bf16.mxu0 0
        %394 = vmatpush1.bf16.msra.mxu0 %v339
        %395 = vmatprep.subr.bf16.mxu0 0
        %396 = vmatpush1.bf16.msra.mxu0 %v338
        %397 = vmatprep.subr.bf16.mxu0 0
        %398 = vmatpush1.bf16.msra.mxu0 %v337
        %399 = vmatprep.subr.bf16.mxu0 0
        %400 = vmatpush1.bf16.msra.mxu0 %v336
        %401 = vmatprep.subr.bf16.mxu0 0
        %402 = vmatpush1.bf16.msra.mxu0 %v335
        %403 = vmatprep.subr.bf16.mxu0 0
        %404 = vmatpush1.bf16.msra.mxu0 %v334
        %405 = vmatprep.subr.bf16.mxu0 0
        %406 = vmatpush1.bf16.msra.mxu0 %v333
        %407 = vmatprep.subr.bf16.mxu0 0
        %408 = vmatpush1.bf16.msra.mxu0 %v332
        %409 = vmatprep.subr.bf16.mxu0 0
        %410 = vmatpush2.bf16.msra.mxu0 0
        %411 = vmatprep.subr.bf16.mxu0 0
        %412 = vmatpush2.bf16.msra.mxu0 0
        %413 = vmatprep.subr.bf16.mxu0 0
        %414 = vmatpush2.bf16.msra.mxu0 0
        %415 = vmatprep.subr.bf16.mxu0 0
        %416 = vmatpush2.bf16.msra.mxu0 0
        %417 = vmatprep.subr.bf16.mxu0 0
        %418 = vmatpush2.bf16.msra.mxu0 0
        %419 = vmatprep.subr.bf16.mxu0 0
        %420 = vmatpush2.bf16.msra.mxu0 0
        %421 = vmatprep.subr.bf16.mxu0 0
        %422 = vmatpush2.bf16.msra.mxu0 0
        %423 = vmatprep.subr.bf16.mxu0 0
        %424 = vmatpush2.bf16.msra.mxu0 0
        %425 = vmatprep.mubr.bf16.mxu0 0
        %426 = vmatmul.mubr.bf16.gmra.mxu0 %v392
        %v427 = vpop.f32.mrf.mxu0
        %v428 = vadd.f32 0.0, %v427
        %v429 = vpop.f32.mrf.mxu0
        %v430 = vpop.f32.mrf.mxu0
        %v431 = vpop.f32.mrf.mxu0
        %432 = vdwg.mxu0
        %v433 = vpack.c.bf16 %v428, %v428
        %s434 = scalar_lea.vmem %s159, 8 [#allocation2]
        %435 = vst [vmem:[%s434] sm:$0xf] %v433
        %v436 = vld [vmem:[%s164 + $0x18] sm:$0xff]
        %v437 = vpack.c.bf16 %v436, %v436
        %438 = vmatprep.subr.bf16.mxu0 0
        %439 = vmatpush1.bf16.msra.mxu0 %v339
        %440 = vmatprep.subr.bf16.mxu0 0
        %441 = vmatpush1.bf16.msra.mxu0 %v338
        %442 = vmatprep.subr.bf16.mxu0 0
        %443 = vmatpush1.bf16.msra.mxu0 %v337
        %444 = vmatprep.subr.bf16.mxu0 0
        %445 = vmatpush1.bf16.msra.mxu0 %v336
        %446 = vmatprep.subr.bf16.mxu0 0
        %447 = vmatpush1.bf16.msra.mxu0 %v335
        %448 = vmatprep.subr.bf16.mxu0 0
        %449 = vmatpush1.bf16.msra.mxu0 %v334
        %450 = vmatprep.subr.bf16.mxu0 0
        %451 = vmatpush1.bf16.msra.mxu0 %v333
        %452 = vmatprep.subr.bf16.mxu0 0
        %453 = vmatpush1.bf16.msra.mxu0 %v332
        %454 = vmatprep.subr.bf16.mxu0 0
        %455 = vmatpush2.bf16.msra.mxu0 0
        %456 = vmatprep.subr.bf16.mxu0 0
        %457 = vmatpush2.bf16.msra.mxu0 0
        %458 = vmatprep.subr.bf16.mxu0 0
        %459 = vmatpush2.bf16.msra.mxu0 0
        %460 = vmatprep.subr.bf16.mxu0 0
        %461 = vmatpush2.bf16.msra.mxu0 0
        %462 = vmatprep.subr.bf16.mxu0 0
        %463 = vmatpush2.bf16.msra.mxu0 0
        %464 = vmatprep.subr.bf16.mxu0 0
        %465 = vmatpush2.bf16.msra.mxu0 0
        %466 = vmatprep.subr.bf16.mxu0 0
        %467 = vmatpush2.bf16.msra.mxu0 0
        %468 = vmatprep.subr.bf16.mxu0 0
        %469 = vmatpush2.bf16.msra.mxu0 0
        %470 = vmatprep.mubr.bf16.mxu0 0
        %471 = vmatmul.mubr.bf16.gmra.mxu0 %v437
        %v472 = vpop.f32.mrf.mxu0
        %v473 = vadd.f32 0.0, %v472
        %v474 = vpop.f32.mrf.mxu0
        %v475 = vpop.f32.mrf.mxu0
        %v476 = vpop.f32.mrf.mxu0
        %477 = vdwg.mxu0
        %v478 = vpack.c.bf16 %v473, %v473
        %s479 = scalar_lea.vmem %s159, 12 [#allocation2]
        %480 = vst [vmem:[%s479] sm:$0xf] %v478
        %s481 = scalar_lea.vmem %s1, 128
        %v482 = vld [vmem:[%s481] sm:$0xf]
        %v483 = vld [vmem:[%s481 + $0x4] sm:$0xf]
        %v484 = vld [vmem:[%s481 + $0x8] sm:$0xf]
        %v485 = vld [vmem:[%s481 + $0xc] sm:$0xf]
        %v486 = vld [vmem:[%s481 + $0x10] sm:$0xf]
        %v487 = vld [vmem:[%s481 + $0x14] sm:$0xf]
        %v488 = vld [vmem:[%s481 + $0x18] sm:$0xf]
        %v489 = vld [vmem:[%s481 + $0x1c] sm:$0xf]
        %v490 = vld [vmem:[%s481 + $0x20] sm:$0xf]
        %v491 = vld [vmem:[%s481 + $0x24] sm:$0xf]
        %v492 = vld [vmem:[%s481 + $0x28] sm:$0xf]
        %v493 = vld [vmem:[%s481 + $0x2c] sm:$0xf]
        %v494 = vld [vmem:[%s481 + $0x30] sm:$0xf]
        %v495 = vld [vmem:[%s481 + $0x34] sm:$0xf]
        %v496 = vld [vmem:[%s481 + $0x38] sm:$0xf]
        %v497 = vld [vmem:[%s481 + $0x3c] sm:$0xf]
        %v498 = vld [vmem:[%s164 + $0x20] sm:$0xff]
        %v499 = vpack.c.bf16 %v498, %v498
        %v516 = vunpack.c.l.b16 %v482
        %v517 = vunpack.c.l.b16 %v483
        %v518 = vunpack.c.l.b16 %v484
        %v519 = vunpack.c.l.b16 %v485
        %v520 = vunpack.c.l.b16 %v486
        %v521 = vunpack.c.l.b16 %v487
        %v522 = vunpack.c.l.b16 %v488
        %v523 = vunpack.c.l.b16 %v489
        %v524 = vunpack.c.l.b16 %v490
        %v525 = vunpack.c.l.b16 %v491
        %v526 = vunpack.c.l.b16 %v492
        %v527 = vunpack.c.l.b16 %v493
        %v528 = vunpack.c.l.b16 %v494
        %v529 = vunpack.c.l.b16 %v495
        %v530 = vunpack.c.l.b16 %v496
        %v531 = vunpack.c.l.b16 %v497
        %v532 = vpack.c.b16 %v517, %v516
        %v533 = vpack.c.b16 %v519, %v518
        %v534 = vpack.c.b16 %v521, %v520
        %v535 = vpack.c.b16 %v523, %v522
        %v536 = vpack.c.b16 %v525, %v524
        %v537 = vpack.c.b16 %v527, %v526
        %v538 = vpack.c.b16 %v529, %v528
        %v539 = vpack.c.b16 %v531, %v530
        %548 = vmatprep.subr.bf16.mxu0 0
        %549 = vmatpush1.bf16.msra.mxu0 %v539
        %550 = vmatprep.subr.bf16.mxu0 0
        %551 = vmatpush1.bf16.msra.mxu0 %v538
        %552 = vmatprep.subr.bf16.mxu0 0
        %553 = vmatpush1.bf16.msra.mxu0 %v537
        %554 = vmatprep.subr.bf16.mxu0 0
        %555 = vmatpush1.bf16.msra.mxu0 %v536
        %556 = vmatprep.subr.bf16.mxu0 0
        %557 = vmatpush1.bf16.msra.mxu0 %v535
        %558 = vmatprep.subr.bf16.mxu0 0
        %559 = vmatpush1.bf16.msra.mxu0 %v534
        %560 = vmatprep.subr.bf16.mxu0 0
        %561 = vmatpush1.bf16.msra.mxu0 %v533
        %562 = vmatprep.subr.bf16.mxu0 0
        %563 = vmatpush1.bf16.msra.mxu0 %v532
        %564 = vmatprep.subr.bf16.mxu0 0
        %565 = vmatpush2.bf16.msra.mxu0 0
        %566 = vmatprep.subr.bf16.mxu0 0
        %567 = vmatpush2.bf16.msra.mxu0 0
        %568 = vmatprep.subr.bf16.mxu0 0
        %569 = vmatpush2.bf16.msra.mxu0 0
        %570 = vmatprep.subr.bf16.mxu0 0
        %571 = vmatpush2.bf16.msra.mxu0 0
        %572 = vmatprep.subr.bf16.mxu0 0
        %573 = vmatpush2.bf16.msra.mxu0 0
        %574 = vmatprep.subr.bf16.mxu0 0
        %575 = vmatpush2.bf16.msra.mxu0 0
        %576 = vmatprep.subr.bf16.mxu0 0
        %577 = vmatpush2.bf16.msra.mxu0 0
        %578 = vmatprep.subr.bf16.mxu0 0
        %579 = vmatpush2.bf16.msra.mxu0 0
        %580 = vmatprep.mubr.bf16.mxu0 0
        %581 = vmatmul.mubr.bf16.gmra.mxu0 %v499
        %v582 = vpop.f32.mrf.mxu0
        %v583 = vadd.f32 0.0, %v582
        %v584 = vpop.f32.mrf.mxu0
        %v585 = vpop.f32.mrf.mxu0
        %v586 = vpop.f32.mrf.mxu0
        %587 = vdwg.mxu0
        %v588 = vpack.c.bf16 %v583, %v583
        %s589 = scalar_lea.vmem %s159, 16 [#allocation2]
        %590 = vst [vmem:[%s589] sm:$0xf] %v588
        %v591 = vld [vmem:[%s164 + $0x28] sm:$0xff]
        %v592 = vpack.c.bf16 %v591, %v591
        %593 = vmatprep.subr.bf16.mxu0 0
        %594 = vmatpush1.bf16.msra.mxu0 %v539
        %595 = vmatprep.subr.bf16.mxu0 0
        %596 = vmatpush1.bf16.msra.mxu0 %v538
        %597 = vmatprep.subr.bf16.mxu0 0
        %598 = vmatpush1.bf16.msra.mxu0 %v537
        %599 = vmatprep.subr.bf16.mxu0 0
        %600 = vmatpush1.bf16.msra.mxu0 %v536
        %601 = vmatprep.subr.bf16.mxu0 0
        %602 = vmatpush1.bf16.msra.mxu0 %v535
        %603 = vmatprep.subr.bf16.mxu0 0
        %604 = vmatpush1.bf16.msra.mxu0 %v534
        %605 = vmatprep.subr.bf16.mxu0 0
        %606 = vmatpush1.bf16.msra.mxu0 %v533
        %607 = vmatprep.subr.bf16.mxu0 0
        %608 = vmatpush1.bf16.msra.mxu0 %v532
        %609 = vmatprep.subr.bf16.mxu0 0
        %610 = vmatpush2.bf16.msra.mxu0 0
        %611 = vmatprep.subr.bf16.mxu0 0
        %612 = vmatpush2.bf16.msra.mxu0 0
        %613 = vmatprep.subr.bf16.mxu0 0
        %614 = vmatpush2.bf16.msra.mxu0 0
        %615 = vmatprep.subr.bf16.mxu0 0
        %616 = vmatpush2.bf16.msra.mxu0 0
        %617 = vmatprep.subr.bf16.mxu0 0
        %618 = vmatpush2.bf16.msra.mxu0 0
        %619 = vmatprep.subr.bf16.mxu0 0
        %620 = vmatpush2.bf16.msra.mxu0 0
        %621 = vmatprep.subr.bf16.mxu0 0
        %622 = vmatpush2.bf16.msra.mxu0 0
        %623 = vmatprep.subr.bf16.mxu0 0
        %624 = vmatpush2.bf16.msra.mxu0 0
        %625 = vmatprep.mubr.bf16.mxu0 0
        %626 = vmatmul.mubr.bf16.gmra.mxu0 %v592
        %v627 = vpop.f32.mrf.mxu0
        %v628 = vadd.f32 0.0, %v627
        %v629 = vpop.f32.mrf.mxu0
        %v630 = vpop.f32.mrf.mxu0
        %v631 = vpop.f32.mrf.mxu0
        %632 = vdwg.mxu0
        %v633 = vpack.c.bf16 %v628, %v628
        %s634 = scalar_lea.vmem %s159, 20 [#allocation2]
        %635 = vst [vmem:[%s634] sm:$0xf] %v633
        %v636 = vld [vmem:[%s164 + $0x30] sm:$0xff]
        %v637 = vpack.c.bf16 %v636, %v636
        %638 = vmatprep.subr.bf16.mxu0 0
        %639 = vmatpush1.bf16.msra.mxu0 %v539
        %640 = vmatprep.subr.bf16.mxu0 0
        %641 = vmatpush1.bf16.msra.mxu0 %v538
        %642 = vmatprep.subr.bf16.mxu0 0
        %643 = vmatpush1.bf16.msra.mxu0 %v537
        %644 = vmatprep.subr.bf16.mxu0 0
        %645 = vmatpush1.bf16.msra.mxu0 %v536
        %646 = vmatprep.subr.bf16.mxu0 0
        %647 = vmatpush1.bf16.msra.mxu0 %v535
        %648 = vmatprep.subr.bf16.mxu0 0
        %649 = vmatpush1.bf16.msra.mxu0 %v534
        %650 = vmatprep.subr.bf16.mxu0 0
        %651 = vmatpush1.bf16.msra.mxu0 %v533
        %652 = vmatprep.subr.bf16.mxu0 0
        %653 = vmatpush1.bf16.msra.mxu0 %v532
        %654 = vmatprep.subr.bf16.mxu0 0
        %655 = vmatpush2.bf16.msra.mxu0 0
        %656 = vmatprep.subr.bf16.mxu0 0
        %657 = vmatpush2.bf16.msra.mxu0 0
        %658 = vmatprep.subr.bf16.mxu0 0
        %659 = vmatpush2.bf16.msra.mxu0 0
        %660 = vmatprep.subr.bf16.mxu0 0
        %661 = vmatpush2.bf16.msra.mxu0 0
        %662 = vmatprep.subr.bf16.mxu0 0
        %663 = vmatpush2.bf16.msra.mxu0 0
        %664 = vmatprep.subr.bf16.mxu0 0
        %665 = vmatpush2.bf16.msra.mxu0 0
        %666 = vmatprep.subr.bf16.mxu0 0
        %667 = vmatpush2.bf16.msra.mxu0 0
        %668 = vmatprep.subr.bf16.mxu0 0
        %669 = vmatpush2.bf16.msra.mxu0 0
        %670 = vmatprep.mubr.bf16.mxu0 0
        %671 = vmatmul.mubr.bf16.gmra.mxu0 %v637
        %v672 = vpop.f32.mrf.mxu0
        %v673 = vadd.f32 0.0, %v672
        %v674 = vpop.f32.mrf.mxu0
        %v675 = vpop.f32.mrf.mxu0
        %v676 = vpop.f32.mrf.mxu0
        %677 = vdwg.mxu0
        %v678 = vpack.c.bf16 %v673, %v673
        %s679 = scalar_lea.vmem %s159, 24 [#allocation2]
        %680 = vst [vmem:[%s679] sm:$0xf] %v678
        %v681 = vld [vmem:[%s164 + $0x38] sm:$0xff]
        %v682 = vpack.c.bf16 %v681, %v681
        %683 = vmatprep.subr.bf16.mxu0 0
        %684 = vmatpush1.bf16.msra.mxu0 %v539
        %685 = vmatprep.subr.bf16.mxu0 0
        %686 = vmatpush1.bf16.msra.mxu0 %v538
        %687 = vmatprep.subr.bf16.mxu0 0
        %688 = vmatpush1.bf16.msra.mxu0 %v537
        %689 = vmatprep.subr.bf16.mxu0 0
        %690 = vmatpush1.bf16.msra.mxu0 %v536
        %691 = vmatprep.subr.bf16.mxu0 0
        %692 = vmatpush1.bf16.msra.mxu0 %v535
        %693 = vmatprep.subr.bf16.mxu0 0
        %694 = vmatpush1.bf16.msra.mxu0 %v534
        %695 = vmatprep.subr.bf16.mxu0 0
        %696 = vmatpush1.bf16.msra.mxu0 %v533
        %697 = vmatprep.subr.bf16.mxu0 0
        %698 = vmatpush1.bf16.msra.mxu0 %v532
        %699 = vmatprep.subr.bf16.mxu0 0
        %700 = vmatpush2.bf16.msra.mxu0 0
        %701 = vmatprep.subr.bf16.mxu0 0
        %702 = vmatpush2.bf16.msra.mxu0 0
        %703 = vmatprep.subr.bf16.mxu0 0
        %704 = vmatpush2.bf16.msra.mxu0 0
        %705 = vmatprep.subr.bf16.mxu0 0
        %706 = vmatpush2.bf16.msra.mxu0 0
        %707 = vmatprep.subr.bf16.mxu0 0
        %708 = vmatpush2.bf16.msra.mxu0 0
        %709 = vmatprep.subr.bf16.mxu0 0
        %710 = vmatpush2.bf16.msra.mxu0 0
        %711 = vmatprep.subr.bf16.mxu0 0
        %712 = vmatpush2.bf16.msra.mxu0 0
        %713 = vmatprep.subr.bf16.mxu0 0
        %714 = vmatpush2.bf16.msra.mxu0 0
        %715 = vmatprep.mubr.bf16.mxu0 0
        %716 = vmatmul.mubr.bf16.gmra.mxu0 %v682
        %v717 = vpop.f32.mrf.mxu0
        %v718 = vadd.f32 0.0, %v717
        %v719 = vpop.f32.mrf.mxu0
        %v720 = vpop.f32.mrf.mxu0
        %v721 = vpop.f32.mrf.mxu0
        %722 = vdwg.mxu0
        %v723 = vpack.c.bf16 %v718, %v718
        %s724 = scalar_lea.vmem %s159, 28 [#allocation2]
        %725 = vst [vmem:[%s724] sm:$0xf] %v723
        %v726 = vld [vmem:[%s164 + $0x40] sm:$0xff]
        %v727 = vpack.c.bf16 %v726, %v726
        %728 = vmatprep.subr.bf16.mxu0 0
        %729 = vmatpush1.bf16.msra.mxu0 %v539
        %730 = vmatprep.subr.bf16.mxu0 0
        %731 = vmatpush1.bf16.msra.mxu0 %v538
        %732 = vmatprep.subr.bf16.mxu0 0
        %733 = vmatpush1.bf16.msra.mxu0 %v537
        %734 = vmatprep.subr.bf16.mxu0 0
        %735 = vmatpush1.bf16.msra.mxu0 %v536
        %736 = vmatprep.subr.bf16.mxu0 0
        %737 = vmatpush1.bf16.msra.mxu0 %v535
        %738 = vmatprep.subr.bf16.mxu0 0
        %739 = vmatpush1.bf16.msra.mxu0 %v534
        %740 = vmatprep.subr.bf16.mxu0 0
        %741 = vmatpush1.bf16.msra.mxu0 %v533
        %742 = vmatprep.subr.bf16.mxu0 0
        %743 = vmatpush1.bf16.msra.mxu0 %v532
        %744 = vmatprep.subr.bf16.mxu0 0
        %745 = vmatpush2.bf16.msra.mxu0 0
        %746 = vmatprep.subr.bf16.mxu0 0
        %747 = vmatpush2.bf16.msra.mxu0 0
        %748 = vmatprep.subr.bf16.mxu0 0
        %749 = vmatpush2.bf16.msra.mxu0 0
        %750 = vmatprep.subr.bf16.mxu0 0
        %751 = vmatpush2.bf16.msra.mxu0 0
        %752 = vmatprep.subr.bf16.mxu0 0
        %753 = vmatpush2.bf16.msra.mxu0 0
        %754 = vmatprep.subr.bf16.mxu0 0
        %755 = vmatpush2.bf16.msra.mxu0 0
        %756 = vmatprep.subr.bf16.mxu0 0
        %757 = vmatpush2.bf16.msra.mxu0 0
        %758 = vmatprep.subr.bf16.mxu0 0
        %759 = vmatpush2.bf16.msra.mxu0 0
        %760 = vmatprep.mubr.bf16.mxu0 0
        %761 = vmatmul.mubr.bf16.gmra.mxu0 %v727
        %v762 = vpop.f32.mrf.mxu0
        %v763 = vadd.f32 0.0, %v762
        %v764 = vpop.f32.mrf.mxu0
        %v765 = vpop.f32.mrf.mxu0
        %v766 = vpop.f32.mrf.mxu0
        %767 = vdwg.mxu0
        %v768 = vpack.c.bf16 %v763, %v763
        %s769 = scalar_lea.vmem %s159, 32 [#allocation2]
        %770 = vst [vmem:[%s769] sm:$0xf] %v768
        %s771 = sand.u32 %s90, 1
        %s772 = sand.u32 %s90, 1
        %s773 = smul.addr %s772, 36
        %s774 = scalar_lea.vmem [#allocation2], %s773
        // Predicated region
        $region33: #{feedforward_pallas.3} parent=31 // pred_check
          %p775 = pneg %p100
        $region34: #{feedforward_pallas.3} parent=31 // pred_check_branch
          %777 = sbr.rel (%p775) target = $region36
        $region35: #{feedforward_pallas.3} parent=31 // pred_region
          %s778 = smul.addr %s14, 4
          %s779 = scalar_lea.vmem %s3, %s778
          // Predicated region
          $region37: #{feedforward_pallas.3} parent=35 // pred_check
            _
          $region38: #{feedforward_pallas.3} parent=35 // pred_check_branch
            %781 = sbr.rel (0) target = $region40
          $region39: #{feedforward_pallas.3} parent=35 // pred_region
            // Predicated region
            $region41: #{feedforward_pallas.3} parent=39 // pred_check
              _
            $region42: #{feedforward_pallas.3} parent=39 // pred_check_branch
              %783 = sbr.rel target = $region44
            $region43: #{feedforward_pallas.3} parent=39 // pred_region
              // Predicated region
              $region56: #{feedforward_pallas.3} parent=43 // pred_check
                _
              $region57: #{feedforward_pallas.3} parent=43 // pred_check_branch
                %815 = sbr.rel (0) target = $region59
              $region58: #{feedforward_pallas.3} parent=43 // pred_region
                loop: start=0, step=1, limit=1
                $region60: #{feedforward_pallas.3} parent=58 // loop_pre_header
                  _
                $region61: #{feedforward_pallas.3} parent=58 // loop_header
                  %s817 = sphi 0, %s821
                  %p818 = scmp.ge.s32.totalorder %s817, 1
                  %s822 = sphi %s774, %s774
                  %s823 = sphi %s779, %s779
                $region62: #{feedforward_pallas.3} parent=58 // loop_header_branch
                  %820 = sbr.rel (%p818) target = $region66
                $region63: #{feedforward_pallas.3} parent=58 // loop_body
                  _
                $region64: #{feedforward_pallas.3} parent=58 // loop_footer
                  %s821 = sadd.s32 1, %s817
                $region65: #{feedforward_pallas.3} parent=58 // loop_footer_branch
                  %816 = sbr.rel target = $region61
                $region66: #{feedforward_pallas.3} parent=58 // loop_exit
                  _
                %s825 = ssub.s32 16, 1
                loop: start=0, step=1, limit=1
                $region67: #{feedforward_pallas.3} parent=58 // loop_pre_header
                  _
                $region68: #{feedforward_pallas.3} parent=58 // loop_header
                  %s827 = sphi 0, %s831
                  %p828 = scmp.ge.s32.totalorder %s827, 1
                  %s832 = sphi %s774, %s774
                  %s833 = sphi %s779, %s779
                $region69: #{feedforward_pallas.3} parent=58 // loop_header_branch
                  %830 = sbr.rel (%p828) target = $region73
                $region70: #{feedforward_pallas.3} parent=58 // loop_body
                  %v834 = vld [vmem:[%s832] sm:%s825]
                  %835 = vst [vmem:[%s833] sm:%s825] %v834
                  %v836 = vld [vmem:[%s832 + $0x4] sm:%s825]
                  %837 = vst [vmem:[%s833 + $0x8] sm:%s825] %v836
                  %v838 = vld [vmem:[%s832 + $0x8] sm:%s825]
                  %839 = vst [vmem:[%s833 + $0x10] sm:%s825] %v838
                  %v840 = vld [vmem:[%s832 + $0xc] sm:%s825]
                  %841 = vst [vmem:[%s833 + $0x18] sm:%s825] %v840
                  %v842 = vld [vmem:[%s832 + $0x10] sm:%s825]
                  %843 = vst [vmem:[%s833 + $0x20] sm:%s825] %v842
                  %v844 = vld [vmem:[%s832 + $0x14] sm:%s825]
                  %845 = vst [vmem:[%s833 + $0x28] sm:%s825] %v844
                  %v846 = vld [vmem:[%s832 + $0x18] sm:%s825]
                  %847 = vst [vmem:[%s833 + $0x30] sm:%s825] %v846
                  %v848 = vld [vmem:[%s832 + $0x1c] sm:%s825]
                  %849 = vst [vmem:[%s833 + $0x38] sm:%s825] %v848
                  %v850 = vld [vmem:[%s832 + $0x20] sm:%s825]
                  %851 = vst [vmem:[%s833 + $0x40] sm:%s825] %v850
                $region71: #{feedforward_pallas.3} parent=58 // loop_footer
                  %s831 = sadd.s32 1, %s827
                $region72: #{feedforward_pallas.3} parent=58 // loop_footer_branch
                  %826 = sbr.rel target = $region68
                $region73: #{feedforward_pallas.3} parent=58 // loop_exit
                  _
              $region59: #{feedforward_pallas.3} parent=43 // pred_fallthru
                _
            $region44: #{feedforward_pallas.3} parent=39 // pred_fallthru
              _
            // Predicated region
            $region45: #{feedforward_pallas.3} parent=39 // pred_check
              _
            $region46: #{feedforward_pallas.3} parent=39 // pred_check_branch
              %785 = sbr.rel (0) target = $region48
            $region47: #{feedforward_pallas.3} parent=39 // pred_region
              %s787 = ssub.s32 16, 1
              loop: start=0, step=1, limit=1
              $region49: #{feedforward_pallas.3} parent=47 // loop_pre_header
                _
              $region50: #{feedforward_pallas.3} parent=47 // loop_header
                %s789 = sphi 0, %s793
                %p790 = scmp.ge.s32.totalorder %s789, 1
                %s794 = sphi %s774, %s774
                %s795 = sphi %s779, %s779
              $region51: #{feedforward_pallas.3} parent=47 // loop_header_branch
                %792 = sbr.rel (%p790) target = $region55
              $region52: #{feedforward_pallas.3} parent=47 // loop_body
                %v796 = vld [vmem:[%s794] sm:%s787]
                %797 = vst [vmem:[%s795] sm:%s787] %v796
                %v798 = vld [vmem:[%s794 + $0x4] sm:%s787]
                %799 = vst [vmem:[%s795 + $0x8] sm:%s787] %v798
                %v800 = vld [vmem:[%s794 + $0x8] sm:%s787]
                %801 = vst [vmem:[%s795 + $0x10] sm:%s787] %v800
                %v802 = vld [vmem:[%s794 + $0xc] sm:%s787]
                %803 = vst [vmem:[%s795 + $0x18] sm:%s787] %v802
                %v804 = vld [vmem:[%s794 + $0x10] sm:%s787]
                %805 = vst [vmem:[%s795 + $0x20] sm:%s787] %v804
                %v806 = vld [vmem:[%s794 + $0x14] sm:%s787]
                %807 = vst [vmem:[%s795 + $0x28] sm:%s787] %v806
                %v808 = vld [vmem:[%s794 + $0x18] sm:%s787]
                %809 = vst [vmem:[%s795 + $0x30] sm:%s787] %v808
                %v810 = vld [vmem:[%s794 + $0x1c] sm:%s787]
                %811 = vst [vmem:[%s795 + $0x38] sm:%s787] %v810
                %v812 = vld [vmem:[%s794 + $0x20] sm:%s787]
                %813 = vst [vmem:[%s795 + $0x40] sm:%s787] %v812
              $region53: #{feedforward_pallas.3} parent=47 // loop_footer
                %s793 = sadd.s32 1, %s789
              $region54: #{feedforward_pallas.3} parent=47 // loop_footer_branch
                %788 = sbr.rel target = $region50
              $region55: #{feedforward_pallas.3} parent=47 // loop_exit
                _
            $region48: #{feedforward_pallas.3} parent=39 // pred_fallthru
              _
          $region40: #{feedforward_pallas.3} parent=35 // pred_fallthru
            _
          %852 = vnop
        $region36: #{feedforward_pallas.3} parent=31 // pred_fallthru
          _
      $region32: #{feedforward_pallas.3} parent=5 // pred_fallthru
        _
      %p853 = scmp.le.s32.totalorder 2, %s9
      // Predicated region
      $region74: #{feedforward_pallas.3} parent=5 // pred_check
        %p854 = pneg %p853
      $region75: #{feedforward_pallas.3} parent=5 // pred_check_branch
        %856 = sbr.rel (%p854) target = $region77
      $region76: #{feedforward_pallas.3} parent=5 // pred_region
        %s857 = ssub.s32 %s9, 2
        // Predicated region
        $region78: #{feedforward_pallas.3} parent=76 // pred_check
          %p858 = pneg %p106
        $region79: #{feedforward_pallas.3} parent=76 // pred_check_branch
          %860 = sbr.rel (%p858) target = $region81
        $region80: #{feedforward_pallas.3} parent=76 // pred_region
          %s861 = sand.u32 %s91, 1
          %s862 = sand.u32 %s91, 1
          %s863 = smul.addr %s862, 36
          %s864 = scalar_lea.vmem [#allocation2], %s863
        $region81: #{feedforward_pallas.3} parent=76 // pred_fallthru
          _
      $region77: #{feedforward_pallas.3} parent=5 // pred_fallthru
        _
    $region6: #{feedforward_pallas.3} parent=1 // loop_footer
      %s13 = sadd.s32 1, %s9
    $region7: #{feedforward_pallas.3} parent=1 // loop_footer_branch
      %8 = sbr.rel target = $region3
    $region8: #{feedforward_pallas.3} parent=1 // loop_exit
      _

// kernel: feedforward_pallas.4
$region0: #{feedforward_pallas.4}
  #allocation0 [shape = 'u32[]', space=smem, size = 0x4, offset = 0x4, fixed_abs, tag = 'smem constant byte address 0x4 - core index']
  #allocation1 [shape = 'u32[144,128]{1,0:T(1,128)}', space=vmem, size = 0x12000, scoped, tag = 'internal scratch']
  %s0 = inlined_call_operand.vmem [shape: bf16[9,2048], index: 0, kind: input, shape index: {}]
  %s1 = inlined_call_operand.vmem [shape: bf16[42,9], index: 1, kind: input, shape index: {}]
  %s2 = inlined_call_operand.vmem [shape: bf16[8,42], index: 2, kind: input, shape index: {}]
  %s3 = inlined_call_operand.vmem [shape: bf16[8,2048], index: 3, kind: output, shape index: {}]
  %s4 = sld [smem:[#allocation0]]
  $region68: #{feedforward_pallas.4} parent=0
    _
  %s6 = ssub.s32 1, %s4
  %s7 = scalar_select 0, %s6, %s4
  $region1: #{feedforward_pallas.4} parent=0
    #allocation2 [shape = 'u8[65536]{0}', space=vmem, size = 0x10000, scoped, tag = 'input window, operand 0']
    loop: start=0, step=1, limit=4
    $region2: #{feedforward_pallas.4} parent=1 // loop_pre_header
      _
    $region3: #{feedforward_pallas.4} parent=1 // loop_header
      %s9 = sphi 0, %s13
      %p10 = scmp.ge.s32.totalorder %s9, 4
      %s19 = sphi 0, %s21
      %s22 = sphi 0, %s19
      %s23 = sphi 0, %s22
      %s39 = sphi 0, %s23
      %s43 = sphi 0, %s43
      %s45 = sphi 0, %s43
      %s46 = sphi 0, %s45
      %s60 = sphi 0, %s46
      %s64 = sphi 0, %s64
      %s66 = sphi 0, %s64
      %s67 = sphi 0, %s66
      %s81 = sphi 0, %s67
      %s87 = sphi 0, %s89
      %s90 = sphi 0, %s87
      %s91 = sphi 0, %s90
      %s107 = sphi 0, %s91
    $region4: #{feedforward_pallas.4} parent=1 // loop_header_branch
      %12 = sbr.rel (%p10) target = $region8
    $region5: #{feedforward_pallas.4} parent=1 // loop_body
      %s14 = ssub.s32 %s9, 1
      %s15 = ssub.s32 %s9, 2
      %s16 = sadd.s32 %s9, 1
      %s17 = ssub.s32 %s9, %s16
      %p18 = scmp.eq.s32.totalorder %s17, 0
      %s20 = sadd.s32 %s19, 1
      %s21 = scalar_select %p18, %s19, %s20
      %p24 = pneg %p18
      %p25 = scmp.eq.s32.totalorder %s9, 1
      %p26 = por %p24, %p25
      %p27 = scmp.ne.s32.totalorder %s19, %s22
      %p28 = scmp.eq.s32.totalorder %s9, 0
      %p29 = por %p27, %p28
      %p30 = scmp.ne.s32.totalorder %s19, %s22
      %p31 = scmp.eq.s32.totalorder %s14, 1
      %p32 = por %p30, %p31
      %p33 = scmp.ne.s32.totalorder %s22, %s23
      %p34 = scmp.eq.s32.totalorder %s14, 0
      %p35 = por %p33, %p34
      %p36 = scmp.ne.s32.totalorder %s22, %s23
      %p37 = scmp.eq.s32.totalorder %s15, 1
      %p38 = por %p36, %p37
      %p40 = scmp.ne.s32.totalorder %s23, %s39
      %p41 = scmp.eq.s32.totalorder %s15, 0
      %p42 = por %p40, %p41
      %s44 = sadd.s32 %s43, 1
      %p47 = scmp.eq.s32.totalorder %s9, 1
      %p48 = scmp.ne.s32.totalorder %s43, %s45
      %p49 = scmp.eq.s32.totalorder %s9, 0
      %p50 = por %p48, %p49
      %p51 = scmp.ne.s32.totalorder %s43, %s45
      %p52 = scmp.eq.s32.totalorder %s14, 1
      %p53 = por %p51, %p52
      %p54 = scmp.ne.s32.totalorder %s45, %s46
      %p55 = scmp.eq.s32.totalorder %s14, 0
      %p56 = por %p54, %p55
      %p57 = scmp.ne.s32.totalorder %s45, %s46
      %p58 = scmp.eq.s32.totalorder %s15, 1
      %p59 = por %p57, %p58
      %p61 = scmp.ne.s32.totalorder %s46, %s60
      %p62 = scmp.eq.s32.totalorder %s15, 0
      %p63 = por %p61, %p62
      %s65 = sadd.s32 %s64, 1
      %p68 = scmp.eq.s32.totalorder %s9, 1
      %p69 = scmp.ne.s32.totalorder %s64, %s66
      %p70 = scmp.eq.s32.totalorder %s9, 0
      %p71 = por %p69, %p70
      %p72 = scmp.ne.s32.totalorder %s64, %s66
      %p73 = scmp.eq.s32.totalorder %s14, 1
      %p74 = por %p72, %p73
      %p75 = scmp.ne.s32.totalorder %s66, %s67
      %p76 = scmp.eq.s32.totalorder %s14, 0
      %p77 = por %p75, %p76
      %p78 = scmp.ne.s32.totalorder %s66, %s67
      %p79 = scmp.eq.s32.totalorder %s15, 1
      %p80 = por %p78, %p79
      %p82 = scmp.ne.s32.totalorder %s67, %s81
      %p83 = scmp.eq.s32.totalorder %s15, 0
      %p84 = por %p82, %p83
      %s85 = ssub.s32 %s9, %s16
      %p86 = scmp.eq.s32.totalorder %s85, 0
      %s88 = sadd.s32 %s87, 1
      %s89 = scalar_select %p86, %s87, %s88
      %p92 = pneg %p86
      %p93 = scmp.eq.s32.totalorder %s9, 1
      %p94 = por %p92, %p93
      %p95 = scmp.ne.s32.totalorder %s87, %s90
      %p96 = scmp.eq.s32.totalorder %s9, 0
      %p97 = por %p95, %p96
      %p98 = scmp.ne.s32.totalorder %s87, %s90
      %p99 = scmp.eq.s32.totalorder %s14, 1
      %p100 = por %p98, %p99
      %p101 = scmp.ne.s32.totalorder %s90, %s91
      %p102 = scmp.eq.s32.totalorder %s14, 0
      %p103 = por %p101, %p102
      %p104 = scmp.ne.s32.totalorder %s90, %s91
      %p105 = scmp.eq.s32.totalorder %s15, 1
      %p106 = por %p104, %p105
      %p108 = scmp.ne.s32.totalorder %s91, %s107
      %p109 = scmp.eq.s32.totalorder %s15, 0
      %p110 = por %p108, %p109
      %p111 = scmp.le.s32.totalorder 1, %s9
      %p112 = scmp.lt.s32.totalorder %s9, 3
      %p113 = pnand %p111, %p112
      %p114 = pneg %p113
      // Predicated region
      $region9: #{feedforward_pallas.4} parent=5 // pred_check
        _
      $region10: #{feedforward_pallas.4} parent=5 // pred_check_branch
        %116 = sbr.rel (%p113) target = $region12
      $region11: #{feedforward_pallas.4} parent=5 // pred_region
        %s117 = ssub.s32 %s9, 1
        // Predicated region
        $region13: #{feedforward_pallas.4} parent=11 // pred_check
          %p118 = pneg %p56
        $region14: #{feedforward_pallas.4} parent=11 // pred_check_branch
          %120 = sbr.rel (%p118) target = $region16
        $region15: #{feedforward_pallas.4} parent=11 // pred_region
          _
        $region16: #{feedforward_pallas.4} parent=11 // pred_fallthru
          _
        // Predicated region
        $region17: #{feedforward_pallas.4} parent=11 // pred_check
          %p121 = pneg %p77
        $region18: #{feedforward_pallas.4} parent=11 // pred_check_branch
          %123 = sbr.rel (%p121) target = $region20
        $region19: #{feedforward_pallas.4} parent=11 // pred_region
          _
        $region20: #{feedforward_pallas.4} parent=11 // pred_fallthru
          _
      $region12: #{feedforward_pallas.4} parent=5 // pred_fallthru
        _
      %p124 = scmp.lt.s32.totalorder %s9, 2
      // Predicated region
      $region21: #{feedforward_pallas.4} parent=5 // pred_check
        %p125 = pneg %p124
      $region22: #{feedforward_pallas.4} parent=5 // pred_check_branch
        %127 = sbr.rel (%p125) target = $region24
      $region23: #{feedforward_pallas.4} parent=5 // pred_region
        // Predicated region
        $region25: #{feedforward_pallas.4} parent=23 // pred_check
          %p128 = pneg %p29
        $region26: #{feedforward_pallas.4} parent=23 // pred_check_branch
          %130 = sbr.rel (%p128) target = $region28
        $region27: #{feedforward_pallas.4} parent=23 // pred_region
          %s131 = sand.u32 %s19, 1
          %s132 = sand.u32 %s19, 1
          %s133 = smul.addr %s132, 64
          %s134 = scalar_lea.vmem [#allocation2], %s133
          %s135 = smul.u32 8, %s9
          %s136 = smul.addr %s135, 4
          %s137 = scalar_lea.vmem %s0, %s136
          // Predicated region
          $region29: #{feedforward_pallas.4} parent=27 // pred_check
            _
          $region30: #{feedforward_pallas.4} parent=27 // pred_check_branch
            %139 = sbr.rel (0) target = $region32
          $region31: #{feedforward_pallas.4} parent=27 // pred_region
            // Predicated region
            $region33: #{feedforward_pallas.4} parent=31 // pred_check
              _
            $region34: #{feedforward_pallas.4} parent=31 // pred_check_branch
              %141 = sbr.rel (0) target = $region36
            $region35: #{feedforward_pallas.4} parent=31 // pred_region
              loop: start=0, step=1, limit=1
              $region37: #{feedforward_pallas.4} parent=35 // loop_pre_header
                _
              $region38: #{feedforward_pallas.4} parent=35 // loop_header
                %s143 = sphi 0, %s147
                %p144 = scmp.ge.s32.totalorder %s143, 1
                %s148 = sphi %s137, %s137
                %s149 = sphi %s134, %s134
              $region39: #{feedforward_pallas.4} parent=35 // loop_header_branch
                %146 = sbr.rel (%p144) target = $region43
              $region40: #{feedforward_pallas.4} parent=35 // loop_body
                %v150 = vld [vmem:[%s148] sm:$0xff]
                %151 = vst [vmem:[%s149] sm:$0xff] %v150
                %v152 = vld [vmem:[%s148 + $0x8] sm:$0xff]
                %153 = vst [vmem:[%s149 + $0x8] sm:$0xff] %v152
                %v154 = vld [vmem:[%s148 + $0x10] sm:$0xff]
                %155 = vst [vmem:[%s149 + $0x10] sm:$0xff] %v154
                %v156 = vld [vmem:[%s148 + $0x18] sm:$0xff]
                %157 = vst [vmem:[%s149 + $0x18] sm:$0xff] %v156
                %v158 = vld [vmem:[%s148 + $0x40] sm:$0xff]
                %159 = vst [vmem:[%s149 + $0x20] sm:$0xff] %v158
                %v160 = vld [vmem:[%s148 + $0x48] sm:$0xff]
                %161 = vst [vmem:[%s149 + $0x28] sm:$0xff] %v160
                %v162 = vld [vmem:[%s148 + $0x50] sm:$0xff]
                %163 = vst [vmem:[%s149 + $0x30] sm:$0xff] %v162
                %v164 = vld [vmem:[%s148 + $0x58] sm:$0xff]
                %165 = vst [vmem:[%s149 + $0x38] sm:$0xff] %v164
              $region41: #{feedforward_pallas.4} parent=35 // loop_footer
                %s147 = sadd.s32 1, %s143
              $region42: #{feedforward_pallas.4} parent=35 // loop_footer_branch
                %142 = sbr.rel target = $region38
              $region43: #{feedforward_pallas.4} parent=35 // loop_exit
                _
            $region36: #{feedforward_pallas.4} parent=31 // pred_fallthru
              _
            // Predicated region
            $region44: #{feedforward_pallas.4} parent=31 // pred_check
              _
            $region45: #{feedforward_pallas.4} parent=31 // pred_check_branch
              %167 = sbr.rel target = $region47
            $region46: #{feedforward_pallas.4} parent=31 // pred_region
              _
            $region47: #{feedforward_pallas.4} parent=31 // pred_fallthru
              _
          $region32: #{feedforward_pallas.4} parent=27 // pred_fallthru
            _
          %168 = vnop
        $region28: #{feedforward_pallas.4} parent=23 // pred_fallthru
          _
      $region24: #{feedforward_pallas.4} parent=5 // pred_fallthru
        _
      %p169 = scmp.le.s32.totalorder 1, %s9
      %p170 = scmp.lt.s32.totalorder %s9, 3
      %p171 = pnand %p169, %p170
      %p172 = pneg %p171
      // Predicated region
      $region48: #{feedforward_pallas.4} parent=5 // pred_check
        _
      $region49: #{feedforward_pallas.4} parent=5 // pred_check_branch
        %174 = sbr.rel (%p171) target = $region51
      $region50: #{feedforward_pallas.4} parent=5 // pred_region
        %s175 = ssub.s32 %s9, 1
        %s176 = sand.u32 %s22, 1
        %s177 = sand.u32 %s22, 1
        %s178 = smul.addr %s177, 64
        %s179 = scalar_lea.vmem [#allocation2], %s178
        // Predicated region
        $region52: #{feedforward_pallas.4} parent=50 // pred_check
          %p180 = pneg %p35
        $region53: #{feedforward_pallas.4} parent=50 // pred_check_branch
          %182 = sbr.rel (%p180) target = $region55
        $region54: #{feedforward_pallas.4} parent=50 // pred_region
          _
        $region55: #{feedforward_pallas.4} parent=50 // pred_fallthru
          _
        %s183 = sand.u32 %s22, 1
        %s184 = sand.u32 %s22, 1
        %s185 = smul.addr %s184, 64
        %s186 = scalar_lea.vmem [#allocation2], %s185
        %p187 = pneg %p35
        %p188 = pneg %p32
        %p189 = pneg %p56
        %p190 = pneg %p53
        %p191 = pneg %p77
        %p192 = pneg %p74
        %p193 = pneg %p103
        %p194 = pneg %p100
        %s195 = smul.u32 8, %s14
        %p196 = scmp.lt.s32.totalorder %s195, 15
        %s197 = scalar_select %p196, %s195, 15
        %s198 = smul.addr %s197, 4
        %s199 = scalar_lea.vmem %s3, %s198
        %s200 = smul.u32 8, %s14
        %s201 = smul.u32 8, %s14
        %p202 = scmp.lt.s32.totalorder %s201, 15
        %s203 = scalar_select %p202, %s201, 15
        %s204 = smul.addr %s203, 4
        %s205 = scalar_lea.vmem %s3, %s204
        %s206 = smul.u32 8, %s14
        %v208 = vld [vmem:[%s1] sm:$0xf]
        %v209 = vld [vmem:[%s1 + $0x4] sm:$0xf]
        %v210 = vld [vmem:[%s1 + $0x8] sm:$0xf]
        %v211 = vld [vmem:[%s1 + $0xc] sm:$0xf]
        %v212 = vld [vmem:[%s1 + $0x10] sm:$0xf]
        %v213 = vld [vmem:[%s1 + $0x14] sm:$0x1]
        %v214 = vld [vmem:[%s179] sm:$0xff]
        %v215 = vld [vmem:[%s179 + $0x8] sm:$0xff]
        %v216 = vld [vmem:[%s179 + $0x10] sm:$0xff]
        %v217 = vld [vmem:[%s179 + $0x18] sm:$0xff]
        %v218 = vld [vmem:[%s179 + $0x20] sm:$0x11]
        %v219 = vld [vmem:[%s179 + $0x28] sm:$0x11]
        %v220 = vld [vmem:[%s179 + $0x30] sm:$0x11]
        %v221 = vld [vmem:[%s179 + $0x38] sm:$0x11]
        %v228 = vunpack.c.l.b16 %v208
        %v229 = vunpack.c.l.b16 %v209
        %v230 = vunpack.c.l.b16 %v210
        %v231 = vunpack.c.l.b16 %v211
        %v232 = vunpack.c.l.b16 %v212
        %v233 = vunpack.c.l.b16 %v213
        %v234 = vpack.c.b16 %v229, %v228
        %v235 = vpack.c.b16 %v231, %v230
        %v236 = vpack.c.b16 %v233, %v232
        %v245 = vunpack.c.l.b16 %v214
        %v246 = vunpack.c.h.b16 %v214
        %v247 = vunpack.c.l.b16 %v215
        %v248 = vunpack.c.h.b16 %v215
        %v249 = vunpack.c.l.b16 %v216
        %v250 = vunpack.c.h.b16 %v216
        %v251 = vunpack.c.l.b16 %v217
        %v252 = vunpack.c.h.b16 %v217
        %v253 = vunpack.c.l.b16 %v218
        %v254 = vunpack.c.h.b16 %v218
        %v255 = vunpack.c.l.b16 %v219
        %v256 = vunpack.c.h.b16 %v219
        %v257 = vunpack.c.l.b16 %v220
        %v258 = vunpack.c.h.b16 %v220
        %v259 = vunpack.c.l.b16 %v221
        %v260 = vunpack.c.h.b16 %v221
        %v261 = vpack.c.b16 %v253, %v245
        %v262 = vpack.c.b16 %v254, %v246
        %v263 = vpack.c.b16 %v255, %v247
        %v264 = vpack.c.b16 %v256, %v248
        %v265 = vpack.c.b16 %v257, %v249
        %v266 = vpack.c.b16 %v258, %v250
        %v267 = vpack.c.b16 %v259, %v251
        %v268 = vpack.c.b16 %v260, %v252
        %vm269 = vcmask 72704
        %v271 = vsel %vm269, %v234, 0
        %v274 = vsel %vm269, %v235, 0
        %v277 = vsel %vm269, %v236, 0
        %vm279 = vcmask 1043456
        %vm280 = vcmask 1044480
        %v281 = vsel %vm279, 4294967295, 65535
        %v282 = vsel %vm280, %v281, 0
        %v284 = vand.u32 %v261, %v282
        %v287 = vand.u32 %v262, %v282
        %v290 = vand.u32 %v263, %v282
        %v293 = vand.u32 %v264, %v282
        %v296 = vand.u32 %v265, %v282
        %v299 = vand.u32 %v266, %v282
        %v302 = vand.u32 %v267, %v282
        %v305 = vand.u32 %v268, %v282
        %307 = vmatprep.subr.bf16.mxu0 0
        %308 = vmatpush1.bf16.msra.mxu0 0
        %309 = vmatprep.subr.bf16.mxu0 0
        %310 = vmatpush1.bf16.msra.mxu0 0
        %311 = vmatprep.subr.bf16.mxu0 0
        %312 = vmatpush1.bf16.msra.mxu0 0
        %313 = vmatprep.subr.bf16.mxu0 0
        %314 = vmatpush1.bf16.msra.mxu0 0
        %315 = vmatprep.subr.bf16.mxu0 0
        %316 = vmatpush1.bf16.msra.mxu0 0
        %317 = vmatprep.subr.bf16.mxu0 0
        %318 = vmatpush1.bf16.msra.mxu0 0
        %319 = vmatprep.subr.bf16.mxu0 0
        %320 = vmatpush1.bf16.msra.mxu0 0
        %321 = vmatprep.subr.bf16.mxu0 %v287
        %322 = vmatpush1.bf16.msra.mxu0 %v284
        %323 = vmatprep.subr.bf16.mxu0 0
        %324 = vmatpush2.bf16.msra.mxu0 0
        %325 = vmatprep.subr.bf16.mxu0 0
        %326 = vmatpush2.bf16.msra.mxu0 0
        %327 = vmatprep.subr.bf16.mxu0 0
        %328 = vmatpush2.bf16.msra.mxu0 0
        %329 = vmatprep.subr.bf16.mxu0 0
        %330 = vmatpush2.bf16.msra.mxu0 0
        %331 = vmatprep.subr.bf16.mxu0 0
        %332 = vmatpush2.bf16.msra.mxu0 0
        %333 = vmatprep.subr.bf16.mxu0 0
        %334 = vmatpush2.bf16.msra.mxu0 0
        %335 = vmatprep.subr.bf16.mxu0 0
        %336 = vmatpush2.bf16.msra.mxu0 0
        %337 = vmatprep.subr.bf16.mxu0 0
        %338 = vmatpush2.bf16.msra.mxu0 0
        %339 = vmatprep.mubr.bf16.mxu0 0
        %340 = vmatmul.mubr.bf16.gmra.mxu0 %v271
        %v341 = vpop.f32.mrf.mxu0
        %v342 = vadd.f32 0.0, %v341
        %v343 = vpop.f32.mrf.mxu0
        %v344 = vadd.f32 0.0, %v343
        %v345 = vpop.f32.mrf.mxu0
        %v346 = vadd.f32 0.0, %v345
        %v347 = vpop.f32.mrf.mxu0
        %v348 = vadd.f32 0.0, %v347
        %349 = vmatprep.mubr.bf16.mxu0 0
        %350 = vmatmul.mubr.bf16.gmra.mxu0 %v274
        %v351 = vpop.f32.mrf.mxu0
        %v352 = vadd.f32 0.0, %v351
        %v353 = vpop.f32.mrf.mxu0
        %v354 = vadd.f32 0.0, %v353
        %v355 = vpop.f32.mrf.mxu0
        %v356 = vadd.f32 0.0, %v355
        %v357 = vpop.f32.mrf.mxu0
        %v358 = vadd.f32 0.0, %v357
        %359 = vmatprep.mubr.bf16.mxu0 0
        %360 = vmatmul.mubr.bf16.gmra.mxu0 %v277
        %v361 = vpop.f32.mrf.mxu0
        %v362 = vadd.f32 0.0, %v361
        %v363 = vpop.f32.mrf.mxu0
        %v364 = vadd.f32 0.0, %v363
        %v365 = vpop.f32.mrf.mxu0
        %v366 = vadd.f32 0.0, %v365
        %v367 = vpop.f32.mrf.mxu0
        %v368 = vadd.f32 0.0, %v367
        %369 = vdwg.mxu0
        %370 = vmatprep.subr.bf16.mxu0 0
        %371 = vmatpush1.bf16.msra.mxu0 0
        %372 = vmatprep.subr.bf16.mxu0 0
        %373 = vmatpush1.bf16.msra.mxu0 0
        %374 = vmatprep.subr.bf16.mxu0 0
        %375 = vmatpush1.bf16.msra.mxu0 0
        %376 = vmatprep.subr.bf16.mxu0 0
        %377 = vmatpush1.bf16.msra.mxu0 0
        %378 = vmatprep.subr.bf16.mxu0 0
        %379 = vmatpush1.bf16.msra.mxu0 0
        %380 = vmatprep.subr.bf16.mxu0 0
        %381 = vmatpush1.bf16.msra.mxu0 0
        %382 = vmatprep.subr.bf16.mxu0 0
        %383 = vmatpush1.bf16.msra.mxu0 0
        %384 = vmatprep.subr.bf16.mxu0 %v293
        %385 = vmatpush1.bf16.msra.mxu0 %v290
        %386 = vmatprep.subr.bf16.mxu0 0
        %387 = vmatpush2.bf16.msra.mxu0 0
        %388 = vmatprep.subr.bf16.mxu0 0
        %389 = vmatpush2.bf16.msra.mxu0 0
        %390 = vmatprep.subr.bf16.mxu0 0
        %391 = vmatpush2.bf16.msra.mxu0 0
        %392 = vmatprep.subr.bf16.mxu0 0
        %393 = vmatpush2.bf16.msra.mxu0 0
        %394 = vmatprep.subr.bf16.mxu0 0
        %395 = vmatpush2.bf16.msra.mxu0 0
        %396 = vmatprep.subr.bf16.mxu0 0
        %397 = vmatpush2.bf16.msra.mxu0 0
        %398 = vmatprep.subr.bf16.mxu0 0
        %399 = vmatpush2.bf16.msra.mxu0 0
        %400 = vmatprep.subr.bf16.mxu0 0
        %401 = vmatpush2.bf16.msra.mxu0 0
        %402 = vmatprep.mubr.bf16.mxu0 0
        %403 = vmatmul.mubr.bf16.gmra.mxu0 %v271
        %v404 = vpop.f32.mrf.mxu0
        %v405 = vadd.f32 0.0, %v404
        %v406 = vpop.f32.mrf.mxu0
        %v407 = vadd.f32 0.0, %v406
        %v408 = vpop.f32.mrf.mxu0
        %v409 = vadd.f32 0.0, %v408
        %v410 = vpop.f32.mrf.mxu0
        %v411 = vadd.f32 0.0, %v410
        %412 = vmatprep.mubr.bf16.mxu0 0
        %413 = vmatmul.mubr.bf16.gmra.mxu0 %v274
        %v414 = vpop.f32.mrf.mxu0
        %v415 = vadd.f32 0.0, %v414
        %v416 = vpop.f32.mrf.mxu0
        %v417 = vadd.f32 0.0, %v416
        %v418 = vpop.f32.mrf.mxu0
        %v419 = vadd.f32 0.0, %v418
        %v420 = vpop.f32.mrf.mxu0
        %v421 = vadd.f32 0.0, %v420
        %422 = vmatprep.mubr.bf16.mxu0 0
        %423 = vmatmul.mubr.bf16.gmra.mxu0 %v277
        %v424 = vpop.f32.mrf.mxu0
        %v425 = vadd.f32 0.0, %v424
        %v426 = vpop.f32.mrf.mxu0
        %v427 = vadd.f32 0.0, %v426
        %v428 = vpop.f32.mrf.mxu0
        %v429 = vadd.f32 0.0, %v428
        %v430 = vpop.f32.mrf.mxu0
        %v431 = vadd.f32 0.0, %v430
        %432 = vdwg.mxu0
        %433 = vmatprep.subr.bf16.mxu0 0
        %434 = vmatpush1.bf16.msra.mxu0 0
        %435 = vmatprep.subr.bf16.mxu0 0
        %436 = vmatpush1.bf16.msra.mxu0 0
        %437 = vmatprep.subr.bf16.mxu0 0
        %438 = vmatpush1.bf16.msra.mxu0 0
        %439 = vmatprep.subr.bf16.mxu0 0
        %440 = vmatpush1.bf16.msra.mxu0 0
        %441 = vmatprep.subr.bf16.mxu0 0
        %442 = vmatpush1.bf16.msra.mxu0 0
        %443 = vmatprep.subr.bf16.mxu0 0
        %444 = vmatpush1.bf16.msra.mxu0 0
        %445 = vmatprep.subr.bf16.mxu0 0
        %446 = vmatpush1.bf16.msra.mxu0 0
        %447 = vmatprep.subr.bf16.mxu0 %v299
        %448 = vmatpush1.bf16.msra.mxu0 %v296
        %449 = vmatprep.subr.bf16.mxu0 0
        %450 = vmatpush2.bf16.msra.mxu0 0
        %451 = vmatprep.subr.bf16.mxu0 0
        %452 = vmatpush2.bf16.msra.mxu0 0
        %453 = vmatprep.subr.bf16.mxu0 0
        %454 = vmatpush2.bf16.msra.mxu0 0
        %455 = vmatprep.subr.bf16.mxu0 0
        %456 = vmatpush2.bf16.msra.mxu0 0
        %457 = vmatprep.subr.bf16.mxu0 0
        %458 = vmatpush2.bf16.msra.mxu0 0
        %459 = vmatprep.subr.bf16.mxu0 0
        %460 = vmatpush2.bf16.msra.mxu0 0
        %461 = vmatprep.subr.bf16.mxu0 0
        %462 = vmatpush2.bf16.msra.mxu0 0
        %463 = vmatprep.subr.bf16.mxu0 0
        %464 = vmatpush2.bf16.msra.mxu0 0
        %465 = vmatprep.mubr.bf16.mxu0 0
        %466 = vmatmul.mubr.bf16.gmra.mxu0 %v271
        %v467 = vpop.f32.mrf.mxu0
        %v468 = vadd.f32 0.0, %v467
        %v469 = vpop.f32.mrf.mxu0
        %v470 = vadd.f32 0.0, %v469
        %v471 = vpop.f32.mrf.mxu0
        %v472 = vadd.f32 0.0, %v471
        %v473 = vpop.f32.mrf.mxu0
        %v474 = vadd.f32 0.0, %v473
        %475 = vmatprep.mubr.bf16.mxu0 0
        %476 = vmatmul.mubr.bf16.gmra.mxu0 %v274
        %v477 = vpop.f32.mrf.mxu0
        %v478 = vadd.f32 0.0, %v477
        %v479 = vpop.f32.mrf.mxu0
        %v480 = vadd.f32 0.0, %v479
        %v481 = vpop.f32.mrf.mxu0
        %v482 = vadd.f32 0.0, %v481
        %v483 = vpop.f32.mrf.mxu0
        %v484 = vadd.f32 0.0, %v483
        %485 = vmatprep.mubr.bf16.mxu0 0
        %486 = vmatmul.mubr.bf16.gmra.mxu0 %v277
        %v487 = vpop.f32.mrf.mxu0
        %v488 = vadd.f32 0.0, %v487
        %v489 = vpop.f32.mrf.mxu0
        %v490 = vadd.f32 0.0, %v489
        %v491 = vpop.f32.mrf.mxu0
        %v492 = vadd.f32 0.0, %v491
        %v493 = vpop.f32.mrf.mxu0
        %v494 = vadd.f32 0.0, %v493
        %495 = vdwg.mxu0
        %496 = vmatprep.subr.bf16.mxu0 0
        %497 = vmatpush1.bf16.msra.mxu0 0
        %498 = vmatprep.subr.bf16.mxu0 0
        %499 = vmatpush1.bf16.msra.mxu0 0
        %500 = vmatprep.subr.bf16.mxu0 0
        %501 = vmatpush1.bf16.msra.mxu0 0
        %502 = vmatprep.subr.bf16.mxu0 0
        %503 = vmatpush1.bf16.msra.mxu0 0
        %504 = vmatprep.subr.bf16.mxu0 0
        %505 = vmatpush1.bf16.msra.mxu0 0
        %506 = vmatprep.subr.bf16.mxu0 0
        %507 = vmatpush1.bf16.msra.mxu0 0
        %508 = vmatprep.subr.bf16.mxu0 0
        %509 = vmatpush1.bf16.msra.mxu0 0
        %510 = vmatprep.subr.bf16.mxu0 %v305
        %511 = vmatpush1.bf16.msra.mxu0 %v302
        %512 = vmatprep.subr.bf16.mxu0 0
        %513 = vmatpush2.bf16.msra.mxu0 0
        %514 = vmatprep.subr.bf16.mxu0 0
        %515 = vmatpush2.bf16.msra.mxu0 0
        %516 = vmatprep.subr.bf16.mxu0 0
        %517 = vmatpush2.bf16.msra.mxu0 0
        %518 = vmatprep.subr.bf16.mxu0 0
        %519 = vmatpush2.bf16.msra.mxu0 0
        %520 = vmatprep.subr.bf16.mxu0 0
        %521 = vmatpush2.bf16.msra.mxu0 0
        %522 = vmatprep.subr.bf16.mxu0 0
        %523 = vmatpush2.bf16.msra.mxu0 0
        %524 = vmatprep.subr.bf16.mxu0 0
        %525 = vmatpush2.bf16.msra.mxu0 0
        %526 = vmatprep.subr.bf16.mxu0 0
        %527 = vmatpush2.bf16.msra.mxu0 0
        %528 = vmatprep.mubr.bf16.mxu0 0
        %529 = vmatmul.mubr.bf16.gmra.mxu0 %v271
        %v530 = vpop.f32.mrf.mxu0
        %v531 = vadd.f32 0.0, %v530
        %v532 = vpop.f32.mrf.mxu0
        %v533 = vadd.f32 0.0, %v532
        %v534 = vpop.f32.mrf.mxu0
        %v535 = vadd.f32 0.0, %v534
        %v536 = vpop.f32.mrf.mxu0
        %v537 = vadd.f32 0.0, %v536
        %538 = vmatprep.mubr.bf16.mxu0 0
        %539 = vmatmul.mubr.bf16.gmra.mxu0 %v274
        %v540 = vpop.f32.mrf.mxu0
        %v541 = vadd.f32 0.0, %v540
        %v542 = vpop.f32.mrf.mxu0
        %v543 = vadd.f32 0.0, %v542
        %v544 = vpop.f32.mrf.mxu0
        %v545 = vadd.f32 0.0, %v544
        %v546 = vpop.f32.mrf.mxu0
        %v547 = vadd.f32 0.0, %v546
        %548 = vmatprep.mubr.bf16.mxu0 0
        %549 = vmatmul.mubr.bf16.gmra.mxu0 %v277
        %v550 = vpop.f32.mrf.mxu0
        %v551 = vadd.f32 0.0, %v550
        %v552 = vpop.f32.mrf.mxu0
        %v553 = vadd.f32 0.0, %v552
        %v554 = vpop.f32.mrf.mxu0
        %v555 = vadd.f32 0.0, %v554
        %v556 = vpop.f32.mrf.mxu0
        %v557 = vadd.f32 0.0, %v556
        %558 = vdwg.mxu0
        %v559 = vxor.u32 %v342, 2147483648
        %v560 = vxor.u32 %v344, 2147483648
        %v561 = vxor.u32 %v405, 2147483648
        %v562 = vxor.u32 %v407, 2147483648
        %v563 = vxor.u32 %v468, 2147483648
        %v564 = vxor.u32 %v470, 2147483648
        %v565 = vxor.u32 %v531, 2147483648
        %v566 = vxor.u32 %v533, 2147483648
        %v567 = vxor.u32 %v346, 2147483648
        %v568 = vxor.u32 %v348, 2147483648
        %v569 = vxor.u32 %v409, 2147483648
        %v570 = vxor.u32 %v411, 2147483648
        %v571 = vxor.u32 %v472, 2147483648
        %v572 = vxor.u32 %v474, 2147483648
        %v573 = vxor.u32 %v535, 2147483648
        %v574 = vxor.u32 %v537, 2147483648
        %v575 = vxor.u32 %v352, 2147483648
        %v576 = vxor.u32 %v354, 2147483648
        %v577 = vxor.u32 %v415, 2147483648
        %v578 = vxor.u32 %v417, 2147483648
        %v579 = vxor.u32 %v478, 2147483648
        %v580 = vxor.u32 %v480, 2147483648
        %v581 = vxor.u32 %v541, 2147483648
        %v582 = vxor.u32 %v543, 2147483648
        %v583 = vxor.u32 %v356, 2147483648
        %v584 = vxor.u32 %v358, 2147483648
        %v585 = vxor.u32 %v419, 2147483648
        %v586 = vxor.u32 %v421, 2147483648
        %v587 = vxor.u32 %v482, 2147483648
        %v588 = vxor.u32 %v484, 2147483648
        %v589 = vxor.u32 %v545, 2147483648
        %v590 = vxor.u32 %v547, 2147483648
        %v591 = vxor.u32 %v362, 2147483648
        %v592 = vxor.u32 %v364, 2147483648
        %v593 = vxor.u32 %v425, 2147483648
        %v594 = vxor.u32 %v427, 2147483648
        %v595 = vxor.u32 %v488, 2147483648
        %v596 = vxor.u32 %v490, 2147483648
        %v597 = vxor.u32 %v551, 2147483648
        %v598 = vxor.u32 %v553, 2147483648
        %v599 = vxor.u32 %v366, 2147483648
        %v600 = vxor.u32 %v368, 2147483648
        %v601 = vxor.u32 %v429, 2147483648
        %v602 = vxor.u32 %v431, 2147483648
        %v603 = vxor.u32 %v492, 2147483648
        %v604 = vxor.u32 %v494, 2147483648
        %v605 = vxor.u32 %v555, 2147483648
        %v606 = vxor.u32 %v557, 2147483648
        %v607 = vmul.f32 %v559, 1.442695
        %v608 = vpow.pop %v607
        %v609 = vmul.f32 %v560, 1.442695
        %v610 = vpow.pop %v609
        %v611 = vmul.f32 %v561, 1.442695
        %v612 = vpow.pop %v611
        %v613 = vmul.f32 %v562, 1.442695
        %v614 = vpow.pop %v613
        %v615 = vmul.f32 %v563, 1.442695
        %v616 = vpow.pop %v615
        %v617 = vmul.f32 %v564, 1.442695
        %v618 = vpow.pop %v617
        %v619 = vmul.f32 %v565, 1.442695
        %v620 = vpow.pop %v619
        %v621 = vmul.f32 %v566, 1.442695
        %v622 = vpow.pop %v621
        %v623 = vmul.f32 %v567, 1.442695
        %v624 = vpow.pop %v623
        %v625 = vmul.f32 %v568, 1.442695
        %v626 = vpow.pop %v625
        %v627 = vmul.f32 %v569, 1.442695
        %v628 = vpow.pop %v627
        %v629 = vmul.f32 %v570, 1.442695
        %v630 = vpow.pop %v629
        %v631 = vmul.f32 %v571, 1.442695
        %v632 = vpow.pop %v631
        %v633 = vmul.f32 %v572, 1.442695
        %v634 = vpow.pop %v633
        %v635 = vmul.f32 %v573, 1.442695
        %v636 = vpow.pop %v635
        %v637 = vmul.f32 %v574, 1.442695
        %v638 = vpow.pop %v637
        %v639 = vmul.f32 %v575, 1.442695
        %v640 = vpow.pop %v639
        %v641 = vmul.f32 %v576, 1.442695
        %v642 = vpow.pop %v641
        %v643 = vmul.f32 %v577, 1.442695
        %v644 = vpow.pop %v643
        %v645 = vmul.f32 %v578, 1.442695
        %v646 = vpow.pop %v645
        %v647 = vmul.f32 %v579, 1.442695
        %v648 = vpow.pop %v647
        %v649 = vmul.f32 %v580, 1.442695
        %v650 = vpow.pop %v649
        %v651 = vmul.f32 %v581, 1.442695
        %v652 = vpow.pop %v651
        %v653 = vmul.f32 %v582, 1.442695
        %v654 = vpow.pop %v653
        %v655 = vmul.f32 %v583, 1.442695
        %v656 = vpow.pop %v655
        %v657 = vmul.f32 %v584, 1.442695
        %v658 = vpow.pop %v657
        %v659 = vmul.f32 %v585, 1.442695
        %v660 = vpow.pop %v659
        %v661 = vmul.f32 %v586, 1.442695
        %v662 = vpow.pop %v661
        %v663 = vmul.f32 %v587, 1.442695
        %v664 = vpow.pop %v663
        %v665 = vmul.f32 %v588, 1.442695
        %v666 = vpow.pop %v665
        %v667 = vmul.f32 %v589, 1.442695
        %v668 = vpow.pop %v667
        %v669 = vmul.f32 %v590, 1.442695
        %v670 = vpow.pop %v669
        %v671 = vmul.f32 %v591, 1.442695
        %v672 = vpow.pop %v671
        %v673 = vmul.f32 %v592, 1.442695
        %v674 = vpow.pop %v673
        %v675 = vmul.f32 %v593, 1.442695
        %v676 = vpow.pop %v675
        %v677 = vmul.f32 %v594, 1.442695
        %v678 = vpow.pop %v677
        %v679 = vmul.f32 %v595, 1.442695
        %v680 = vpow.pop %v679
        %v681 = vmul.f32 %v596, 1.442695
        %v682 = vpow.pop %v681
        %v683 = vmul.f32 %v597, 1.442695
        %v684 = vpow.pop %v683
        %v685 = vmul.f32 %v598, 1.442695
        %v686 = vpow.pop %v685
        %v687 = vmul.f32 %v599, 1.442695
        %v688 = vpow.pop %v687
        %v689 = vmul.f32 %v600, 1.442695
        %v690 = vpow.pop %v689
        %v691 = vmul.f32 %v601, 1.442695
        %v692 = vpow.pop %v691
        %v693 = vmul.f32 %v602, 1.442695
        %v694 = vpow.pop %v693
        %v695 = vmul.f32 %v603, 1.442695
        %v696 = vpow.pop %v695
        %v697 = vmul.f32 %v604, 1.442695
        %v698 = vpow.pop %v697
        %v699 = vmul.f32 %v605, 1.442695
        %v700 = vpow.pop %v699
        %v701 = vmul.f32 %v606, 1.442695
        %v702 = vpow.pop %v701
        %v703 = vadd.f32 %v608, 1.0
        %v704 = vadd.f32 %v610, 1.0
        %v705 = vadd.f32 %v612, 1.0
        %v706 = vadd.f32 %v614, 1.0
        %v707 = vadd.f32 %v616, 1.0
        %v708 = vadd.f32 %v618, 1.0
        %v709 = vadd.f32 %v620, 1.0
        %v710 = vadd.f32 %v622, 1.0
        %v711 = vadd.f32 %v624, 1.0
        %v712 = vadd.f32 %v626, 1.0
        %v713 = vadd.f32 %v628, 1.0
        %v714 = vadd.f32 %v630, 1.0
        %v715 = vadd.f32 %v632, 1.0
        %v716 = vadd.f32 %v634, 1.0
        %v717 = vadd.f32 %v636, 1.0
        %v718 = vadd.f32 %v638, 1.0
        %v719 = vadd.f32 %v640, 1.0
        %v720 = vadd.f32 %v642, 1.0
        %v721 = vadd.f32 %v644, 1.0
        %v722 = vadd.f32 %v646, 1.0
        %v723 = vadd.f32 %v648, 1.0
        %v724 = vadd.f32 %v650, 1.0
        %v725 = vadd.f32 %v652, 1.0
        %v726 = vadd.f32 %v654, 1.0
        %v727 = vadd.f32 %v656, 1.0
        %v728 = vadd.f32 %v658, 1.0
        %v729 = vadd.f32 %v660, 1.0
        %v730 = vadd.f32 %v662, 1.0
        %v731 = vadd.f32 %v664, 1.0
        %v732 = vadd.f32 %v666, 1.0
        %v733 = vadd.f32 %v668, 1.0
        %v734 = vadd.f32 %v670, 1.0
        %v735 = vadd.f32 %v672, 1.0
        %v736 = vadd.f32 %v674, 1.0
        %v737 = vadd.f32 %v676, 1.0
        %v738 = vadd.f32 %v678, 1.0
        %v739 = vadd.f32 %v680, 1.0
        %v740 = vadd.f32 %v682, 1.0
        %v741 = vadd.f32 %v684, 1.0
        %v742 = vadd.f32 %v686, 1.0
        %v743 = vadd.f32 %v688, 1.0
        %v744 = vadd.f32 %v690, 1.0
        %v745 = vadd.f32 %v692, 1.0
        %v746 = vadd.f32 %v694, 1.0
        %v747 = vadd.f32 %v696, 1.0
        %v748 = vadd.f32 %v698, 1.0
        %v749 = vadd.f32 %v700, 1.0
        %v750 = vadd.f32 %v702, 1.0
        %v751 = vrcp.pop %v703
        %v752 = vmul.f32 1.0, %v751
        %v753 = vrcp.pop %v704
        %v754 = vmul.f32 1.0, %v753
        %v755 = vrcp.pop %v705
        %v756 = vmul.f32 1.0, %v755
        %v757 = vrcp.pop %v706
        %v758 = vmul.f32 1.0, %v757
        %v759 = vrcp.pop %v707
        %v760 = vmul.f32 1.0, %v759
        %v761 = vrcp.pop %v708
        %v762 = vmul.f32 1.0, %v761
        %v763 = vrcp.pop %v709
        %v764 = vmul.f32 1.0, %v763
        %v765 = vrcp.pop %v710
        %v766 = vmul.f32 1.0, %v765
        %v767 = vrcp.pop %v711
        %v768 = vmul.f32 1.0, %v767
        %v769 = vrcp.pop %v712
        %v770 = vmul.f32 1.0, %v769
        %v771 = vrcp.pop %v713
        %v772 = vmul.f32 1.0, %v771
        %v773 = vrcp.pop %v714
        %v774 = vmul.f32 1.0, %v773
        %v775 = vrcp.pop %v715
        %v776 = vmul.f32 1.0, %v775
        %v777 = vrcp.pop %v716
        %v778 = vmul.f32 1.0, %v777
        %v779 = vrcp.pop %v717
        %v780 = vmul.f32 1.0, %v779
        %v781 = vrcp.pop %v718
        %v782 = vmul.f32 1.0, %v781
        %v783 = vrcp.pop %v719
        %v784 = vmul.f32 1.0, %v783
        %v785 = vrcp.pop %v720
        %v786 = vmul.f32 1.0, %v785
        %v787 = vrcp.pop %v721
        %v788 = vmul.f32 1.0, %v787
        %v789 = vrcp.pop %v722
        %v790 = vmul.f32 1.0, %v789
        %v791 = vrcp.pop %v723
        %v792 = vmul.f32 1.0, %v791
        %v793 = vrcp.pop %v724
        %v794 = vmul.f32 1.0, %v793
        %v795 = vrcp.pop %v725
        %v796 = vmul.f32 1.0, %v795
        %v797 = vrcp.pop %v726
        %v798 = vmul.f32 1.0, %v797
        %v799 = vrcp.pop %v727
        %v800 = vmul.f32 1.0, %v799
        %v801 = vrcp.pop %v728
        %v802 = vmul.f32 1.0, %v801
        %v803 = vrcp.pop %v729
        %v804 = vmul.f32 1.0, %v803
        %v805 = vrcp.pop %v730
        %v806 = vmul.f32 1.0, %v805
        %v807 = vrcp.pop %v731
        %v808 = vmul.f32 1.0, %v807
        %v809 = vrcp.pop %v732
        %v810 = vmul.f32 1.0, %v809
        %v811 = vrcp.pop %v733
        %v812 = vmul.f32 1.0, %v811
        %v813 = vrcp.pop %v734
        %v814 = vmul.f32 1.0, %v813
        %v815 = vrcp.pop %v735
        %v816 = vmul.f32 1.0, %v815
        %v817 = vrcp.pop %v736
        %v818 = vmul.f32 1.0, %v817
        %v819 = vrcp.pop %v737
        %v820 = vmul.f32 1.0, %v819
        %v821 = vrcp.pop %v738
        %v822 = vmul.f32 1.0, %v821
        %v823 = vrcp.pop %v739
        %v824 = vmul.f32 1.0, %v823
        %v825 = vrcp.pop %v740
        %v826 = vmul.f32 1.0, %v825
        %v827 = vrcp.pop %v741
        %v828 = vmul.f32 1.0, %v827
        %v829 = vrcp.pop %v742
        %v830 = vmul.f32 1.0, %v829
        %v831 = vrcp.pop %v743
        %v832 = vmul.f32 1.0, %v831
        %v833 = vrcp.pop %v744
        %v834 = vmul.f32 1.0, %v833
        %v835 = vrcp.pop %v745
        %v836 = vmul.f32 1.0, %v835
        %v837 = vrcp.pop %v746
        %v838 = vmul.f32 1.0, %v837
        %v839 = vrcp.pop %v747
        %v840 = vmul.f32 1.0, %v839
        %v841 = vrcp.pop %v748
        %v842 = vmul.f32 1.0, %v841
        %v843 = vrcp.pop %v749
        %v844 = vmul.f32 1.0, %v843
        %v845 = vrcp.pop %v750
        %v846 = vmul.f32 1.0, %v845
        %v847 = vmul.f32 %v342, %v752
        %v848 = vmul.f32 %v344, %v754
        %v849 = vmul.f32 %v405, %v756
        %v850 = vmul.f32 %v407, %v758
        %v851 = vmul.f32 %v468, %v760
        %v852 = vmul.f32 %v470, %v762
        %v853 = vmul.f32 %v531, %v764
        %v854 = vmul.f32 %v533, %v766
        %v855 = vmul.f32 %v346, %v768
        %v856 = vmul.f32 %v348, %v770
        %v857 = vmul.f32 %v409, %v772
        %v858 = vmul.f32 %v411, %v774
        %v859 = vmul.f32 %v472, %v776
        %v860 = vmul.f32 %v474, %v778
        %v861 = vmul.f32 %v535, %v780
        %v862 = vmul.f32 %v537, %v782
        %v863 = vmul.f32 %v352, %v784
        %v864 = vmul.f32 %v354, %v786
        %v865 = vmul.f32 %v415, %v788
        %v866 = vmul.f32 %v417, %v790
        %v867 = vmul.f32 %v478, %v792
        %v868 = vmul.f32 %v480, %v794
        %v869 = vmul.f32 %v541, %v796
        %v870 = vmul.f32 %v543, %v798
        %v871 = vmul.f32 %v356, %v800
        %v872 = vmul.f32 %v358, %v802
        %v873 = vmul.f32 %v419, %v804
        %v874 = vmul.f32 %v421, %v806
        %v875 = vmul.f32 %v482, %v808
        %v876 = vmul.f32 %v484, %v810
        %v877 = vmul.f32 %v545, %v812
        %v878 = vmul.f32 %v547, %v814
        %v879 = vmul.f32 %v362, %v816
        %v880 = vmul.f32 %v364, %v818
        %v881 = vmul.f32 %v425, %v820
        %v882 = vmul.f32 %v427, %v822
        %v883 = vmul.f32 %v488, %v824
        %v884 = vmul.f32 %v490, %v826
        %v885 = vmul.f32 %v551, %v828
        %v886 = vmul.f32 %v553, %v830
        %v887 = vmul.f32 %v366, %v832
        %v888 = vmul.f32 %v368, %v834
        %v889 = vmul.f32 %v429, %v836
        %v890 = vmul.f32 %v431, %v838
        %v891 = vmul.f32 %v492, %v840
        %v892 = vmul.f32 %v494, %v842
        %v893 = vmul.f32 %v555, %v844
        %v894 = vmul.f32 %v557, %v846
        %v895 = vld [vmem:[%s2] sm:$0xf]
        %v896 = vpack.c.bf16 %v855, %v847
        %v897 = vpack.c.bf16 %v856, %v848
        %v898 = vpack.c.bf16 %v857, %v849
        %v899 = vpack.c.bf16 %v858, %v850
        %v900 = vpack.c.bf16 %v859, %v851
        %v901 = vpack.c.bf16 %v860, %v852
        %v902 = vpack.c.bf16 %v861, %v853
        %v903 = vpack.c.bf16 %v862, %v854
        %v904 = vpack.c.bf16 %v871, %v863
        %v905 = vpack.c.bf16 %v872, %v864
        %v906 = vpack.c.bf16 %v873, %v865
        %v907 = vpack.c.bf16 %v874, %v866
        %v908 = vpack.c.bf16 %v875, %v867
        %v909 = vpack.c.bf16 %v876, %v868
        %v910 = vpack.c.bf16 %v877, %v869
        %v911 = vpack.c.bf16 %v878, %v870
        %v912 = vpack.c.bf16 %v887, %v879
        %v913 = vpack.c.bf16 %v888, %v880
        %v914 = vpack.c.bf16 %v889, %v881
        %v915 = vpack.c.bf16 %v890, %v882
        %v916 = vpack.c.bf16 %v891, %v883
        %v917 = vpack.c.bf16 %v892, %v884
        %v918 = vpack.c.bf16 %v893, %v885
        %v919 = vpack.c.bf16 %v894, %v886
        %vm920 = vcmask 343040
        %v922 = vsel %vm920, %v895, 0
        %v925 = vsel %vm280, %v912, 0
        %v928 = vsel %vm280, %v913, 0
        %v931 = vsel %vm280, %v914, 0
        %v934 = vsel %vm280, %v915, 0
        %v937 = vsel %vm280, %v916, 0
        %v940 = vsel %vm280, %v917, 0
        %v943 = vsel %vm280, %v918, 0
        %v946 = vsel %vm280, %v919, 0
        %948 = vmatprep.subr.bf16.mxu0 0
        %949 = vmatpush1.bf16.msra.mxu0 0
        %950 = vmatprep.subr.bf16.mxu0 0
        %951 = vmatpush1.bf16.msra.mxu0 0
        %952 = vmatprep.subr.bf16.mxu0 0
        %953 = vmatpush1.bf16.msra.mxu0 0
        %954 = vmatprep.subr.bf16.mxu0 0
        %955 = vmatpush1.bf16.msra.mxu0 0
        %956 = vmatprep.subr.bf16.mxu0 0
        %957 = vmatpush1.bf16.msra.mxu0 0
        %958 = vmatprep.subr.bf16.mxu0 %v928
        %959 = vmatpush1.bf16.msra.mxu0 %v925
        %960 = vmatprep.subr.bf16.mxu0 %v905
        %961 = vmatpush1.bf16.msra.mxu0 %v904
        %962 = vmatprep.subr.bf16.mxu0 %v897
        %963 = vmatpush1.bf16.msra.mxu0 %v896
        %964 = vmatprep.subr.bf16.mxu0 0
        %965 = vmatpush2.bf16.msra.mxu0 0
        %966 = vmatprep.subr.bf16.mxu0 0
        %967 = vmatpush2.bf16.msra.mxu0 0
        %968 = vmatprep.subr.bf16.mxu0 0
        %969 = vmatpush2.bf16.msra.mxu0 0
        %970 = vmatprep.subr.bf16.mxu0 0
        %971 = vmatpush2.bf16.msra.mxu0 0
        %972 = vmatprep.subr.bf16.mxu0 0
        %973 = vmatpush2.bf16.msra.mxu0 0
        %974 = vmatprep.subr.bf16.mxu0 0
        %975 = vmatpush2.bf16.msra.mxu0 0
        %976 = vmatprep.subr.bf16.mxu0 0
        %977 = vmatpush2.bf16.msra.mxu0 0
        %978 = vmatprep.subr.bf16.mxu0 0
        %979 = vmatpush2.bf16.msra.mxu0 0
        %980 = vmatprep.mubr.bf16.mxu0 0
        %981 = vmatmul.mubr.bf16.gmra.mxu0 %v922
        %v982 = vpop.f32.mrf.mxu0
        %v983 = vadd.f32 0.0, %v982
        %v984 = vpop.f32.mrf.mxu0
        %v985 = vadd.f32 0.0, %v984
        %v986 = vpop.f32.mrf.mxu0
        %v987 = vpop.f32.mrf.mxu0
        %988 = vdwg.mxu0
        %989 = vmatprep.subr.bf16.mxu0 0
        %990 = vmatpush1.bf16.msra.mxu0 0
        %991 = vmatprep.subr.bf16.mxu0 0
        %992 = vmatpush1.bf16.msra.mxu0 0
        %993 = vmatprep.subr.bf16.mxu0 0
        %994 = vmatpush1.bf16.msra.mxu0 0
        %995 = vmatprep.subr.bf16.mxu0 0
        %996 = vmatpush1.bf16.msra.mxu0 0
        %997 = vmatprep.subr.bf16.mxu0 0
        %998 = vmatpush1.bf16.msra.mxu0 0
        %999 = vmatprep.subr.bf16.mxu0 %v934
        %1000 = vmatpush1.bf16.msra.mxu0 %v931
        %1001 = vmatprep.subr.bf16.mxu0 %v907
        %1002 = vmatpush1.bf16.msra.mxu0 %v906
        %1003 = vmatprep.subr.bf16.mxu0 %v899
        %1004 = vmatpush1.bf16.msra.mxu0 %v898
        %1005 = vmatprep.subr.bf16.mxu0 0
        %1006 = vmatpush2.bf16.msra.mxu0 0
        %1007 = vmatprep.subr.bf16.mxu0 0
        %1008 = vmatpush2.bf16.msra.mxu0 0
        %1009 = vmatprep.subr.bf16.mxu0 0
        %1010 = vmatpush2.bf16.msra.mxu0 0
        %1011 = vmatprep.subr.bf16.mxu0 0
        %1012 = vmatpush2.bf16.msra.mxu0 0
        %1013 = vmatprep.subr.bf16.mxu0 0
        %1014 = vmatpush2.bf16.msra.mxu0 0
        %1015 = vmatprep.subr.bf16.mxu0 0
        %1016 = vmatpush2.bf16.msra.mxu0 0
        %1017 = vmatprep.subr.bf16.mxu0 0
        %1018 = vmatpush2.bf16.msra.mxu0 0
        %1019 = vmatprep.subr.bf16.mxu0 0
        %1020 = vmatpush2.bf16.msra.mxu0 0
        %1021 = vmatprep.mubr.bf16.mxu0 0
        %1022 = vmatmul.mubr.bf16.gmra.mxu0 %v922
        %v1023 = vpop.f32.mrf.mxu0
        %v1024 = vadd.f32 0.0, %v1023
        %v1025 = vpop.f32.mrf.mxu0
        %v1026 = vadd.f32 0.0, %v1025
        %v1027 = vpop.f32.mrf.mxu0
        %v1028 = vpop.f32.mrf.mxu0
        %1029 = vdwg.mxu0
        %1030 = vmatprep.subr.bf16.mxu0 0
        %1031 = vmatpush1.bf16.msra.mxu0 0
        %1032 = vmatprep.subr.bf16.mxu0 0
        %1033 = vmatpush1.bf16.msra.mxu0 0
        %1034 = vmatprep.subr.bf16.mxu0 0
        %1035 = vmatpush1.bf16.msra.mxu0 0
        %1036 = vmatprep.subr.bf16.mxu0 0
        %1037 = vmatpush1.bf16.msra.mxu0 0
        %1038 = vmatprep.subr.bf16.mxu0 0
        %1039 = vmatpush1.bf16.msra.mxu0 0
        %1040 = vmatprep.subr.bf16.mxu0 %v940
        %1041 = vmatpush1.bf16.msra.mxu0 %v937
        %1042 = vmatprep.subr.bf16.mxu0 %v909
        %1043 = vmatpush1.bf16.msra.mxu0 %v908
        %1044 = vmatprep.subr.bf16.mxu0 %v901
        %1045 = vmatpush1.bf16.msra.mxu0 %v900
        %1046 = vmatprep.subr.bf16.mxu0 0
        %1047 = vmatpush2.bf16.msra.mxu0 0
        %1048 = vmatprep.subr.bf16.mxu0 0
        %1049 = vmatpush2.bf16.msra.mxu0 0
        %1050 = vmatprep.subr.bf16.mxu0 0
        %1051 = vmatpush2.bf16.msra.mxu0 0
        %1052 = vmatprep.subr.bf16.mxu0 0
        %1053 = vmatpush2.bf16.msra.mxu0 0
        %1054 = vmatprep.subr.bf16.mxu0 0
        %1055 = vmatpush2.bf16.msra.mxu0 0
        %1056 = vmatprep.subr.bf16.mxu0 0
        %1057 = vmatpush2.bf16.msra.mxu0 0
        %1058 = vmatprep.subr.bf16.mxu0 0
        %1059 = vmatpush2.bf16.msra.mxu0 0
        %1060 = vmatprep.subr.bf16.mxu0 0
        %1061 = vmatpush2.bf16.msra.mxu0 0
        %1062 = vmatprep.mubr.bf16.mxu0 0
        %1063 = vmatmul.mubr.bf16.gmra.mxu0 %v922
        %v1064 = vpop.f32.mrf.mxu0
        %v1065 = vadd.f32 0.0, %v1064
        %v1066 = vpop.f32.mrf.mxu0
        %v1067 = vadd.f32 0.0, %v1066
        %v1068 = vpop.f32.mrf.mxu0
        %v1069 = vpop.f32.mrf.mxu0
        %1070 = vdwg.mxu0
        %1071 = vmatprep.subr.bf16.mxu0 0
        %1072 = vmatpush1.bf16.msra.mxu0 0
        %1073 = vmatprep.subr.bf16.mxu0 0
        %1074 = vmatpush1.bf16.msra.mxu0 0
        %1075 = vmatprep.subr.bf16.mxu0 0
        %1076 = vmatpush1.bf16.msra.mxu0 0
        %1077 = vmatprep.subr.bf16.mxu0 0
        %1078 = vmatpush1.bf16.msra.mxu0 0
        %1079 = vmatprep.subr.bf16.mxu0 0
        %1080 = vmatpush1.bf16.msra.mxu0 0
        %1081 = vmatprep.subr.bf16.mxu0 %v946
        %1082 = vmatpush1.bf16.msra.mxu0 %v943
        %1083 = vmatprep.subr.bf16.mxu0 %v911
        %1084 = vmatpush1.bf16.msra.mxu0 %v910
        %1085 = vmatprep.subr.bf16.mxu0 %v903
        %1086 = vmatpush1.bf16.msra.mxu0 %v902
        %1087 = vmatprep.subr.bf16.mxu0 0
        %1088 = vmatpush2.bf16.msra.mxu0 0
        %1089 = vmatprep.subr.bf16.mxu0 0
        %1090 = vmatpush2.bf16.msra.mxu0 0
        %1091 = vmatprep.subr.bf16.mxu0 0
        %1092 = vmatpush2.bf16.msra.mxu0 0
        %1093 = vmatprep.subr.bf16.mxu0 0
        %1094 = vmatpush2.bf16.msra.mxu0 0
        %1095 = vmatprep.subr.bf16.mxu0 0
        %1096 = vmatpush2.bf16.msra.mxu0 0
        %1097 = vmatprep.subr.bf16.mxu0 0
        %1098 = vmatpush2.bf16.msra.mxu0 0
        %1099 = vmatprep.subr.bf16.mxu0 0
        %1100 = vmatpush2.bf16.msra.mxu0 0
        %1101 = vmatprep.subr.bf16.mxu0 0
        %1102 = vmatpush2.bf16.msra.mxu0 0
        %1103 = vmatprep.mubr.bf16.mxu0 0
        %1104 = vmatmul.mubr.bf16.gmra.mxu0 %v922
        %v1105 = vpop.f32.mrf.mxu0
        %v1106 = vadd.f32 0.0, %v1105
        %v1107 = vpop.f32.mrf.mxu0
        %v1108 = vadd.f32 0.0, %v1107
        %v1109 = vpop.f32.mrf.mxu0
        %v1110 = vpop.f32.mrf.mxu0
        %1111 = vdwg.mxu0
        %v1112 = vpack.c.bf16 %v983, %v983
        %v1113 = vpack.c.bf16 %v985, %v985
        %v1114 = vpack.c.bf16 %v1024, %v1024
        %v1115 = vpack.c.bf16 %v1026, %v1026
        %v1116 = vpack.c.bf16 %v1065, %v1065
        %v1117 = vpack.c.bf16 %v1067, %v1067
        %v1118 = vpack.c.bf16 %v1106, %v1106
        %v1119 = vpack.c.bf16 %v1108, %v1108
        %v1128 = vunpack.c.l.b16 %v1112
        %v1129 = vunpack.c.l.b16 %v1113
        %v1130 = vunpack.c.l.b16 %v1114
        %v1131 = vunpack.c.l.b16 %v1115
        %v1132 = vunpack.c.l.b16 %v1116
        %v1133 = vunpack.c.l.b16 %v1117
        %v1134 = vunpack.c.l.b16 %v1118
        %v1135 = vunpack.c.l.b16 %v1119
        %v1136 = vpack.c.b16 %v1129, %v1128
        %v1137 = vpack.c.b16 %v1131, %v1130
        %v1138 = vpack.c.b16 %v1133, %v1132
        %v1139 = vpack.c.b16 %v1135, %v1134
        %1144 = vst [vmem:[%s205] sm:$0xff] %v1136
        %1145 = vst [vmem:[%s205 + $0x8] sm:$0xff] %v1137
        %1146 = vst [vmem:[%s205 + $0x10] sm:$0xff] %v1138
        %1147 = vst [vmem:[%s205 + $0x18] sm:$0xff] %v1139
        %s1148 = smul.u32 8, %s14
        %p1149 = scmp.lt.s32.totalorder %s1148, 15
        %s1150 = scalar_select %p1149, %s1148, 15
        %s1151 = smul.addr %s1150, 4
        %s1152 = scalar_lea.vmem %s3, %s1151
        // Predicated region
        $region56: #{feedforward_pallas.4} parent=50 // pred_check
          %p1153 = pneg %p100
        $region57: #{feedforward_pallas.4} parent=50 // pred_check_branch
          %1155 = sbr.rel (%p1153) target = $region59
        $region58: #{feedforward_pallas.4} parent=50 // pred_region
          %s1156 = smul.u32 8, %s14
        $region59: #{feedforward_pallas.4} parent=50 // pred_fallthru
          _
      $region51: #{feedforward_pallas.4} parent=5 // pred_fallthru
        _
      %p1157 = scmp.le.s32.totalorder 2, %s9
      // Predicated region
      $region60: #{feedforward_pallas.4} parent=5 // pred_check
        %p1158 = pneg %p1157
      $region61: #{feedforward_pallas.4} parent=5 // pred_check_branch
        %1160 = sbr.rel (%p1158) target = $region63
      $region62: #{feedforward_pallas.4} parent=5 // pred_region
        %s1161 = ssub.s32 %s9, 2
        // Predicated region
        $region64: #{feedforward_pallas.4} parent=62 // pred_check
          %p1162 = pneg %p106
        $region65: #{feedforward_pallas.4} parent=62 // pred_check_branch
          %1164 = sbr.rel (%p1162) target = $region67
        $region66: #{feedforward_pallas.4} parent=62 // pred_region
          %s1165 = smul.u32 8, %s15
          %p1166 = scmp.lt.s32.totalorder %s1165, 15
          %s1167 = scalar_select %p1166, %s1165, 15
          %s1168 = smul.addr %s1167, 4
          %s1169 = scalar_lea.vmem %s3, %s1168
        $region67: #{feedforward_pallas.4} parent=62 // pred_fallthru
          _
      $region63: #{feedforward_pallas.4} parent=5 // pred_fallthru
        _
    $region6: #{feedforward_pallas.4} parent=1 // loop_footer
      %s13 = sadd.s32 1, %s9
    $region7: #{feedforward_pallas.4} parent=1 // loop_footer_branch
      %8 = sbr.rel target = $region3
    $region8: #{feedforward_pallas.4} parent=1 // loop_exit
      _

// kernel: feedforward_pallas.5
$region0: #{feedforward_pallas.5}
  #allocation0 [shape = 'u32[]', space=smem, size = 0x4, offset = 0x4, fixed_abs, tag = 'smem constant byte address 0x4 - core index']
  #allocation1 [shape = 'u32[144,128]{1,0:T(1,128)}', space=vmem, size = 0x12000, scoped, tag = 'internal scratch']
  %s0 = inlined_call_operand.vmem [shape: f32[16,128], index: 0, kind: input, shape index: {}]
  %s1 = inlined_call_operand.vmem [shape: bf16[8,16,128], index: 1, kind: input, shape index: {}]
  %s2 = inlined_call_operand.vmem [shape: bf16[128,128], index: 2, kind: input, shape index: {}]
  %s3 = inlined_call_operand.vmem [shape: f32[1,128], index: 3, kind: input, shape index: {}]
  %s4 = inlined_call_operand.vmem [shape: bf16[3,128,128], index: 4, kind: input, shape index: {}]
  %s5 = inlined_call_operand.vmem [shape: f32[1,128], index: 5, kind: input, shape index: {}]
  %s6 = inlined_call_operand.vmem [shape: bf16[16,1152], index: 6, kind: output, shape index: {}]
  %s7 = sld [smem:[#allocation0]]
  $region98: #{feedforward_pallas.5} parent=0
    _
  %s9 = ssub.s32 1, %s7
  %s10 = scalar_select 0, %s9, %s7
  $region1: #{feedforward_pallas.5} parent=0
    #allocation2 [shape = 'u8[32768]{0}', space=vmem, size = 0x8000, scoped, tag = 'input window, operand 1']
    loop: start=0, step=1, limit=4
    $region2: #{feedforward_pallas.5} parent=1 // loop_pre_header
      _
    $region3: #{feedforward_pallas.5} parent=1 // loop_header
      %s12 = sphi 0, %s16
      %p13 = scmp.ge.s32.totalorder %s12, 4
      %s22 = sphi 0, %s24
      %s25 = sphi 0, %s22
      %s26 = sphi 0, %s25
      %s42 = sphi 0, %s26
      %s48 = sphi 0, %s50
      %s51 = sphi 0, %s48
      %s52 = sphi 0, %s51
      %s68 = sphi 0, %s52
      %s72 = sphi 0, %s72
      %s74 = sphi 0, %s72
      %s75 = sphi 0, %s74
      %s89 = sphi 0, %s75
      %s93 = sphi 0, %s93
      %s95 = sphi 0, %s93
      %s96 = sphi 0, %s95
      %s110 = sphi 0, %s96
      %s114 = sphi 0, %s114
      %s116 = sphi 0, %s114
      %s117 = sphi 0, %s116
      %s131 = sphi 0, %s117
      %s135 = sphi 0, %s135
      %s137 = sphi 0, %s135
      %s138 = sphi 0, %s137
      %s152 = sphi 0, %s138
      %s158 = sphi 0, %s160
      %s161 = sphi 0, %s158
      %s162 = sphi 0, %s161
      %s178 = sphi 0, %s162
    $region4: #{feedforward_pallas.5} parent=1 // loop_header_branch
      %15 = sbr.rel (%p13) target = $region8
    $region5: #{feedforward_pallas.5} parent=1 // loop_body
      %s17 = ssub.s32 %s12, 1
      %s18 = ssub.s32 %s12, 2
      %s19 = sadd.s32 %s12, 1
      %s20 = ssub.s32 %s12, %s19
      %p21 = scmp.eq.s32.totalorder %s20, 0
      %s23 = sadd.s32 %s22, 1
      %s24 = scalar_select %p21, %s22, %s23
      %p27 = pneg %p21
      %p28 = scmp.eq.s32.totalorder %s12, 1
      %p29 = por %p27, %p28
      %p30 = scmp.ne.s32.totalorder %s22, %s25
      %p31 = scmp.eq.s32.totalorder %s12, 0
      %p32 = por %p30, %p31
      %p33 = scmp.ne.s32.totalorder %s22, %s25
      %p34 = scmp.eq.s32.totalorder %s17, 1
      %p35 = por %p33, %p34
      %p36 = scmp.ne.s32.totalorder %s25, %s26
      %p37 = scmp.eq.s32.totalorder %s17, 0
      %p38 = por %p36, %p37
      %p39 = scmp.ne.s32.totalorder %s25, %s26
      %p40 = scmp.eq.s32.totalorder %s18, 1
      %p41 = por %p39, %p40
      %p43 = scmp.ne.s32.totalorder %s26, %s42
      %p44 = scmp.eq.s32.totalorder %s18, 0
      %p45 = por %p43, %p44
      %s46 = ssub.s32 %s12, %s19
      %p47 = scmp.eq.s32.totalorder %s46, 0
      %s49 = sadd.s32 %s48, 1
      %s50 = scalar_select %p47, %s48, %s49
      %p53 = pneg %p47
      %p54 = scmp.eq.s32.totalorder %s12, 1
      %p55 = por %p53, %p54
      %p56 = scmp.ne.s32.totalorder %s48, %s51
      %p57 = scmp.eq.s32.totalorder %s12, 0
      %p58 = por %p56, %p57
      %p59 = scmp.ne.s32.totalorder %s48, %s51
      %p60 = scmp.eq.s32.totalorder %s17, 1
      %p61 = por %p59, %p60
      %p62 = scmp.ne.s32.totalorder %s51, %s52
      %p63 = scmp.eq.s32.totalorder %s17, 0
      %p64 = por %p62, %p63
      %p65 = scmp.ne.s32.totalorder %s51, %s52
      %p66 = scmp.eq.s32.totalorder %s18, 1
      %p67 = por %p65, %p66
      %p69 = scmp.ne.s32.totalorder %s52, %s68
      %p70 = scmp.eq.s32.totalorder %s18, 0
      %p71 = por %p69, %p70
      %s73 = sadd.s32 %s72, 1
      %p76 = scmp.eq.s32.totalorder %s12, 1
      %p77 = scmp.ne.s32.totalorder %s72, %s74
      %p78 = scmp.eq.s32.totalorder %s12, 0
      %p79 = por %p77, %p78
      %p80 = scmp.ne.s32.totalorder %s72, %s74
      %p81 = scmp.eq.s32.totalorder %s17, 1
      %p82 = por %p80, %p81
      %p83 = scmp.ne.s32.totalorder %s74, %s75
      %p84 = scmp.eq.s32.totalorder %s17, 0
      %p85 = por %p83, %p84
      %p86 = scmp.ne.s32.totalorder %s74, %s75
      %p87 = scmp.eq.s32.totalorder %s18, 1
      %p88 = por %p86, %p87
      %p90 = scmp.ne.s32.totalorder %s75, %s89
      %p91 = scmp.eq.s32.totalorder %s18, 0
      %p92 = por %p90, %p91
      %s94 = sadd.s32 %s93, 1
      %p97 = scmp.eq.s32.totalorder %s12, 1
      %p98 = scmp.ne.s32.totalorder %s93, %s95
      %p99 = scmp.eq.s32.totalorder %s12, 0
      %p100 = por %p98, %p99
      %p101 = scmp.ne.s32.totalorder %s93, %s95
      %p102 = scmp.eq.s32.totalorder %s17, 1
      %p103 = por %p101, %p102
      %p104 = scmp.ne.s32.totalorder %s95, %s96
      %p105 = scmp.eq.s32.totalorder %s17, 0
      %p106 = por %p104, %p105
      %p107 = scmp.ne.s32.totalorder %s95, %s96
      %p108 = scmp.eq.s32.totalorder %s18, 1
      %p109 = por %p107, %p108
      %p111 = scmp.ne.s32.totalorder %s96, %s110
      %p112 = scmp.eq.s32.totalorder %s18, 0
      %p113 = por %p111, %p112
      %s115 = sadd.s32 %s114, 1
      %p118 = scmp.eq.s32.totalorder %s12, 1
      %p119 = scmp.ne.s32.totalorder %s114, %s116
      %p120 = scmp.eq.s32.totalorder %s12, 0
      %p121 = por %p119, %p120
      %p122 = scmp.ne.s32.totalorder %s114, %s116
      %p123 = scmp.eq.s32.totalorder %s17, 1
      %p124 = por %p122, %p123
      %p125 = scmp.ne.s32.totalorder %s116, %s117
      %p126 = scmp.eq.s32.totalorder %s17, 0
      %p127 = por %p125, %p126
      %p128 = scmp.ne.s32.totalorder %s116, %s117
      %p129 = scmp.eq.s32.totalorder %s18, 1
      %p130 = por %p128, %p129
      %p132 = scmp.ne.s32.totalorder %s117, %s131
      %p133 = scmp.eq.s32.totalorder %s18, 0
      %p134 = por %p132, %p133
      %s136 = sadd.s32 %s135, 1
      %p139 = scmp.eq.s32.totalorder %s12, 1
      %p140 = scmp.ne.s32.totalorder %s135, %s137
      %p141 = scmp.eq.s32.totalorder %s12, 0
      %p142 = por %p140, %p141
      %p143 = scmp.ne.s32.totalorder %s135, %s137
      %p144 = scmp.eq.s32.totalorder %s17, 1
      %p145 = por %p143, %p144
      %p146 = scmp.ne.s32.totalorder %s137, %s138
      %p147 = scmp.eq.s32.totalorder %s17, 0
      %p148 = por %p146, %p147
      %p149 = scmp.ne.s32.totalorder %s137, %s138
      %p150 = scmp.eq.s32.totalorder %s18, 1
      %p151 = por %p149, %p150
      %p153 = scmp.ne.s32.totalorder %s138, %s152
      %p154 = scmp.eq.s32.totalorder %s18, 0
      %p155 = por %p153, %p154
      %s156 = ssub.s32 %s12, %s19
      %p157 = scmp.eq.s32.totalorder %s156, 0
      %s159 = sadd.s32 %s158, 1
      %s160 = scalar_select %p157, %s158, %s159
      %p163 = pneg %p157
      %p164 = scmp.eq.s32.totalorder %s12, 1
      %p165 = por %p163, %p164
      %p166 = scmp.ne.s32.totalorder %s158, %s161
      %p167 = scmp.eq.s32.totalorder %s12, 0
      %p168 = por %p166, %p167
      %p169 = scmp.ne.s32.totalorder %s158, %s161
      %p170 = scmp.eq.s32.totalorder %s17, 1
      %p171 = por %p169, %p170
      %p172 = scmp.ne.s32.totalorder %s161, %s162
      %p173 = scmp.eq.s32.totalorder %s17, 0
      %p174 = por %p172, %p173
      %p175 = scmp.ne.s32.totalorder %s161, %s162
      %p176 = scmp.eq.s32.totalorder %s18, 1
      %p177 = por %p175, %p176
      %p179 = scmp.ne.s32.totalorder %s162, %s178
      %p180 = scmp.eq.s32.totalorder %s18, 0
      %p181 = por %p179, %p180
      %p182 = scmp.le.s32.totalorder 1, %s12
      %p183 = scmp.lt.s32.totalorder %s12, 3
      %p184 = pnand %p182, %p183
      %p185 = pneg %p184
      // Predicated region
      $region9: #{feedforward_pallas.5} parent=5 // pred_check
        _
      $region10: #{feedforward_pallas.5} parent=5 // pred_check_branch
        %187 = sbr.rel (%p184) target = $region12
      $region11: #{feedforward_pallas.5} parent=5 // pred_region
        %s188 = ssub.s32 %s12, 1
        // Predicated region
        $region13: #{feedforward_pallas.5} parent=11 // pred_check
          %p189 = pneg %p85
        $region14: #{feedforward_pallas.5} parent=11 // pred_check_branch
          %191 = sbr.rel (%p189) target = $region16
        $region15: #{feedforward_pallas.5} parent=11 // pred_region
          _
        $region16: #{feedforward_pallas.5} parent=11 // pred_fallthru
          _
        // Predicated region
        $region17: #{feedforward_pallas.5} parent=11 // pred_check
          %p192 = pneg %p106
        $region18: #{feedforward_pallas.5} parent=11 // pred_check_branch
          %194 = sbr.rel (%p192) target = $region20
        $region19: #{feedforward_pallas.5} parent=11 // pred_region
          _
        $region20: #{feedforward_pallas.5} parent=11 // pred_fallthru
          _
        // Predicated region
        $region21: #{feedforward_pallas.5} parent=11 // pred_check
          %p195 = pneg %p127
        $region22: #{feedforward_pallas.5} parent=11 // pred_check_branch
          %197 = sbr.rel (%p195) target = $region24
        $region23: #{feedforward_pallas.5} parent=11 // pred_region
          _
        $region24: #{feedforward_pallas.5} parent=11 // pred_fallthru
          _
        // Predicated region
        $region25: #{feedforward_pallas.5} parent=11 // pred_check
          %p198 = pneg %p148
        $region26: #{feedforward_pallas.5} parent=11 // pred_check_branch
          %200 = sbr.rel (%p198) target = $region28
        $region27: #{feedforward_pallas.5} parent=11 // pred_region
          _
        $region28: #{feedforward_pallas.5} parent=11 // pred_fallthru
          _
      $region12: #{feedforward_pallas.5} parent=5 // pred_fallthru
        _
      %p201 = scmp.lt.s32.totalorder %s12, 2
      // Predicated region
      $region29: #{feedforward_pallas.5} parent=5 // pred_check
        %p202 = pneg %p201
      $region30: #{feedforward_pallas.5} parent=5 // pred_check_branch
        %204 = sbr.rel (%p202) target = $region32
      $region31: #{feedforward_pallas.5} parent=5 // pred_region
        // Predicated region
        $region33: #{feedforward_pallas.5} parent=31 // pred_check
          %p205 = pneg %p32
        $region34: #{feedforward_pallas.5} parent=31 // pred_check_branch
          %207 = sbr.rel (%p205) target = $region36
        $region35: #{feedforward_pallas.5} parent=31 // pred_region
          %p208 = scmp.lt.s32.totalorder %s12, 1
          %s209 = scalar_select %p208, %s12, 1
          %s210 = smul.addr %s209, 8
          %s211 = scalar_lea.vmem %s0, %s210
        $region36: #{feedforward_pallas.5} parent=31 // pred_fallthru
          _
        // Predicated region
        $region37: #{feedforward_pallas.5} parent=31 // pred_check
          %p212 = pneg %p58
        $region38: #{feedforward_pallas.5} parent=31 // pred_check_branch
          %214 = sbr.rel (%p212) target = $region40
        $region39: #{feedforward_pallas.5} parent=31 // pred_region
          %s215 = sand.u32 %s48, 1
          %s216 = sand.u32 %s48, 1
          %s217 = smul.addr %s216, 32
          %s218 = scalar_lea.vmem [#allocation2], %s217
          %s219 = smul.addr %s12, 4
          %s220 = scalar_lea.vmem %s1, %s219
          // Predicated region
          $region41: #{feedforward_pallas.5} parent=39 // pred_check
            _
          $region42: #{feedforward_pallas.5} parent=39 // pred_check_branch
            %222 = sbr.rel (0) target = $region44
          $region43: #{feedforward_pallas.5} parent=39 // pred_region
            // Predicated region
            $region45: #{feedforward_pallas.5} parent=43 // pred_check
              _
            $region46: #{feedforward_pallas.5} parent=43 // pred_check_branch
              %224 = sbr.rel target = $region48
            $region47: #{feedforward_pallas.5} parent=43 // pred_region
              // Predicated region
              $region60: #{feedforward_pallas.5} parent=47 // pred_check
                _
              $region61: #{feedforward_pallas.5} parent=47 // pred_check_branch
                %254 = sbr.rel (0) target = $region63
              $region62: #{feedforward_pallas.5} parent=47 // pred_region
                loop: start=0, step=1, limit=1
                $region64: #{feedforward_pallas.5} parent=62 // loop_pre_header
                  _
                $region65: #{feedforward_pallas.5} parent=62 // loop_header
                  %s256 = sphi 0, %s260
                  %p257 = scmp.ge.s32.totalorder %s256, 1
                  %s261 = sphi %s220, %s220
                  %s262 = sphi %s218, %s218
                $region66: #{feedforward_pallas.5} parent=62 // loop_header_branch
                  %259 = sbr.rel (%p257) target = $region70
                $region67: #{feedforward_pallas.5} parent=62 // loop_body
                  _
                $region68: #{feedforward_pallas.5} parent=62 // loop_footer
                  %s260 = sadd.s32 1, %s256
                $region69: #{feedforward_pallas.5} parent=62 // loop_footer_branch
                  %255 = sbr.rel target = $region65
                $region70: #{feedforward_pallas.5} parent=62 // loop_exit
                  _
                %s264 = ssub.s32 16, 1
                loop: start=0, step=1, limit=1
                $region71: #{feedforward_pallas.5} parent=62 // loop_pre_header
                  _
                $region72: #{feedforward_pallas.5} parent=62 // loop_header
                  %s266 = sphi 0, %s270
                  %p267 = scmp.ge.s32.totalorder %s266, 1
                  %s271 = sphi %s220, %s220
                  %s272 = sphi %s218, %s218
                $region73: #{feedforward_pallas.5} parent=62 // loop_header_branch
                  %269 = sbr.rel (%p267) target = $region77
                $region74: #{feedforward_pallas.5} parent=62 // loop_body
                  %v273 = vld [vmem:[%s271] sm:%s264]
                  %274 = vst [vmem:[%s272] sm:%s264] %v273
                  %v275 = vld [vmem:[%s271 + $0x8] sm:%s264]
                  %276 = vst [vmem:[%s272 + $0x4] sm:%s264] %v275
                  %v277 = vld [vmem:[%s271 + $0x10] sm:%s264]
                  %278 = vst [vmem:[%s272 + $0x8] sm:%s264] %v277
                  %v279 = vld [vmem:[%s271 + $0x18] sm:%s264]
                  %280 = vst [vmem:[%s272 + $0xc] sm:%s264] %v279
                  %v281 = vld [vmem:[%s271 + $0x20] sm:%s264]
                  %282 = vst [vmem:[%s272 + $0x10] sm:%s264] %v281
                  %v283 = vld [vmem:[%s271 + $0x28] sm:%s264]
                  %284 = vst [vmem:[%s272 + $0x14] sm:%s264] %v283
                  %v285 = vld [vmem:[%s271 + $0x30] sm:%s264]
                  %286 = vst [vmem:[%s272 + $0x18] sm:%s264] %v285
                  %v287 = vld [vmem:[%s271 + $0x38] sm:%s264]
                  %288 = vst [vmem:[%s272 + $0x1c] sm:%s264] %v287
                $region75: #{feedforward_pallas.5} parent=62 // loop_footer
                  %s270 = sadd.s32 1, %s266
                $region76: #{feedforward_pallas.5} parent=62 // loop_footer_branch
                  %265 = sbr.rel target = $region72
                $region77: #{feedforward_pallas.5} parent=62 // loop_exit
                  _
              $region63: #{feedforward_pallas.5} parent=47 // pred_fallthru
                _
            $region48: #{feedforward_pallas.5} parent=43 // pred_fallthru
              _
            // Predicated region
            $region49: #{feedforward_pallas.5} parent=43 // pred_check
              _
            $region50: #{feedforward_pallas.5} parent=43 // pred_check_branch
              %226 = sbr.rel (0) target = $region52
            $region51: #{feedforward_pallas.5} parent=43 // pred_region
              %s228 = ssub.s32 16, 1
              loop: start=0, step=1, limit=1
              $region53: #{feedforward_pallas.5} parent=51 // loop_pre_header
                _
              $region54: #{feedforward_pallas.5} parent=51 // loop_header
                %s230 = sphi 0, %s234
                %p231 = scmp.ge.s32.totalorder %s230, 1
                %s235 = sphi %s220, %s220
                %s236 = sphi %s218, %s218
              $region55: #{feedforward_pallas.5} parent=51 // loop_header_branch
                %233 = sbr.rel (%p231) target = $region59
              $region56: #{feedforward_pallas.5} parent=51 // loop_body
                %v237 = vld [vmem:[%s235] sm:%s228]
                %238 = vst [vmem:[%s236] sm:%s228] %v237
                %v239 = vld [vmem:[%s235 + $0x8] sm:%s228]
                %240 = vst [vmem:[%s236 + $0x4] sm:%s228] %v239
                %v241 = vld [vmem:[%s235 + $0x10] sm:%s228]
                %242 = vst [vmem:[%s236 + $0x8] sm:%s228] %v241
                %v243 = vld [vmem:[%s235 + $0x18] sm:%s228]
                %244 = vst [vmem:[%s236 + $0xc] sm:%s228] %v243
                %v245 = vld [vmem:[%s235 + $0x20] sm:%s228]
                %246 = vst [vmem:[%s236 + $0x10] sm:%s228] %v245
                %v247 = vld [vmem:[%s235 + $0x28] sm:%s228]
                %248 = vst [vmem:[%s236 + $0x14] sm:%s228] %v247
                %v249 = vld [vmem:[%s235 + $0x30] sm:%s228]
                %250 = vst [vmem:[%s236 + $0x18] sm:%s228] %v249
                %v251 = vld [vmem:[%s235 + $0x38] sm:%s228]
                %252 = vst [vmem:[%s236 + $0x1c] sm:%s228] %v251
              $region57: #{feedforward_pallas.5} parent=51 // loop_footer
                %s234 = sadd.s32 1, %s230
              $region58: #{feedforward_pallas.5} parent=51 // loop_footer_branch
                %229 = sbr.rel target = $region54
              $region59: #{feedforward_pallas.5} parent=51 // loop_exit
                _
            $region52: #{feedforward_pallas.5} parent=43 // pred_fallthru
              _
          $region44: #{feedforward_pallas.5} parent=39 // pred_fallthru
            _
          %289 = vnop
        $region40: #{feedforward_pallas.5} parent=31 // pred_fallthru
          _
      $region32: #{feedforward_pallas.5} parent=5 // pred_fallthru
        _
      %p290 = scmp.le.s32.totalorder 1, %s12
      %p291 = scmp.lt.s32.totalorder %s12, 3
      %p292 = pnand %p290, %p291
      %p293 = pneg %p292
      // Predicated region
      $region78: #{feedforward_pallas.5} parent=5 // pred_check
        _
      $region79: #{feedforward_pallas.5} parent=5 // pred_check_branch
        %295 = sbr.rel (%p292) target = $region81
      $region80: #{feedforward_pallas.5} parent=5 // pred_region
        %s296 = ssub.s32 %s12, 1
        %s297 = sand.u32 %s51, 1
        %s298 = sand.u32 %s51, 1
        %s299 = smul.addr %s298, 32
        %s300 = scalar_lea.vmem [#allocation2], %s299
        // Predicated region
        $region82: #{feedforward_pallas.5} parent=80 // pred_check
          %p301 = pneg %p64
        $region83: #{feedforward_pallas.5} parent=80 // pred_check_branch
          %303 = sbr.rel (%p301) target = $region85
        $region84: #{feedforward_pallas.5} parent=80 // pred_region
          _
        $region85: #{feedforward_pallas.5} parent=80 // pred_fallthru
          _
        %p304 = scmp.lt.s32.totalorder %s17, 1
        %s305 = scalar_select %p304, %s17, 1
        %s306 = smul.addr %s305, 8
        %s307 = scalar_lea.vmem %s0, %s306
        %p308 = pneg %p38
        %p309 = pneg %p35
        %s310 = sand.u32 %s51, 1
        %s311 = sand.u32 %s51, 1
        %s312 = smul.addr %s311, 32
        %s313 = scalar_lea.vmem [#allocation2], %s312
        %p314 = pneg %p64
        %p315 = pneg %p61
        %p316 = pneg %p85
        %p317 = pneg %p82
        %p318 = pneg %p106
        %p319 = pneg %p103
        %p320 = pneg %p127
        %p321 = pneg %p124
        %p322 = pneg %p148
        %p323 = pneg %p145
        %p324 = pneg %p174
        %p325 = pneg %p171
        %p326 = scmp.lt.s32.totalorder %s17, 1
        %s327 = scalar_select %p326, %s17, 1
        %s328 = smul.addr %s327, 9
        %s329 = smul.addr %s328, 4
        %s330 = scalar_lea.vmem %s6, %s329
        %p331 = scmp.lt.s32.totalorder %s17, 1
        %s332 = scalar_select %p331, %s17, 1
        %s333 = smul.addr %s332, 8
        %s334 = scalar_lea.vmem %s0, %s333
        %p335 = scmp.lt.s32.totalorder %s17, 1
        %s336 = scalar_select %p335, %s17, 1
        %s337 = smul.addr %s336, 9
        %s338 = smul.addr %s337, 4
        %s339 = scalar_lea.vmem %s6, %s338
        %v341 = vld [vmem:[%s334] sm:$0xff]
        %v342 = vpack.c.bf16 %v341, %v341
        %v343 = vld [vmem:[%s2] sm:$0xf]
        %v344 = vld [vmem:[%s2 + $0x4] sm:$0xf]
        %v345 = vld [vmem:[%s2 + $0x8] sm:$0xf]
        %v346 = vld [vmem:[%s2 + $0xc] sm:$0xf]
        %v347 = vld [vmem:[%s2 + $0x10] sm:$0xf]
        %v348 = vld [vmem:[%s2 + $0x14] sm:$0xf]
        %v349 = vld [vmem:[%s2 + $0x18] sm:$0xf]
        %v350 = vld [vmem:[%s2 + $0x1c] sm:$0xf]
        %v351 = vld [vmem:[%s2 + $0x20] sm:$0xf]
        %v352 = vld [vmem:[%s2 + $0x24] sm:$0xf]
        %v353 = vld [vmem:[%s2 + $0x28] sm:$0xf]
        %v354 = vld [vmem:[%s2 + $0x2c] sm:$0xf]
        %v355 = vld [vmem:[%s2 + $0x30] sm:$0xf]
        %v356 = vld [vmem:[%s2 + $0x34] sm:$0xf]
        %v357 = vld [vmem:[%s2 + $0x38] sm:$0xf]
        %v358 = vld [vmem:[%s2 + $0x3c] sm:$0xf]
        %v359 = vld [vmem:[%s3] sm:$0x1]
        %v361 = vlaneseq
        %v362 = vshrl.u32 %v361, 7
        %v363 = vsub.s32 0, %v362
        %v364 = vrot.slane %v359, %v363
        %v382 = vunpack.c.l.b16 %v343
        %v383 = vunpack.c.l.b16 %v344
        %v384 = vunpack.c.l.b16 %v345
        %v385 = vunpack.c.l.b16 %v346
        %v386 = vunpack.c.l.b16 %v347
        %v387 = vunpack.c.l.b16 %v348
        %v388 = vunpack.c.l.b16 %v349
        %v389 = vunpack.c.l.b16 %v350
        %v390 = vunpack.c.l.b16 %v351
        %v391 = vunpack.c.l.b16 %v352
        %v392 = vunpack.c.l.b16 %v353
        %v393 = vunpack.c.l.b16 %v354
        %v394 = vunpack.c.l.b16 %v355
        %v395 = vunpack.c.l.b16 %v356
        %v396 = vunpack.c.l.b16 %v357
        %v397 = vunpack.c.l.b16 %v358
        %v398 = vpack.c.b16 %v383, %v382
        %v399 = vpack.c.b16 %v385, %v384
        %v400 = vpack.c.b16 %v387, %v386
        %v401 = vpack.c.b16 %v389, %v388
        %v402 = vpack.c.b16 %v391, %v390
        %v403 = vpack.c.b16 %v393, %v392
        %v404 = vpack.c.b16 %v395, %v394
        %v405 = vpack.c.b16 %v397, %v396
        %414 = vmatprep.subr.bf16.mxu0 0
        %415 = vmatpush1.bf16.msra.mxu0 %v405
        %416 = vmatprep.subr.bf16.mxu0 0
        %417 = vmatpush1.bf16.msra.mxu0 %v404
        %418 = vmatprep.subr.bf16.mxu0 0
        %419 = vmatpush1.bf16.msra.mxu0 %v403
        %420 = vmatprep.subr.bf16.mxu0 0
        %421 = vmatpush1.bf16.msra.mxu0 %v402
        %422 = vmatprep.subr.bf16.mxu0 0
        %423 = vmatpush1.bf16.msra.mxu0 %v401
        %424 = vmatprep.subr.bf16.mxu0 0
        %425 = vmatpush1.bf16.msra.mxu0 %v400
        %426 = vmatprep.subr.bf16.mxu0 0
        %427 = vmatpush1.bf16.msra.mxu0 %v399
        %428 = vmatprep.subr.bf16.mxu0 0
        %429 = vmatpush1.bf16.msra.mxu0 %v398
        %430 = vmatprep.subr.bf16.mxu0 0
        %431 = vmatpush2.bf16.msra.mxu0 0
        %432 = vmatprep.subr.bf16.mxu0 0
        %433 = vmatpush2.bf16.msra.mxu0 0
        %434 = vmatprep.subr.bf16.mxu0 0
        %435 = vmatpush2.bf16.msra.mxu0 0
        %436 = vmatprep.subr.bf16.mxu0 0
        %437 = vmatpush2.bf16.msra.mxu0 0
        %438 = vmatprep.subr.bf16.mxu0 0
        %439 = vmatpush2.bf16.msra.mxu0 0
        %440 = vmatprep.subr.bf16.mxu0 0
        %441 = vmatpush2.bf16.msra.mxu0 0
        %442 = vmatprep.subr.bf16.mxu0 0
        %443 = vmatpush2.bf16.msra.mxu0 0
        %444 = vmatprep.subr.bf16.mxu0 0
        %445 = vmatpush2.bf16.msra.mxu0 0
        %446 = vmatprep.mubr.bf16.mxu0 0
        %447 = vmatmul.mubr.bf16.gmra.mxu0 %v342
        %v448 = vpop.f32.mrf.mxu0
        %v449 = vadd.f32 %v364, %v448
        %v450 = vpop.f32.mrf.mxu0
        %v451 = vpop.f32.mrf.mxu0
        %v452 = vpop.f32.mrf.mxu0
        %453 = vdwg.mxu0
        %v454 = vxor.u32 %v449, 2147483648
        %v455 = vmul.f32 %v454, 1.442695
        %v456 = vpow.pop %v455
        %v457 = vadd.f32 %v456, 1.0
        %v458 = vrcp.pop %v457
        %v459 = vmul.f32 1.0, %v458
        %v460 = vmul.f32 %v449, %v459
        %v461 = vpack.c.bf16 %v460, %v460
        %v462 = vld [vmem:[%s4] sm:$0xf]
        %v463 = vld [vmem:[%s4 + $0x4] sm:$0xf]
        %v464 = vld [vmem:[%s4 + $0x8] sm:$0xf]
        %v465 = vld [vmem:[%s4 + $0xc] sm:$0xf]
        %v466 = vld [vmem:[%s4 + $0x10] sm:$0xf]
        %v467 = vld [vmem:[%s4 + $0x14] sm:$0xf]
        %v468 = vld [vmem:[%s4 + $0x18] sm:$0xf]
        %v469 = vld [vmem:[%s4 + $0x1c] sm:$0xf]
        %v470 = vld [vmem:[%s4 + $0x20] sm:$0xf]
        %v471 = vld [vmem:[%s4 + $0x24] sm:$0xf]
        %v472 = vld [vmem:[%s4 + $0x28] sm:$0xf]
        %v473 = vld [vmem:[%s4 + $0x2c] sm:$0xf]
        %v474 = vld [vmem:[%s4 + $0x30] sm:$0xf]
        %v475 = vld [vmem:[%s4 + $0x34] sm:$0xf]
        %v476 = vld [vmem:[%s4 + $0x38] sm:$0xf]
        %v477 = vld [vmem:[%s4 + $0x3c] sm:$0xf]
        %v478 = vld [vmem:[%s5] sm:$0x1]
        %v480 = vlaneseq
        %v481 = vshrl.u32 %v480, 7
        %v482 = vsub.s32 0, %v481
        %v483 = vrot.slane %v478, %v482
        %v501 = vunpack.c.l.b16 %v462
        %v502 = vunpack.c.l.b16 %v463
        %v503 = vunpack.c.l.b16 %v464
        %v504 = vunpack.c.l.b16 %v465
        %v505 = vunpack.c.l.b16 %v466
        %v506 = vunpack.c.l.b16 %v467
        %v507 = vunpack.c.l.b16 %v468
        %v508 = vunpack.c.l.b16 %v469
        %v509 = vunpack.c.l.b16 %v470
        %v510 = vunpack.c.l.b16 %v471
        %v511 = vunpack.c.l.b16 %v472
        %v512 = vunpack.c.l.b16 %v473
        %v513 = vunpack.c.l.b16 %v474
        %v514 = vunpack.c.l.b16 %v475
        %v515 = vunpack.c.l.b16 %v476
        %v516 = vunpack.c.l.b16 %v477
        %v517 = vpack.c.b16 %v502, %v501
        %v518 = vpack.c.b16 %v504, %v503
        %v519 = vpack.c.b16 %v506, %v505
        %v520 = vpack.c.b16 %v508, %v507
        %v521 = vpack.c.b16 %v510, %v509
        %v522 = vpack.c.b16 %v512, %v511
        %v523 = vpack.c.b16 %v514, %v513
        %v524 = vpack.c.b16 %v516, %v515
        %533 = vmatprep.subr.bf16.mxu0 0
        %534 = vmatpush1.bf16.msra.mxu0 %v524
        %535 = vmatprep.subr.bf16.mxu0 0
        %536 = vmatpush1.bf16.msra.mxu0 %v523
        %537 = vmatprep.subr.bf16.mxu0 0
        %538 = vmatpush1.bf16.msra.mxu0 %v522
        %539 = vmatprep.subr.bf16.mxu0 0
        %540 = vmatpush1.bf16.msra.mxu0 %v521
        %541 = vmatprep.subr.bf16.mxu0 0
        %542 = vmatpush1.bf16.msra.mxu0 %v520
        %543 = vmatprep.subr.bf16.mxu0 0
        %544 = vmatpush1.bf16.msra.mxu0 %v519
        %545 = vmatprep.subr.bf16.mxu0 0
        %546 = vmatpush1.bf16.msra.mxu0 %v518
        %547 = vmatprep.subr.bf16.mxu0 0
        %548 = vmatpush1.bf16.msra.mxu0 %v517
        %549 = vmatprep.subr.bf16.mxu0 0
        %550 = vmatpush2.bf16.msra.mxu0 0
        %551 = vmatprep.subr.bf16.mxu0 0
        %552 = vmatpush2.bf16.msra.mxu0 0
        %553 = vmatprep.subr.bf16.mxu0 0
        %554 = vmatpush2.bf16.msra.mxu0 0
        %555 = vmatprep.subr.bf16.mxu0 0
        %556 = vmatpush2.bf16.msra.mxu0 0
        %557 = vmatprep.subr.bf16.mxu0 0
        %558 = vmatpush2.bf16.msra.mxu0 0
        %559 = vmatprep.subr.bf16.mxu0 0
        %560 = vmatpush2.bf16.msra.mxu0 0
        %561 = vmatprep.subr.bf16.mxu0 0
        %562 = vmatpush2.bf16.msra.mxu0 0
        %563 = vmatprep.subr.bf16.mxu0 0
        %564 = vmatpush2.bf16.msra.mxu0 0
        %565 = vmatprep.mubr.bf16.mxu0 0
        %566 = vmatmul.mubr.bf16.gmra.mxu0 %v461
        %v567 = vpop.f32.mrf.mxu0
        %v568 = vadd.f32 %v483, %v567
        %v569 = vpop.f32.mrf.mxu0
        %v570 = vpop.f32.mrf.mxu0
        %v571 = vpop.f32.mrf.mxu0
        %572 = vdwg.mxu0
        %v573 = vpack.c.bf16 %v568, %v568
        %574 = vst [vmem:[%s339] sm:$0xf] %v573
        %s575 = scalar_lea.vmem %s4, 64
        %v576 = vld [vmem:[%s575] sm:$0xf]
        %v577 = vld [vmem:[%s575 + $0x4] sm:$0xf]
        %v578 = vld [vmem:[%s575 + $0x8] sm:$0xf]
        %v579 = vld [vmem:[%s575 + $0xc] sm:$0xf]
        %v580 = vld [vmem:[%s575 + $0x10] sm:$0xf]
        %v581 = vld [vmem:[%s575 + $0x14] sm:$0xf]
        %v582 = vld [vmem:[%s575 + $0x18] sm:$0xf]
        %v583 = vld [vmem:[%s575 + $0x1c] sm:$0xf]
        %v584 = vld [vmem:[%s575 + $0x20] sm:$0xf]
        %v585 = vld [vmem:[%s575 + $0x24] sm:$0xf]
        %v586 = vld [vmem:[%s575 + $0x28] sm:$0xf]
        %v587 = vld [vmem:[%s575 + $0x2c] sm:$0xf]
        %v588 = vld [vmem:[%s575 + $0x30] sm:$0xf]
        %v589 = vld [vmem:[%s575 + $0x34] sm:$0xf]
        %v590 = vld [vmem:[%s575 + $0x38] sm:$0xf]
        %v591 = vld [vmem:[%s575 + $0x3c] sm:$0xf]
        %v592 = vld [vmem:[%s300] sm:$0xf]
        %v609 = vunpack.c.l.b16 %v576
        %v610 = vunpack.c.l.b16 %v577
        %v611 = vunpack.c.l.b16 %v578
        %v612 = vunpack.c.l.b16 %v579
        %v613 = vunpack.c.l.b16 %v580
        %v614 = vunpack.c.l.b16 %v581
        %v615 = vunpack.c.l.b16 %v582
        %v616 = vunpack.c.l.b16 %v583
        %v617 = vunpack.c.l.b16 %v584
        %v618 = vunpack.c.l.b16 %v585
        %v619 = vunpack.c.l.b16 %v586
        %v620 = vunpack.c.l.b16 %v587
        %v621 = vunpack.c.l.b16 %v588
        %v622 = vunpack.c.l.b16 %v589
        %v623 = vunpack.c.l.b16 %v590
        %v624 = vunpack.c.l.b16 %v591
        %v625 = vpack.c.b16 %v610, %v609
        %v626 = vpack.c.b16 %v612, %v611
        %v627 = vpack.c.b16 %v614, %v613
        %v628 = vpack.c.b16 %v616, %v615
        %v629 = vpack.c.b16 %v618, %v617
        %v630 = vpack.c.b16 %v620, %v619
        %v631 = vpack.c.b16 %v622, %v621
        %v632 = vpack.c.b16 %v624, %v623
        %641 = vmatprep.subr.bf16.mxu0 0
        %642 = vmatpush1.bf16.msra.mxu0 %v632
        %643 = vmatprep.subr.bf16.mxu0 0
        %644 = vmatpush1.bf16.msra.mxu0 %v631
        %645 = vmatprep.subr.bf16.mxu0 0
        %646 = vmatpush1.bf16.msra.mxu0 %v630
        %647 = vmatprep.subr.bf16.mxu0 0
        %648 = vmatpush1.bf16.msra.mxu0 %v629
        %649 = vmatprep.subr.bf16.mxu0 0
        %650 = vmatpush1.bf16.msra.mxu0 %v628
        %651 = vmatprep.subr.bf16.mxu0 0
        %652 = vmatpush1.bf16.msra.mxu0 %v627
        %653 = vmatprep.subr.bf16.mxu0 0
        %654 = vmatpush1.bf16.msra.mxu0 %v626
        %655 = vmatprep.subr.bf16.mxu0 0
        %656 = vmatpush1.bf16.msra.mxu0 %v625
        %657 = vmatprep.subr.bf16.mxu0 0
        %658 = vmatpush2.bf16.msra.mxu0 0
        %659 = vmatprep.subr.bf16.mxu0 0
        %660 = vmatpush2.bf16.msra.mxu0 0
        %661 = vmatprep.subr.bf16.mxu0 0
        %662 = vmatpush2.bf16.msra.mxu0 0
        %663 = vmatprep.subr.bf16.mxu0 0
        %664 = vmatpush2.bf16.msra.mxu0 0
        %665 = vmatprep.subr.bf16.mxu0 0
        %666 = vmatpush2.bf16.msra.mxu0 0
        %667 = vmatprep.subr.bf16.mxu0 0
        %668 = vmatpush2.bf16.msra.mxu0 0
        %669 = vmatprep.subr.bf16.mxu0 0
        %670 = vmatpush2.bf16.msra.mxu0 0
        %671 = vmatprep.subr.bf16.mxu0 0
        %672 = vmatpush2.bf16.msra.mxu0 0
        %673 = vmatprep.mubr.bf16.mxu0 0
        %674 = vmatmul.mubr.bf16.gmra.mxu0 %v592
        %v675 = vpop.f32.mrf.mxu0
        %v676 = vadd.f32 0.0, %v675
        %v677 = vpop.f32.mrf.mxu0
        %v678 = vpop.f32.mrf.mxu0
        %v679 = vpop.f32.mrf.mxu0
        %680 = vdwg.mxu0
        %v681 = vpack.c.bf16 %v676, %v676
        %682 = vst [vmem:[%s339 + $0x4] sm:$0xf] %v681
        %s683 = scalar_lea.vmem %s300, 4 [#allocation2]
        %v684 = vld [vmem:[%s683] sm:$0xf]
        %685 = vmatprep.subr.bf16.mxu0 0
        %686 = vmatpush1.bf16.msra.mxu0 %v632
        %687 = vmatprep.subr.bf16.mxu0 0
        %688 = vmatpush1.bf16.msra.mxu0 %v631
        %689 = vmatprep.subr.bf16.mxu0 0
        %690 = vmatpush1.bf16.msra.mxu0 %v630
        %691 = vmatprep.subr.bf16.mxu0 0
        %692 = vmatpush1.bf16.msra.mxu0 %v629
        %693 = vmatprep.subr.bf16.mxu0 0
        %694 = vmatpush1.bf16.msra.mxu0 %v628
        %695 = vmatprep.subr.bf16.mxu0 0
        %696 = vmatpush1.bf16.msra.mxu0 %v627
        %697 = vmatprep.subr.bf16.mxu0 0
        %698 = vmatpush1.bf16.msra.mxu0 %v626
        %699 = vmatprep.subr.bf16.mxu0 0
        %700 = vmatpush1.bf16.msra.mxu0 %v625
        %701 = vmatprep.subr.bf16.mxu0 0
        %702 = vmatpush2.bf16.msra.mxu0 0
        %703 = vmatprep.subr.bf16.mxu0 0
        %704 = vmatpush2.bf16.msra.mxu0 0
        %705 = vmatprep.subr.bf16.mxu0 0
        %706 = vmatpush2.bf16.msra.mxu0 0
        %707 = vmatprep.subr.bf16.mxu0 0
        %708 = vmatpush2.bf16.msra.mxu0 0
        %709 = vmatprep.subr.bf16.mxu0 0
        %710 = vmatpush2.bf16.msra.mxu0 0
        %711 = vmatprep.subr.bf16.mxu0 0
        %712 = vmatpush2.bf16.msra.mxu0 0
        %713 = vmatprep.subr.bf16.mxu0 0
        %714 = vmatpush2.bf16.msra.mxu0 0
        %715 = vmatprep.subr.bf16.mxu0 0
        %716 = vmatpush2.bf16.msra.mxu0 0
        %717 = vmatprep.mubr.bf16.mxu0 0
        %718 = vmatmul.mubr.bf16.gmra.mxu0 %v684
        %v719 = vpop.f32.mrf.mxu0
        %v720 = vadd.f32 0.0, %v719
        %v721 = vpop.f32.mrf.mxu0
        %v722 = vpop.f32.mrf.mxu0
        %v723 = vpop.f32.mrf.mxu0
        %724 = vdwg.mxu0
        %v725 = vpack.c.bf16 %v720, %v720
        %726 = vst [vmem:[%s339 + $0x8] sm:$0xf] %v725
        %s727 = scalar_lea.vmem %s300, 8 [#allocation2]
        %v728 = vld [vmem:[%s727] sm:$0xf]
        %729 = vmatprep.subr.bf16.mxu0 0
        %730 = vmatpush1.bf16.msra.mxu0 %v632
        %731 = vmatprep.subr.bf16.mxu0 0
        %732 = vmatpush1.bf16.msra.mxu0 %v631
        %733 = vmatprep.subr.bf16.mxu0 0
        %734 = vmatpush1.bf16.msra.mxu0 %v630
        %735 = vmatprep.subr.bf16.mxu0 0
        %736 = vmatpush1.bf16.msra.mxu0 %v629
        %737 = vmatprep.subr.bf16.mxu0 0
        %738 = vmatpush1.bf16.msra.mxu0 %v628
        %739 = vmatprep.subr.bf16.mxu0 0
        %740 = vmatpush1.bf16.msra.mxu0 %v627
        %741 = vmatprep.subr.bf16.mxu0 0
        %742 = vmatpush1.bf16.msra.mxu0 %v626
        %743 = vmatprep.subr.bf16.mxu0 0
        %744 = vmatpush1.bf16.msra.mxu0 %v625
        %745 = vmatprep.subr.bf16.mxu0 0
        %746 = vmatpush2.bf16.msra.mxu0 0
        %747 = vmatprep.subr.bf16.mxu0 0
        %748 = vmatpush2.bf16.msra.mxu0 0
        %749 = vmatprep.subr.bf16.mxu0 0
        %750 = vmatpush2.bf16.msra.mxu0 0
        %751 = vmatprep.subr.bf16.mxu0 0
        %752 = vmatpush2.bf16.msra.mxu0 0
        %753 = vmatprep.subr.bf16.mxu0 0
        %754 = vmatpush2.bf16.msra.mxu0 0
        %755 = vmatprep.subr.bf16.mxu0 0
        %756 = vmatpush2.bf16.msra.mxu0 0
        %757 = vmatprep.subr.bf16.mxu0 0
        %758 = vmatpush2.bf16.msra.mxu0 0
        %759 = vmatprep.subr.bf16.mxu0 0
        %760 = vmatpush2.bf16.msra.mxu0 0
        %761 = vmatprep.mubr.bf16.mxu0 0
        %762 = vmatmul.mubr.bf16.gmra.mxu0 %v728
        %v763 = vpop.f32.mrf.mxu0
        %v764 = vadd.f32 0.0, %v763
        %v765 = vpop.f32.mrf.mxu0
        %v766 = vpop.f32.mrf.mxu0
        %v767 = vpop.f32.mrf.mxu0
        %768 = vdwg.mxu0
        %v769 = vpack.c.bf16 %v764, %v764
        %770 = vst [vmem:[%s339 + $0xc] sm:$0xf] %v769
        %s771 = scalar_lea.vmem %s4, 128
        %v772 = vld [vmem:[%s771] sm:$0xf]
        %v773 = vld [vmem:[%s771 + $0x4] sm:$0xf]
        %v774 = vld [vmem:[%s771 + $0x8] sm:$0xf]
        %v775 = vld [vmem:[%s771 + $0xc] sm:$0xf]
        %v776 = vld [vmem:[%s771 + $0x10] sm:$0xf]
        %v777 = vld [vmem:[%s771 + $0x14] sm:$0xf]
        %v778 = vld [vmem:[%s771 + $0x18] sm:$0xf]
        %v779 = vld [vmem:[%s771 + $0x1c] sm:$0xf]
        %v780 = vld [vmem:[%s771 + $0x20] sm:$0xf]
        %v781 = vld [vmem:[%s771 + $0x24] sm:$0xf]
        %v782 = vld [vmem:[%s771 + $0x28] sm:$0xf]
        %v783 = vld [vmem:[%s771 + $0x2c] sm:$0xf]
        %v784 = vld [vmem:[%s771 + $0x30] sm:$0xf]
        %v785 = vld [vmem:[%s771 + $0x34] sm:$0xf]
        %v786 = vld [vmem:[%s771 + $0x38] sm:$0xf]
        %v787 = vld [vmem:[%s771 + $0x3c] sm:$0xf]
        %s788 = scalar_lea.vmem %s300, 12 [#allocation2]
        %v789 = vld [vmem:[%s788] sm:$0xf]
        %v806 = vunpack.c.l.b16 %v772
        %v807 = vunpack.c.l.b16 %v773
        %v808 = vunpack.c.l.b16 %v774
        %v809 = vunpack.c.l.b16 %v775
        %v810 = vunpack.c.l.b16 %v776
        %v811 = vunpack.c.l.b16 %v777
        %v812 = vunpack.c.l.b16 %v778
        %v813 = vunpack.c.l.b16 %v779
        %v814 = vunpack.c.l.b16 %v780
        %v815 = vunpack.c.l.b16 %v781
        %v816 = vunpack.c.l.b16 %v782
        %v817 = vunpack.c.l.b16 %v783
        %v818 = vunpack.c.l.b16 %v784
        %v819 = vunpack.c.l.b16 %v785
        %v820 = vunpack.c.l.b16 %v786
        %v821 = vunpack.c.l.b16 %v787
        %v822 = vpack.c.b16 %v807, %v806
        %v823 = vpack.c.b16 %v809, %v808
        %v824 = vpack.c.b16 %v811, %v810
        %v825 = vpack.c.b16 %v813, %v812
        %v826 = vpack.c.b16 %v815, %v814
        %v827 = vpack.c.b16 %v817, %v816
        %v828 = vpack.c.b16 %v819, %v818
        %v829 = vpack.c.b16 %v821, %v820
        %838 = vmatprep.subr.bf16.mxu0 0
        %839 = vmatpush1.bf16.msra.mxu0 %v829
        %840 = vmatprep.subr.bf16.mxu0 0
        %841 = vmatpush1.bf16.msra.mxu0 %v828
        %842 = vmatprep.subr.bf16.mxu0 0
        %843 = vmatpush1.bf16.msra.mxu0 %v827
        %844 = vmatprep.subr.bf16.mxu0 0
        %845 = vmatpush1.bf16.msra.mxu0 %v826
        %846 = vmatprep.subr.bf16.mxu0 0
        %847 = vmatpush1.bf16.msra.mxu0 %v825
        %848 = vmatprep.subr.bf16.mxu0 0
        %849 = vmatpush1.bf16.msra.mxu0 %v824
        %850 = vmatprep.subr.bf16.mxu0 0
        %851 = vmatpush1.bf16.msra.mxu0 %v823
        %852 = vmatprep.subr.bf16.mxu0 0
        %853 = vmatpush1.bf16.msra.mxu0 %v822
        %854 = vmatprep.subr.bf16.mxu0 0
        %855 = vmatpush2.bf16.msra.mxu0 0
        %856 = vmatprep.subr.bf16.mxu0 0
        %857 = vmatpush2.bf16.msra.mxu0 0
        %858 = vmatprep.subr.bf16.mxu0 0
        %859 = vmatpush2.bf16.msra.mxu0 0
        %860 = vmatprep.subr.bf16.mxu0 0
        %861 = vmatpush2.bf16.msra.mxu0 0
        %862 = vmatprep.subr.bf16.mxu0 0
        %863 = vmatpush2.bf16.msra.mxu0 0
        %864 = vmatprep.subr.bf16.mxu0 0
        %865 = vmatpush2.bf16.msra.mxu0 0
        %866 = vmatprep.subr.bf16.mxu0 0
        %867 = vmatpush2.bf16.msra.mxu0 0
        %868 = vmatprep.subr.bf16.mxu0 0
        %869 = vmatpush2.bf16.msra.mxu0 0
        %870 = vmatprep.mubr.bf16.mxu0 0
        %871 = vmatmul.mubr.bf16.gmra.mxu0 %v789
        %v872 = vpop.f32.mrf.mxu0
        %v873 = vadd.f32 0.0, %v872
        %v874 = vpop.f32.mrf.mxu0
        %v875 = vpop.f32.mrf.mxu0
        %v876 = vpop.f32.mrf.mxu0
        %877 = vdwg.mxu0
        %v878 = vpack.c.bf16 %v873, %v873
        %879 = vst [vmem:[%s339 + $0x10] sm:$0xf] %v878
        %s880 = scalar_lea.vmem %s300, 16 [#allocation2]
        %v881 = vld [vmem:[%s880] sm:$0xf]
        %882 = vmatprep.subr.bf16.mxu0 0
        %883 = vmatpush1.bf16.msra.mxu0 %v829
        %884 = vmatprep.subr.bf16.mxu0 0
        %885 = vmatpush1.bf16.msra.mxu0 %v828
        %886 = vmatprep.subr.bf16.mxu0 0
        %887 = vmatpush1.bf16.msra.mxu0 %v827
        %888 = vmatprep.subr.bf16.mxu0 0
        %889 = vmatpush1.bf16.msra.mxu0 %v826
        %890 = vmatprep.subr.bf16.mxu0 0
        %891 = vmatpush1.bf16.msra.mxu0 %v825
        %892 = vmatprep.subr.bf16.mxu0 0
        %893 = vmatpush1.bf16.msra.mxu0 %v824
        %894 = vmatprep.subr.bf16.mxu0 0
        %895 = vmatpush1.bf16.msra.mxu0 %v823
        %896 = vmatprep.subr.bf16.mxu0 0
        %897 = vmatpush1.bf16.msra.mxu0 %v822
        %898 = vmatprep.subr.bf16.mxu0 0
        %899 = vmatpush2.bf16.msra.mxu0 0
        %900 = vmatprep.subr.bf16.mxu0 0
        %901 = vmatpush2.bf16.msra.mxu0 0
        %902 = vmatprep.subr.bf16.mxu0 0
        %903 = vmatpush2.bf16.msra.mxu0 0
        %904 = vmatprep.subr.bf16.mxu0 0
        %905 = vmatpush2.bf16.msra.mxu0 0
        %906 = vmatprep.subr.bf16.mxu0 0
        %907 = vmatpush2.bf16.msra.mxu0 0
        %908 = vmatprep.subr.bf16.mxu0 0
        %909 = vmatpush2.bf16.msra.mxu0 0
        %910 = vmatprep.subr.bf16.mxu0 0
        %911 = vmatpush2.bf16.msra.mxu0 0
        %912 = vmatprep.subr.bf16.mxu0 0
        %913 = vmatpush2.bf16.msra.mxu0 0
        %914 = vmatprep.mubr.bf16.mxu0 0
        %915 = vmatmul.mubr.bf16.gmra.mxu0 %v881
        %v916 = vpop.f32.mrf.mxu0
        %v917 = vadd.f32 0.0, %v916
        %v918 = vpop.f32.mrf.mxu0
        %v919 = vpop.f32.mrf.mxu0
        %v920 = vpop.f32.mrf.mxu0
        %921 = vdwg.mxu0
        %v922 = vpack.c.bf16 %v917, %v917
        %923 = vst [vmem:[%s339 + $0x14] sm:$0xf] %v922
        %s924 = scalar_lea.vmem %s300, 20 [#allocation2]
        %v925 = vld [vmem:[%s924] sm:$0xf]
        %926 = vmatprep.subr.bf16.mxu0 0
        %927 = vmatpush1.bf16.msra.mxu0 %v829
        %928 = vmatprep.subr.bf16.mxu0 0
        %929 = vmatpush1.bf16.msra.mxu0 %v828
        %930 = vmatprep.subr.bf16.mxu0 0
        %931 = vmatpush1.bf16.msra.mxu0 %v827
        %932 = vmatprep.subr.bf16.mxu0 0
        %933 = vmatpush1.bf16.msra.mxu0 %v826
        %934 = vmatprep.subr.bf16.mxu0 0
        %935 = vmatpush1.bf16.msra.mxu0 %v825
        %936 = vmatprep.subr.bf16.mxu0 0
        %937 = vmatpush1.bf16.msra.mxu0 %v824
        %938 = vmatprep.subr.bf16.mxu0 0
        %939 = vmatpush1.bf16.msra.mxu0 %v823
        %940 = vmatprep.subr.bf16.mxu0 0
        %941 = vmatpush1.bf16.msra.mxu0 %v822
        %942 = vmatprep.subr.bf16.mxu0 0
        %943 = vmatpush2.bf16.msra.mxu0 0
        %944 = vmatprep.subr.bf16.mxu0 0
        %945 = vmatpush2.bf16.msra.mxu0 0
        %946 = vmatprep.subr.bf16.mxu0 0
        %947 = vmatpush2.bf16.msra.mxu0 0
        %948 = vmatprep.subr.bf16.mxu0 0
        %949 = vmatpush2.bf16.msra.mxu0 0
        %950 = vmatprep.subr.bf16.mxu0 0
        %951 = vmatpush2.bf16.msra.mxu0 0
        %952 = vmatprep.subr.bf16.mxu0 0
        %953 = vmatpush2.bf16.msra.mxu0 0
        %954 = vmatprep.subr.bf16.mxu0 0
        %955 = vmatpush2.bf16.msra.mxu0 0
        %956 = vmatprep.subr.bf16.mxu0 0
        %957 = vmatpush2.bf16.msra.mxu0 0
        %958 = vmatprep.mubr.bf16.mxu0 0
        %959 = vmatmul.mubr.bf16.gmra.mxu0 %v925
        %v960 = vpop.f32.mrf.mxu0
        %v961 = vadd.f32 0.0, %v960
        %v962 = vpop.f32.mrf.mxu0
        %v963 = vpop.f32.mrf.mxu0
        %v964 = vpop.f32.mrf.mxu0
        %965 = vdwg.mxu0
        %v966 = vpack.c.bf16 %v961, %v961
        %967 = vst [vmem:[%s339 + $0x18] sm:$0xf] %v966
        %s968 = scalar_lea.vmem %s300, 24 [#allocation2]
        %v969 = vld [vmem:[%s968] sm:$0xf]
        %970 = vmatprep.subr.bf16.mxu0 0
        %971 = vmatpush1.bf16.msra.mxu0 %v829
        %972 = vmatprep.subr.bf16.mxu0 0
        %973 = vmatpush1.bf16.msra.mxu0 %v828
        %974 = vmatprep.subr.bf16.mxu0 0
        %975 = vmatpush1.bf16.msra.mxu0 %v827
        %976 = vmatprep.subr.bf16.mxu0 0
        %977 = vmatpush1.bf16.msra.mxu0 %v826
        %978 = vmatprep.subr.bf16.mxu0 0
        %979 = vmatpush1.bf16.msra.mxu0 %v825
        %980 = vmatprep.subr.bf16.mxu0 0
        %981 = vmatpush1.bf16.msra.mxu0 %v824
        %982 = vmatprep.subr.bf16.mxu0 0
        %983 = vmatpush1.bf16.msra.mxu0 %v823
        %984 = vmatprep.subr.bf16.mxu0 0
        %985 = vmatpush1.bf16.msra.mxu0 %v822
        %986 = vmatprep.subr.bf16.mxu0 0
        %987 = vmatpush2.bf16.msra.mxu0 0
        %988 = vmatprep.subr.bf16.mxu0 0
        %989 = vmatpush2.bf16.msra.mxu0 0
        %990 = vmatprep.subr.bf16.mxu0 0
        %991 = vmatpush2.bf16.msra.mxu0 0
        %992 = vmatprep.subr.bf16.mxu0 0
        %993 = vmatpush2.bf16.msra.mxu0 0
        %994 = vmatprep.subr.bf16.mxu0 0
        %995 = vmatpush2.bf16.msra.mxu0 0
        %996 = vmatprep.subr.bf16.mxu0 0
        %997 = vmatpush2.bf16.msra.mxu0 0
        %998 = vmatprep.subr.bf16.mxu0 0
        %999 = vmatpush2.bf16.msra.mxu0 0
        %1000 = vmatprep.subr.bf16.mxu0 0
        %1001 = vmatpush2.bf16.msra.mxu0 0
        %1002 = vmatprep.mubr.bf16.mxu0 0
        %1003 = vmatmul.mubr.bf16.gmra.mxu0 %v969
        %v1004 = vpop.f32.mrf.mxu0
        %v1005 = vadd.f32 0.0, %v1004
        %v1006 = vpop.f32.mrf.mxu0
        %v1007 = vpop.f32.mrf.mxu0
        %v1008 = vpop.f32.mrf.mxu0
        %1009 = vdwg.mxu0
        %v1010 = vpack.c.bf16 %v1005, %v1005
        %1011 = vst [vmem:[%s339 + $0x1c] sm:$0xf] %v1010
        %s1012 = scalar_lea.vmem %s300, 28 [#allocation2]
        %v1013 = vld [vmem:[%s1012] sm:$0xf]
        %1014 = vmatprep.subr.bf16.mxu0 0
        %1015 = vmatpush1.bf16.msra.mxu0 %v829
        %1016 = vmatprep.subr.bf16.mxu0 0
        %1017 = vmatpush1.bf16.msra.mxu0 %v828
        %1018 = vmatprep.subr.bf16.mxu0 0
        %1019 = vmatpush1.bf16.msra.mxu0 %v827
        %1020 = vmatprep.subr.bf16.mxu0 0
        %1021 = vmatpush1.bf16.msra.mxu0 %v826
        %1022 = vmatprep.subr.bf16.mxu0 0
        %1023 = vmatpush1.bf16.msra.mxu0 %v825
        %1024 = vmatprep.subr.bf16.mxu0 0
        %1025 = vmatpush1.bf16.msra.mxu0 %v824
        %1026 = vmatprep.subr.bf16.mxu0 0
        %1027 = vmatpush1.bf16.msra.mxu0 %v823
        %1028 = vmatprep.subr.bf16.mxu0 0
        %1029 = vmatpush1.bf16.msra.mxu0 %v822
        %1030 = vmatprep.subr.bf16.mxu0 0
        %1031 = vmatpush2.bf16.msra.mxu0 0
        %1032 = vmatprep.subr.bf16.mxu0 0
        %1033 = vmatpush2.bf16.msra.mxu0 0
        %1034 = vmatprep.subr.bf16.mxu0 0
        %1035 = vmatpush2.bf16.msra.mxu0 0
        %1036 = vmatprep.subr.bf16.mxu0 0
        %1037 = vmatpush2.bf16.msra.mxu0 0
        %1038 = vmatprep.subr.bf16.mxu0 0
        %1039 = vmatpush2.bf16.msra.mxu0 0
        %1040 = vmatprep.subr.bf16.mxu0 0
        %1041 = vmatpush2.bf16.msra.mxu0 0
        %1042 = vmatprep.subr.bf16.mxu0 0
        %1043 = vmatpush2.bf16.msra.mxu0 0
        %1044 = vmatprep.subr.bf16.mxu0 0
        %1045 = vmatpush2.bf16.msra.mxu0 0
        %1046 = vmatprep.mubr.bf16.mxu0 0
        %1047 = vmatmul.mubr.bf16.gmra.mxu0 %v1013
        %v1048 = vpop.f32.mrf.mxu0
        %v1049 = vadd.f32 0.0, %v1048
        %v1050 = vpop.f32.mrf.mxu0
        %v1051 = vpop.f32.mrf.mxu0
        %v1052 = vpop.f32.mrf.mxu0
        %1053 = vdwg.mxu0
        %v1054 = vpack.c.bf16 %v1049, %v1049
        %1055 = vst [vmem:[%s339 + $0x20] sm:$0xf] %v1054
        %p1056 = scmp.lt.s32.totalorder %s17, 1
        %s1057 = scalar_select %p1056, %s17, 1
        %s1058 = smul.addr %s1057, 9
        %s1059 = smul.addr %s1058, 4
        %s1060 = scalar_lea.vmem %s6, %s1059
        // Predicated region
        $region86: #{feedforward_pallas.5} parent=80 // pred_check
          %p1061 = pneg %p171
        $region87: #{feedforward_pallas.5} parent=80 // pred_check_branch
          %1063 = sbr.rel (%p1061) target = $region89
        $region88: #{feedforward_pallas.5} parent=80 // pred_region
          _
        $region89: #{feedforward_pallas.5} parent=80 // pred_fallthru
          _
      $region81: #{feedforward_pallas.5} parent=5 // pred_fallthru
        _
      %p1064 = scmp.le.s32.totalorder 2, %s12
      // Predicated region
      $region90: #{feedforward_pallas.5} parent=5 // pred_check
        %p1065 = pneg %p1064
      $region91: #{feedforward_pallas.5} parent=5 // pred_check_branch
        %1067 = sbr.rel (%p1065) target = $region93
      $region92: #{feedforward_pallas.5} parent=5 // pred_region
        %s1068 = ssub.s32 %s12, 2
        // Predicated region
        $region94: #{feedforward_pallas.5} parent=92 // pred_check
          %p1069 = pneg %p177
        $region95: #{feedforward_pallas.5} parent=92 // pred_check_branch
          %1071 = sbr.rel (%p1069) target = $region97
        $region96: #{feedforward_pallas.5} parent=92 // pred_region
          %p1072 = scmp.lt.s32.totalorder %s18, 1
          %s1073 = scalar_select %p1072, %s18, 1
          %s1074 = smul.addr %s1073, 9
          %s1075 = smul.addr %s1074, 4
          %s1076 = scalar_lea.vmem %s6, %s1075
        $region97: #{feedforward_pallas.5} parent=92 // pred_fallthru
          _
      $region93: #{feedforward_pallas.5} parent=5 // pred_fallthru
        _
    $region6: #{feedforward_pallas.5} parent=1 // loop_footer
      %s16 = sadd.s32 1, %s12
    $region7: #{feedforward_pallas.5} parent=1 // loop_footer_branch
      %11 = sbr.rel target = $region3
    $region8: #{feedforward_pallas.5} parent=1 // loop_exit
      _

</llo_original>
